<compile_context>
chip_gen: v7x
topology: tpu7x:2x2x1
jax: 0.10.0
libtpu: 0.0.40
codegen_flags: <defaults>
</compile_context>

<pallas_src>
import jax
import jax.numpy as jnp
from jax.experimental import pallas as pl
from jax.experimental.pallas import tpu as pltpu


MATMUL_DTYPE = jnp.bfloat16          # matmul operand dtype (accumulation is f32)
VMEM_LIMIT_BYTES = 32 * 1024 * 1024  # explicit scoped-VMEM limit (raises v5e's 16 MiB)


def _round_up(x, m):
    return (x + m - 1) // m * m


# ----------------------------- head: stride-2 conv ----------------------------

def _im2row_stride2(x):
    """im2row for a 3x3 / stride-2 / pad-1 conv. (N,H,W,Cin) -> (N,Ho,Wo,9*Cin).

    Channel order of the result is (kh, kw, cin), matching w.reshape(9*Cin, Cout)
    for an HWIO weight. Cheap XLA glue that touches only the small raw input.
    """
    N, H, W, Cin = x.shape
    Ho, Wo = (H + 1) // 2, (W + 1) // 2
    xp = jnp.pad(x, ((0, 0), (1, 1), (1, 1), (0, 0)))
    taps = []
    for kh in range(3):
        for kw in range(3):
            taps.append(xp[:, kh:kh + 2 * Ho - 1:2, kw:kw + 2 * Wo - 1:2, :])
    return jnp.concatenate(taps, axis=-1)


def _make_head_kernel(Ho, Wo, Kp, Cout):
    M = Ho * Wo

    def kernel(p_ref, w_ref, b_ref, o_ref):
        patches = p_ref[0].reshape(M, Kp)                      # (Ho*Wo, Kp)
        acc = jnp.dot(patches, w_ref[...],
                      preferred_element_type=jnp.float32)      # one MXU matmul
        acc = acc + b_ref[...]                                 # (1, Cout) broadcast
        acc = jnp.where(acc >= 0, acc, 0.1 * acc)              # LeakyReLU(0.1)
        o_ref[0] = acc.reshape(Ho, Wo, Cout).astype(o_ref.dtype)

    return kernel


def head_conv_pallas(x, w0, b0):
    """Conv2d(k=3, s=2, p=1) + LeakyReLU(0.1). x: (N,H,W,Cin) -> (N,Ho,Wo,Cout)."""
    N, H, W, Cin = x.shape
    Cout = w0.shape[-1]
    Ho, Wo = (H + 1) // 2, (W + 1) // 2
    K = 9 * Cin
    Kp = _round_up(K, 16)            # align contraction dim for f32/bf16 sublane tiles

    patches = _im2row_stride2(x).astype(MATMUL_DTYPE)          # (N, Ho, Wo, K)
    patches = jnp.pad(patches, ((0, 0), (0, 0), (0, 0), (0, Kp - K)))
    w_flat = jnp.pad(w0.reshape(K, Cout).astype(MATMUL_DTYPE), ((0, Kp - K), (0, 0)))

    return pl.pallas_call(
        _make_head_kernel(Ho, Wo, Kp, Cout),
        out_shape=jax.ShapeDtypeStruct((N, Ho, Wo, Cout), jnp.float32),
        grid=(N,),
        in_specs=[
            pl.BlockSpec((1, Ho, Wo, Kp), lambda n: (n, 0, 0, 0)),
            pl.BlockSpec((Kp, Cout), lambda n: (0, 0)),
            pl.BlockSpec((1, Cout), lambda n: (0, 0)),
        ],
        out_specs=pl.BlockSpec((1, Ho, Wo, Cout), lambda n: (n, 0, 0, 0)),
        compiler_params=pltpu.CompilerParams(
            dimension_semantics=("parallel",),
            vmem_limit_bytes=VMEM_LIMIT_BYTES),
    )(patches, w_flat, b0.reshape(1, Cout).astype(jnp.float32))


# -------------- body: the whole residual-block chain in ONE kernel ------------

def _pick_row_tile(H, W, target_m=256):
    """Largest divisor of H such that a chunk has at most ~target_m rows of the
    (H*W, C) im2row matrix, keeping the chunk accumulator register-resident."""
    best = 1
    for d in range(1, H + 1):
        if H % d == 0 and d * W <= max(target_m, W):
            best = d
    return best


def _make_chain_kernel(H, W, C, num_block, row_tile):
    """One grid step = one ResidualBlockNoBN applied to the VMEM-resident
    activation of one image. Grid = (batch, block); the activation is loaded
    from HBM only at block 0 and stored back only at block num_block-1."""
    n_chunks = H // row_tile
    M = row_tile * W
    K3 = 3 * C

    def kernel(x_ref, w1_ref, b1_ref, w2_ref, b2_ref, o_ref,
               xpad_ref, tpad_ref, patch_ref):
        blk = pl.program_id(1)

        def conv3x3(src_pad_ref, w_ref, r0):
            # 3x3 conv for output rows [r0, r0+row_tile): per kh, fold the three
            # kw taps into the MXU contraction (K = 3C) via a VMEM patch scratch.
            acc = None
            for kh in range(3):
                for kw in range(3):
                    patch_ref[pl.ds(0, row_tile), pl.ds(0, W), pl.ds(kw * C, C)] = (
                        src_pad_ref[pl.ds(r0 + kh, row_tile), pl.ds(kw, W), :]
                        .astype(MATMUL_DTYPE))
                part = jnp.dot(patch_ref[...].reshape(M, K3), w_ref[0, kh],
                               preferred_element_type=jnp.float32)
                acc = part if acc is None else acc + part
            return acc                                         # (M, C) f32

        # Zero ONLY the 1-pixel halo strips (== the convs' zero padding); the
        # interiors are fully overwritten below. Done every step (cheap) so
        # correctness never depends on grid sharding across cores.
        zrow = jnp.zeros((1, W + 2, C), jnp.float32)
        zcol = jnp.zeros((H + 2, 1, C), jnp.float32)
        for pad in (xpad_ref, tpad_ref):
            pad[pl.ds(0, 1), :, :] = zrow
            pad[pl.ds(H + 1, 1), :, :] = zrow
            pad[pl.ds(0, H + 2), pl.ds(0, 1), :] = zcol
            pad[pl.ds(0, H + 2), pl.ds(W + 1, 1), :] = zcol

        # First block of the chain: pull this image's activation into VMEM.
        @pl.when(blk == 0)
        def _():
            xpad_ref[pl.ds(1, H), pl.ds(1, W), :] = x_ref[0].astype(jnp.float32)

        # conv1 + bias + ReLU -> tpad interior (intermediate never leaves VMEM).
        for ci in range(n_chunks):
            r0 = ci * row_tile
            a = conv3x3(xpad_ref, w1_ref, r0)
            a = jnp.maximum(a + b1_ref[0], 0.0)
            tpad_ref[pl.ds(r0 + 1, row_tile), pl.ds(1, W), :] = (
                a.reshape(row_tile, W, C))

        # conv2 + bias + residual add -> new activation (back into xpad).
        for ci in range(n_chunks):
            r0 = ci * row_tile
            res = xpad_ref[pl.ds(r0 + 1, row_tile), pl.ds(1, W), :]
            a = res.reshape(M, C) + conv3x3(tpad_ref, w2_ref, r0) + b2_ref[0]
            xpad_ref[pl.ds(r0 + 1, row_tile), pl.ds(1, W), :] = (
                a.reshape(row_tile, W, C))

        # Last block of the chain: write the result to HBM once.
        @pl.when(blk == num_block - 1)
        def _():
            o_ref[0] = xpad_ref[pl.ds(1, H), pl.ds(1, W), :].astype(o_ref.dtype)

    return kernel


def resblock_chain_pallas(h, w1s, b1s, w2s, b2s):
    """num_block x ResidualBlockNoBN fused into a single pallas_call.

    h: (N, H, W, C) f32.  w1s/w2s: (num_block, 3, 3C, C) MATMUL_DTYPE (rows
    ordered (kw, cin)).  b1s/b2s: (num_block, 1, C) f32.
    """
    N, H, W, C = h.shape
    num_block = w1s.shape[0]
    row_tile = _pick_row_tile(H, W)
    return pl.pallas_call(
        _make_chain_kernel(H, W, C, num_block, row_tile),
        out_shape=jax.ShapeDtypeStruct((N, H, W, C), h.dtype),
        grid=(N, num_block),
        in_specs=[
            pl.BlockSpec((1, H, W, C), lambda n, b: (n, 0, 0, 0)),       # activation
            pl.BlockSpec((1, 3, 3 * C, C), lambda n, b: (b, 0, 0, 0)),   # conv1 weight
            pl.BlockSpec((1, 1, C), lambda n, b: (b, 0, 0)),             # conv1 bias
            pl.BlockSpec((1, 3, 3 * C, C), lambda n, b: (b, 0, 0, 0)),   # conv2 weight
            pl.BlockSpec((1, 1, C), lambda n, b: (b, 0, 0)),             # conv2 bias
        ],
        out_specs=pl.BlockSpec((1, H, W, C), lambda n, b: (n, 0, 0, 0)),
        scratch_shapes=[
            pltpu.VMEM((H + 2, W + 2, C), jnp.float32),        # padded activation
            pltpu.VMEM((H + 2, W + 2, C), jnp.float32),        # padded relu(conv1)
            pltpu.VMEM((row_tile, W, 3 * C), MATMUL_DTYPE),    # im2row patch (K=3C)
        ],
        compiler_params=pltpu.CompilerParams(
            dimension_semantics=("parallel", "arbitrary"),
            vmem_limit_bytes=VMEM_LIMIT_BYTES),
    )(h, w1s, b1s, w2s, b2s)


def conv_res_block_forward(x, params):
    """Pallas implementation of ConvResBlock_ref.forward. x: (N, H, W, in_feat) NHWC."""
    h = head_conv_pallas(x, params["w0"], params["b0"])
    blocks = params["blocks"]
    if not blocks:
        return h
    C = h.shape[-1]
    nb = len(blocks)
    # Stack per-block weights, pre-reshaped so each (kh) slice is a (3C, C)
    # matmul weight with rows ordered (kw, cin) to match the in-kernel patch.
    w1s = jnp.stack([blk[0] for blk in blocks]).reshape(nb, 3, 3 * C, C).astype(MATMUL_DTYPE)
    b1s = jnp.stack([blk[1] for blk in blocks]).reshape(nb, 1, C).astype(jnp.float32)
    w2s = jnp.stack([blk[2] for blk in blocks]).reshape(nb, 3, 3 * C, C).astype(MATMUL_DTYPE)
    b2s = jnp.stack([blk[3] for blk in blocks]).reshape(nb, 1, C).astype(jnp.float32)
    return resblock_chain_pallas(h, w1s, b1s, w2s, b2s)


# ---------------- pure-JAX references (for correctness check) ----------------

def _conv_ref(x, w, b, stride, matmul_dtype=jnp.float32):
    y = jax.lax.conv_general_dilated(
        x.astype(matmul_dtype), w.astype(matmul_dtype),
        window_strides=(stride, stride), padding=((1, 1), (1, 1)),
        dimension_numbers=("NHWC", "HWIO", "NHWC"),
        preferred_element_type=jnp.float32)
    return y + b.reshape(1, 1, 1, -1)


def conv_res_block_reference(x, params, matmul_dtype=jnp.float32):
    y = _conv_ref(x, params["w0"], params["b0"], 2, matmul_dtype)
    y = jnp.where(y >= 0, y, 0.1 * y)
    for (w1, b1, w2, b2) in params["blocks"]:
        t = jnp.maximum(_conv_ref(y, w1, b1, 1, matmul_dtype), 0.0)
        y = y + _conv_ref(t, w2, b2, 1, matmul_dtype)
    return y


# ----------------------------------- main ------------------------------------

if __name__ == "__main__":
    N, Cin, H, W = 2, 4, 16, 16   # small shapes; module defaults are out_feat=64, num_block=30
    Cout = 32
    num_block = 2

    key = jax.random.PRNGKey(0)
    ks = jax.random.split(key, 3 + 4 * num_block)
    x = jax.random.normal(ks[0], (N, H, W, Cin), jnp.float32)   # NHWC

    def init_w(k, cin, cout, scale):
        return scale * jax.random.normal(k, (3, 3, cin, cout), jnp.float32)

    params = {
        "w0": init_w(ks[1], Cin, Cout, 0.1),
        "b0": 0.01 * jax.random.normal(ks[2], (Cout,), jnp.float32),
        "blocks": [],
    }
    idx = 3
    for _ in range(num_block):
        w1 = init_w(ks[idx], Cout, Cout, 0.05); idx += 1
        b1 = 0.01 * jax.random.normal(ks[idx], (Cout,), jnp.float32); idx += 1
        w2 = init_w(ks[idx], Cout, Cout, 0.05); idx += 1
        b2 = 0.01 * jax.random.normal(ks[idx], (Cout,), jnp.float32); idx += 1
        params["blocks"].append((w1, b1, w2, b2))

    out = jax.jit(conv_res_block_forward)(x, params)
    out = jax.block_until_ready(out)
    assert out.shape == (N, H // 2, W // 2, Cout), out.shape

    # Strict check vs a numerics-matched reference (same matmul operand dtype,
    # f32 accumulation) and a loose check vs the pure-f32 reference quantifying
    # the bf16-operand drift (review: relax the 1e-4 check for the bf16 variant).
    ref_matched = conv_res_block_reference(x, params, matmul_dtype=MATMUL_DTYPE)
    ref_f32 = conv_res_block_reference(x, params, matmul_dtype=jnp.float32)
    err_matched = float(jnp.max(jnp.abs(out - ref_matched)))
    err_f32 = float(jnp.max(jnp.abs(out - ref_f32)))
    tight = 1e-4 if MATMUL_DTYPE == jnp.float32 else 2e-3
    assert jnp.allclose(out, ref_matched, rtol=tight, atol=tight), err_matched
    assert jnp.allclose(out, ref_f32, rtol=1e-1, atol=1e-1), err_f32

    print("KERNEL_OK")
</pallas_src>

<mosaic_0001>
module attributes {stable_mosaic.version = 11 : i64} {
  func.func @kernel(%arg0: i32, %arg1: memref<1x8x8x48xbf16, #tpu.memory_space<vmem>>, %arg2: memref<48x32xbf16, #tpu.memory_space<vmem>>, %arg3: memref<1x32xf32, #tpu.memory_space<vmem>>, %arg4: memref<1x8x8x32xf32, #tpu.memory_space<vmem>>) attributes {dimension_semantics = [#tpu.dimension_semantics<parallel>], iteration_bounds = array<i64: 2>, scalar_prefetch = 0 : i64, scratch_operands = 0 : i64, tpu.core_type = #tpu.core_type<tc>, window_params = [{transform_indices = @transform_0, window_bounds = array<i64: 1, 8, 8, 48>}, {pipeline_mode = #tpu.pipeline_mode<synchronous>, transform_indices = @transform_1, window_bounds = array<i64: 48, 32>}, {pipeline_mode = #tpu.pipeline_mode<synchronous>, transform_indices = @transform_2, window_bounds = array<i64: 1, 32>}, {transform_indices = @transform_3, window_bounds = array<i64: 1, 8, 8, 32>}]} {
    %c0 = arith.constant 0 : index
    %c0_0 = arith.constant 0 : index
    %c0_1 = arith.constant 0 : index
    %c0_2 = arith.constant 0 : index
    %0 = vector.load %arg1[%c0, %c0_0, %c0_1, %c0_2] : memref<1x8x8x48xbf16, #tpu.memory_space<vmem>>, vector<1x8x8x48xbf16>
    %1 = vector.shape_cast %0 : vector<1x8x8x48xbf16> to vector<8x8x48xbf16>
    %2 = vector.shape_cast %1 : vector<8x8x48xbf16> to vector<64x48xbf16>
    %c0_3 = arith.constant 0 : index
    %c0_4 = arith.constant 0 : index
    %3 = vector.load %arg2[%c0_3, %c0_4] : memref<48x32xbf16, #tpu.memory_space<vmem>>, vector<48x32xbf16>
    %cst = arith.constant dense<0.000000e+00> : vector<64x32xf32>
    %4 = tpu.matmul %2, %3, %cst {dimension_numbers = #tpu.dot_dimension_numbers<[1], [0], [0], [1], [0, 0, 1, 1], [], []>} : vector<64x48xbf16>, vector<48x32xbf16>, vector<64x32xf32> -> vector<64x32xf32>
    %c0_5 = arith.constant 0 : index
    %c0_6 = arith.constant 0 : index
    %5 = vector.load %arg3[%c0_5, %c0_6] : memref<1x32xf32, #tpu.memory_space<vmem>>, vector<1x32xf32>
    %6 = vector.broadcast %5 : vector<1x32xf32> to vector<64x32xf32>
    %7 = arith.addf %4, %6 : vector<64x32xf32>
    %cst_7 = arith.constant 0.000000e+00 : f32
    %8 = vector.broadcast %cst_7 : f32 to vector<64x32xf32>
    %9 = arith.cmpf oge, %7, %8 : vector<64x32xf32>
    %cst_8 = arith.constant 1.000000e-01 : f32
    %10 = vector.broadcast %cst_8 : f32 to vector<64x32xf32>
    %11 = arith.mulf %10, %7 : vector<64x32xf32>
    %12 = arith.select %9, %7, %11 : vector<64x32xi1>, vector<64x32xf32>
    %13 = vector.shape_cast %12 : vector<64x32xf32> to vector<8x8x32xf32>
    %c0_9 = arith.constant 0 : index
    %c0_10 = arith.constant 0 : index
    %c0_11 = arith.constant 0 : index
    %c0_12 = arith.constant 0 : index
    %14 = vector.load %arg4[%c0_9, %c0_10, %c0_11, %c0_12] : memref<1x8x8x32xf32, #tpu.memory_space<vmem>>, vector<1x8x8x32xf32>
    %15 = vector.shape_cast %14 : vector<1x8x8x32xf32> to vector<8x8x32xf32>
    %16 = vector.shape_cast %13 : vector<8x8x32xf32> to vector<1x8x8x32xf32>
    tpu.vector_store %arg4[%c0_9, %c0_10, %c0_11, %c0_12], %16 {strides = array<i32>} : memref<1x8x8x32xf32, #tpu.memory_space<vmem>>, vector<1x8x8x32xf32>,
    return
  }
  func.func @transform_0(%arg0: i32) -> (i32, i32, i32, i32) {
    %c0_i32 = arith.constant 0 : i32
    %c0_i32_0 = arith.constant 0 : i32
    %c0_i32_1 = arith.constant 0 : i32
    %c0_i32_2 = arith.constant 0 : i32
    return %arg0, %c0_i32, %c0_i32_0, %c0_i32_1 : i32, i32, i32, i32
  }
  func.func @transform_1(%arg0: i32) -> (i32, i32) {
    %c0_i32 = arith.constant 0 : i32
    %c0_i32_0 = arith.constant 0 : i32
    %c0_i32_1 = arith.constant 0 : i32
    return %c0_i32, %c0_i32_0 : i32, i32
  }
  func.func @transform_2(%arg0: i32) -> (i32, i32) {
    %c0_i32 = arith.constant 0 : i32
    %c0_i32_0 = arith.constant 0 : i32
    %c0_i32_1 = arith.constant 0 : i32
    return %c0_i32, %c0_i32_0 : i32, i32
  }
  func.func @transform_3(%arg0: i32) -> (i32, i32, i32, i32) {
    %c0_i32 = arith.constant 0 : i32
    %c0_i32_0 = arith.constant 0 : i32
    %c0_i32_1 = arith.constant 0 : i32
    %c0_i32_2 = arith.constant 0 : i32
    return %arg0, %c0_i32, %c0_i32_0, %c0_i32_1 : i32, i32, i32, i32
  }
}

module attributes {stable_mosaic.version = 11 : i64} {
  func.func @kernel(%arg0: i32, %arg1: i32, %arg2: memref<1x8x8x32xf32, #tpu.memory_space<vmem>>, %arg3: memref<1x3x96x32xbf16, #tpu.memory_space<vmem>>, %arg4: memref<1x1x32xf32, #tpu.memory_space<vmem>>, %arg5: memref<1x3x96x32xbf16, #tpu.memory_space<vmem>>, %arg6: memref<1x1x32xf32, #tpu.memory_space<vmem>>, %arg7: memref<1x8x8x32xf32, #tpu.memory_space<vmem>>, %arg8: memref<10x10x32xf32, #tpu.memory_space<vmem>>, %arg9: memref<10x10x32xf32, #tpu.memory_space<vmem>>, %arg10: memref<8x8x96xbf16, #tpu.memory_space<vmem>>) attributes {dimension_semantics = [#tpu.dimension_semantics<parallel>, #tpu.dimension_semantics<arbitrary>], iteration_bounds = array<i64: 2, 2>, scalar_prefetch = 0 : i64, scratch_operands = 3 : i64, tpu.core_type = #tpu.core_type<tc>, window_params = [{transform_indices = @transform_0, window_bounds = array<i64: 1, 8, 8, 32>}, {transform_indices = @transform_1, window_bounds = array<i64: 1, 3, 96, 32>}, {transform_indices = @transform_2, window_bounds = array<i64: 1, 1, 32>}, {transform_indices = @transform_3, window_bounds = array<i64: 1, 3, 96, 32>}, {transform_indices = @transform_4, window_bounds = array<i64: 1, 1, 32>}, {transform_indices = @transform_5, window_bounds = array<i64: 1, 8, 8, 32>}]} {
    %cst = arith.constant 0.000000e+00 : f32
    %0 = vector.broadcast %cst : f32 to vector<1x10x32xf32>
    %cst_0 = arith.constant 0.000000e+00 : f32
    %1 = vector.broadcast %cst_0 : f32 to vector<10x1x32xf32>
    %c0 = arith.constant 0 : index
    %c0_1 = arith.constant 0 : index
    %c0_2 = arith.constant 0 : index
    %2 = vector.load %arg8[%c0, %c0_1, %c0_2] : memref<10x10x32xf32, #tpu.memory_space<vmem>>, vector<1x10x32xf32>
    tpu.vector_store %arg8[%c0, %c0_1, %c0_2], %0 {strides = array<i32>} : memref<10x10x32xf32, #tpu.memory_space<vmem>>, vector<1x10x32xf32>,
    %c9 = arith.constant 9 : index
    %c0_3 = arith.constant 0 : index
    %c0_4 = arith.constant 0 : index
    %3 = vector.load %arg8[%c9, %c0_3, %c0_4] : memref<10x10x32xf32, #tpu.memory_space<vmem>>, vector<1x10x32xf32>
    tpu.vector_store %arg8[%c9, %c0_3, %c0_4], %0 {strides = array<i32>} : memref<10x10x32xf32, #tpu.memory_space<vmem>>, vector<1x10x32xf32>,
    %c0_5 = arith.constant 0 : index
    %c0_6 = arith.constant 0 : index
    %c0_7 = arith.constant 0 : index
    %4 = vector.load %arg8[%c0_5, %c0_6, %c0_7] : memref<10x10x32xf32, #tpu.memory_space<vmem>>, vector<10x1x32xf32>
    tpu.vector_store %arg8[%c0_5, %c0_6, %c0_7], %1 {strides = array<i32>} : memref<10x10x32xf32, #tpu.memory_space<vmem>>, vector<10x1x32xf32>,
    %c0_8 = arith.constant 0 : index
    %c9_9 = arith.constant 9 : index
    %c0_10 = arith.constant 0 : index
    %5 = vector.load %arg8[%c0_8, %c9_9, %c0_10] : memref<10x10x32xf32, #tpu.memory_space<vmem>>, vector<10x1x32xf32>
    tpu.vector_store %arg8[%c0_8, %c9_9, %c0_10], %1 {strides = array<i32>} : memref<10x10x32xf32, #tpu.memory_space<vmem>>, vector<10x1x32xf32>,
    %c0_11 = arith.constant 0 : index
    %c0_12 = arith.constant 0 : index
    %c0_13 = arith.constant 0 : index
    %6 = vector.load %arg9[%c0_11, %c0_12, %c0_13] : memref<10x10x32xf32, #tpu.memory_space<vmem>>, vector<1x10x32xf32>
    tpu.vector_store %arg9[%c0_11, %c0_12, %c0_13], %0 {strides = array<i32>} : memref<10x10x32xf32, #tpu.memory_space<vmem>>, vector<1x10x32xf32>,
    %c9_14 = arith.constant 9 : index
    %c0_15 = arith.constant 0 : index
    %c0_16 = arith.constant 0 : index
    %7 = vector.load %arg9[%c9_14, %c0_15, %c0_16] : memref<10x10x32xf32, #tpu.memory_space<vmem>>, vector<1x10x32xf32>
    tpu.vector_store %arg9[%c9_14, %c0_15, %c0_16], %0 {strides = array<i32>} : memref<10x10x32xf32, #tpu.memory_space<vmem>>, vector<1x10x32xf32>,
    %c0_17 = arith.constant 0 : index
    %c0_18 = arith.constant 0 : index
    %c0_19 = arith.constant 0 : index
    %8 = vector.load %arg9[%c0_17, %c0_18, %c0_19] : memref<10x10x32xf32, #tpu.memory_space<vmem>>, vector<10x1x32xf32>
    tpu.vector_store %arg9[%c0_17, %c0_18, %c0_19], %1 {strides = array<i32>} : memref<10x10x32xf32, #tpu.memory_space<vmem>>, vector<10x1x32xf32>,
    %c0_20 = arith.constant 0 : index
    %c9_21 = arith.constant 9 : index
    %c0_22 = arith.constant 0 : index
    %9 = vector.load %arg9[%c0_20, %c9_21, %c0_22] : memref<10x10x32xf32, #tpu.memory_space<vmem>>, vector<10x1x32xf32>
    tpu.vector_store %arg9[%c0_20, %c9_21, %c0_22], %1 {strides = array<i32>} : memref<10x10x32xf32, #tpu.memory_space<vmem>>, vector<10x1x32xf32>,
    %c0_i32 = arith.constant 0 : i32
    %10 = arith.cmpi eq, %arg1, %c0_i32 : i32
    %11 = arith.extui %10 : i1 to i32
    %c0_i32_23 = arith.constant 0 : i32
    %12 = arith.cmpi ne, %11, %c0_i32_23 : i32
    scf.if %12 {
      %c0_193 = arith.constant 0 : index
      %c0_194 = arith.constant 0 : index
      %c0_195 = arith.constant 0 : index
      %c0_196 = arith.constant 0 : index
      %121 = vector.load %arg2[%c0_193, %c0_194, %c0_195, %c0_196] : memref<1x8x8x32xf32, #tpu.memory_space<vmem>>, vector<1x8x8x32xf32>
      %122 = vector.shape_cast %121 : vector<1x8x8x32xf32> to vector<8x8x32xf32>
      %c1_197 = arith.constant 1 : index
      %c1_198 = arith.constant 1 : index
      %c0_199 = arith.constant 0 : index
      %123 = vector.load %arg8[%c1_197, %c1_198, %c0_199] : memref<10x10x32xf32, #tpu.memory_space<vmem>>, vector<8x8x32xf32>
      tpu.vector_store %arg8[%c1_197, %c1_198, %c0_199], %122 {strides = array<i32>} : memref<10x10x32xf32, #tpu.memory_space<vmem>>, vector<8x8x32xf32>,
    } else {
    }
    %c0_24 = arith.constant 0 : index
    %c0_25 = arith.constant 0 : index
    %c0_26 = arith.constant 0 : index
    %13 = vector.load %arg8[%c0_24, %c0_25, %c0_26] : memref<10x10x32xf32, #tpu.memory_space<vmem>>, vector<8x8x32xf32>
    %14 = arith.truncf %13 : vector<8x8x32xf32> to vector<8x8x32xbf16>
    %c0_27 = arith.constant 0 : index
    %c0_28 = arith.constant 0 : index
    %c0_29 = arith.constant 0 : index
    %15 = vector.load %arg10[%c0_27, %c0_28, %c0_29] : memref<8x8x96xbf16, #tpu.memory_space<vmem>>, vector<8x8x32xbf16>
    tpu.vector_store %arg10[%c0_27, %c0_28, %c0_29], %14 {strides = array<i32>} : memref<8x8x96xbf16, #tpu.memory_space<vmem>>, vector<8x8x32xbf16>,
    %c0_30 = arith.constant 0 : index
    %c1 = arith.constant 1 : index
    %c0_31 = arith.constant 0 : index
    %16 = vector.load %arg8[%c0_30, %c1, %c0_31] : memref<10x10x32xf32, #tpu.memory_space<vmem>>, vector<8x8x32xf32>
    %17 = arith.truncf %16 : vector<8x8x32xf32> to vector<8x8x32xbf16>
    %c0_32 = arith.constant 0 : index
    %c0_33 = arith.constant 0 : index
    %c32 = arith.constant 32 : index
    %18 = vector.load %arg10[%c0_32, %c0_33, %c32] : memref<8x8x96xbf16, #tpu.memory_space<vmem>>, vector<8x8x32xbf16>
    tpu.vector_store %arg10[%c0_32, %c0_33, %c32], %17 {strides = array<i32>} : memref<8x8x96xbf16, #tpu.memory_space<vmem>>, vector<8x8x32xbf16>,
    %c0_34 = arith.constant 0 : index
    %c2 = arith.constant 2 : index
    %c0_35 = arith.constant 0 : index
    %19 = vector.load %arg8[%c0_34, %c2, %c0_35] : memref<10x10x32xf32, #tpu.memory_space<vmem>>, vector<8x8x32xf32>
    %20 = arith.truncf %19 : vector<8x8x32xf32> to vector<8x8x32xbf16>
    %c0_36 = arith.constant 0 : index
    %c0_37 = arith.constant 0 : index
    %c64 = arith.constant 64 : index
    %21 = vector.load %arg10[%c0_36, %c0_37, %c64] : memref<8x8x96xbf16, #tpu.memory_space<vmem>>, vector<8x8x32xbf16>
    tpu.vector_store %arg10[%c0_36, %c0_37, %c64], %20 {strides = array<i32>} : memref<8x8x96xbf16, #tpu.memory_space<vmem>>, vector<8x8x32xbf16>,
    %c0_38 = arith.constant 0 : index
    %c0_39 = arith.constant 0 : index
    %c0_40 = arith.constant 0 : index
    %22 = vector.load %arg10[%c0_38, %c0_39, %c0_40] : memref<8x8x96xbf16, #tpu.memory_space<vmem>>, vector<8x8x96xbf16>
    %23 = vector.shape_cast %22 : vector<8x8x96xbf16> to vector<64x96xbf16>
    %c0_41 = arith.constant 0 : index
    %c0_42 = arith.constant 0 : index
    %c0_43 = arith.constant 0 : index
    %c0_44 = arith.constant 0 : index
    %24 = vector.load %arg3[%c0_41, %c0_42, %c0_43, %c0_44] : memref<1x3x96x32xbf16, #tpu.memory_space<vmem>>, vector<1x1x96x32xbf16>
    %25 = vector.shape_cast %24 : vector<1x1x96x32xbf16> to vector<96x32xbf16>
    %cst_45 = arith.constant dense<0.000000e+00> : vector<64x32xf32>
    %26 = tpu.matmul %23, %25, %cst_45 {dimension_numbers = #tpu.dot_dimension_numbers<[1], [0], [0], [1], [0, 0, 1, 1], [], []>} : vector<64x96xbf16>, vector<96x32xbf16>, vector<64x32xf32> -> vector<64x32xf32>
    %c1_46 = arith.constant 1 : index
    %c0_47 = arith.constant 0 : index
    %c0_48 = arith.constant 0 : index
    %27 = vector.load %arg8[%c1_46, %c0_47, %c0_48] : memref<10x10x32xf32, #tpu.memory_space<vmem>>, vector<8x8x32xf32>
    %28 = arith.truncf %27 : vector<8x8x32xf32> to vector<8x8x32xbf16>
    %c0_49 = arith.constant 0 : index
    %c0_50 = arith.constant 0 : index
    %c0_51 = arith.constant 0 : index
    %29 = vector.load %arg10[%c0_49, %c0_50, %c0_51] : memref<8x8x96xbf16, #tpu.memory_space<vmem>>, vector<8x8x32xbf16>
    tpu.vector_store %arg10[%c0_49, %c0_50, %c0_51], %28 {strides = array<i32>} : memref<8x8x96xbf16, #tpu.memory_space<vmem>>, vector<8x8x32xbf16>,
    %c1_52 = arith.constant 1 : index
    %c1_53 = arith.constant 1 : index
    %c0_54 = arith.constant 0 : index
    %30 = vector.load %arg8[%c1_52, %c1_53, %c0_54] : memref<10x10x32xf32, #tpu.memory_space<vmem>>, vector<8x8x32xf32>
    %31 = arith.truncf %30 : vector<8x8x32xf32> to vector<8x8x32xbf16>
    %c0_55 = arith.constant 0 : index
    %c0_56 = arith.constant 0 : index
    %c32_57 = arith.constant 32 : index
    %32 = vector.load %arg10[%c0_55, %c0_56, %c32_57] : memref<8x8x96xbf16, #tpu.memory_space<vmem>>, vector<8x8x32xbf16>
    tpu.vector_store %arg10[%c0_55, %c0_56, %c32_57], %31 {strides = array<i32>} : memref<8x8x96xbf16, #tpu.memory_space<vmem>>, vector<8x8x32xbf16>,
    %c1_58 = arith.constant 1 : index
    %c2_59 = arith.constant 2 : index
    %c0_60 = arith.constant 0 : index
    %33 = vector.load %arg8[%c1_58, %c2_59, %c0_60] : memref<10x10x32xf32, #tpu.memory_space<vmem>>, vector<8x8x32xf32>
    %34 = arith.truncf %33 : vector<8x8x32xf32> to vector<8x8x32xbf16>
    %c0_61 = arith.constant 0 : index
    %c0_62 = arith.constant 0 : index
    %c64_63 = arith.constant 64 : index
    %35 = vector.load %arg10[%c0_61, %c0_62, %c64_63] : memref<8x8x96xbf16, #tpu.memory_space<vmem>>, vector<8x8x32xbf16>
    tpu.vector_store %arg10[%c0_61, %c0_62, %c64_63], %34 {strides = array<i32>} : memref<8x8x96xbf16, #tpu.memory_space<vmem>>, vector<8x8x32xbf16>,
    %c0_64 = arith.constant 0 : index
    %c0_65 = arith.constant 0 : index
    %c0_66 = arith.constant 0 : index
    %36 = vector.load %arg10[%c0_64, %c0_65, %c0_66] : memref<8x8x96xbf16, #tpu.memory_space<vmem>>, vector<8x8x96xbf16>
    %37 = vector.shape_cast %36 : vector<8x8x96xbf16> to vector<64x96xbf16>
    %c0_67 = arith.constant 0 : index
    %c1_68 = arith.constant 1 : index
    %c0_69 = arith.constant 0 : index
    %c0_70 = arith.constant 0 : index
    %38 = vector.load %arg3[%c0_67, %c1_68, %c0_69, %c0_70] : memref<1x3x96x32xbf16, #tpu.memory_space<vmem>>, vector<1x1x96x32xbf16>
    %39 = vector.shape_cast %38 : vector<1x1x96x32xbf16> to vector<96x32xbf16>
    %cst_71 = arith.constant dense<0.000000e+00> : vector<64x32xf32>
    %40 = tpu.matmul %37, %39, %cst_71 {dimension_numbers = #tpu.dot_dimension_numbers<[1], [0], [0], [1], [0, 0, 1, 1], [], []>} : vector<64x96xbf16>, vector<96x32xbf16>, vector<64x32xf32> -> vector<64x32xf32>
    %41 = arith.addf %26, %40 : vector<64x32xf32>
    %c2_72 = arith.constant 2 : index
    %c0_73 = arith.constant 0 : index
    %c0_74 = arith.constant 0 : index
    %42 = vector.load %arg8[%c2_72, %c0_73, %c0_74] : memref<10x10x32xf32, #tpu.memory_space<vmem>>, vector<8x8x32xf32>
    %43 = arith.truncf %42 : vector<8x8x32xf32> to vector<8x8x32xbf16>
    %c0_75 = arith.constant 0 : index
    %c0_76 = arith.constant 0 : index
    %c0_77 = arith.constant 0 : index
    %44 = vector.load %arg10[%c0_75, %c0_76, %c0_77] : memref<8x8x96xbf16, #tpu.memory_space<vmem>>, vector<8x8x32xbf16>
    tpu.vector_store %arg10[%c0_75, %c0_76, %c0_77], %43 {strides = array<i32>} : memref<8x8x96xbf16, #tpu.memory_space<vmem>>, vector<8x8x32xbf16>,
    %c2_78 = arith.constant 2 : index
    %c1_79 = arith.constant 1 : index
    %c0_80 = arith.constant 0 : index
    %45 = vector.load %arg8[%c2_78, %c1_79, %c0_80] : memref<10x10x32xf32, #tpu.memory_space<vmem>>, vector<8x8x32xf32>
    %46 = arith.truncf %45 : vector<8x8x32xf32> to vector<8x8x32xbf16>
    %c0_81 = arith.constant 0 : index
    %c0_82 = arith.constant 0 : index
    %c32_83 = arith.constant 32 : index
    %47 = vector.load %arg10[%c0_81, %c0_82, %c32_83] : memref<8x8x96xbf16, #tpu.memory_space<vmem>>, vector<8x8x32xbf16>
    tpu.vector_store %arg10[%c0_81, %c0_82, %c32_83], %46 {strides = array<i32>} : memref<8x8x96xbf16, #tpu.memory_space<vmem>>, vector<8x8x32xbf16>,
    %c2_84 = arith.constant 2 : index
    %c2_85 = arith.constant 2 : index
    %c0_86 = arith.constant 0 : index
    %48 = vector.load %arg8[%c2_84, %c2_85, %c0_86] : memref<10x10x32xf32, #tpu.memory_space<vmem>>, vector<8x8x32xf32>
    %49 = arith.truncf %48 : vector<8x8x32xf32> to vector<8x8x32xbf16>
    %c0_87 = arith.constant 0 : index
    %c0_88 = arith.constant 0 : index
    %c64_89 = arith.constant 64 : index
    %50 = vector.load %arg10[%c0_87, %c0_88, %c64_89] : memref<8x8x96xbf16, #tpu.memory_space<vmem>>, vector<8x8x32xbf16>
    tpu.vector_store %arg10[%c0_87, %c0_88, %c64_89], %49 {strides = array<i32>} : memref<8x8x96xbf16, #tpu.memory_space<vmem>>, vector<8x8x32xbf16>,
    %c0_90 = arith.constant 0 : index
    %c0_91 = arith.constant 0 : index
    %c0_92 = arith.constant 0 : index
    %51 = vector.load %arg10[%c0_90, %c0_91, %c0_92] : memref<8x8x96xbf16, #tpu.memory_space<vmem>>, vector<8x8x96xbf16>
    %52 = vector.shape_cast %51 : vector<8x8x96xbf16> to vector<64x96xbf16>
    %c0_93 = arith.constant 0 : index
    %c2_94 = arith.constant 2 : index
    %c0_95 = arith.constant 0 : index
    %c0_96 = arith.constant 0 : index
    %53 = vector.load %arg3[%c0_93, %c2_94, %c0_95, %c0_96] : memref<1x3x96x32xbf16, #tpu.memory_space<vmem>>, vector<1x1x96x32xbf16>
    %54 = vector.shape_cast %53 : vector<1x1x96x32xbf16> to vector<96x32xbf16>
    %cst_97 = arith.constant dense<0.000000e+00> : vector<64x32xf32>
    %55 = tpu.matmul %52, %54, %cst_97 {dimension_numbers = #tpu.dot_dimension_numbers<[1], [0], [0], [1], [0, 0, 1, 1], [], []>} : vector<64x96xbf16>, vector<96x32xbf16>, vector<64x32xf32> -> vector<64x32xf32>
    %56 = arith.addf %41, %55 : vector<64x32xf32>
    %c0_98 = arith.constant 0 : index
    %c0_99 = arith.constant 0 : index
    %c0_100 = arith.constant 0 : index
    %57 = vector.load %arg4[%c0_98, %c0_99, %c0_100] : memref<1x1x32xf32, #tpu.memory_space<vmem>>, vector<1x1x32xf32>
    %58 = vector.shape_cast %57 : vector<1x1x32xf32> to vector<1x32xf32>
    %59 = vector.broadcast %58 : vector<1x32xf32> to vector<64x32xf32>
    %60 = arith.addf %56, %59 : vector<64x32xf32>
    %cst_101 = arith.constant 0.000000e+00 : f32
    %61 = vector.broadcast %cst_101 : f32 to vector<64x32xf32>
    %62 = arith.maximumf %60, %61 : vector<64x32xf32>
    %63 = vector.shape_cast %62 : vector<64x32xf32> to vector<8x8x32xf32>
    %c1_102 = arith.constant 1 : index
    %c1_103 = arith.constant 1 : index
    %c0_104 = arith.constant 0 : index
    %64 = vector.load %arg9[%c1_102, %c1_103, %c0_104] : memref<10x10x32xf32, #tpu.memory_space<vmem>>, vector<8x8x32xf32>
    tpu.vector_store %arg9[%c1_102, %c1_103, %c0_104], %63 {strides = array<i32>} : memref<10x10x32xf32, #tpu.memory_space<vmem>>, vector<8x8x32xf32>,
    %c1_105 = arith.constant 1 : index
    %c1_106 = arith.constant 1 : index
    %c0_107 = arith.constant 0 : index
    %65 = vector.load %arg8[%c1_105, %c1_106, %c0_107] : memref<10x10x32xf32, #tpu.memory_space<vmem>>, vector<8x8x32xf32>
    %66 = vector.shape_cast %65 : vector<8x8x32xf32> to vector<64x32xf32>
    %c0_108 = arith.constant 0 : index
    %c0_109 = arith.constant 0 : index
    %c0_110 = arith.constant 0 : index
    %67 = vector.load %arg9[%c0_108, %c0_109, %c0_110] : memref<10x10x32xf32, #tpu.memory_space<vmem>>, vector<8x8x32xf32>
    %68 = arith.truncf %67 : vector<8x8x32xf32> to vector<8x8x32xbf16>
    %c0_111 = arith.constant 0 : index
    %c0_112 = arith.constant 0 : index
    %c0_113 = arith.constant 0 : index
    %69 = vector.load %arg10[%c0_111, %c0_112, %c0_113] : memref<8x8x96xbf16, #tpu.memory_space<vmem>>, vector<8x8x32xbf16>
    tpu.vector_store %arg10[%c0_111, %c0_112, %c0_113], %68 {strides = array<i32>} : memref<8x8x96xbf16, #tpu.memory_space<vmem>>, vector<8x8x32xbf16>,
    %c0_114 = arith.constant 0 : index
    %c1_115 = arith.constant 1 : index
    %c0_116 = arith.constant 0 : index
    %70 = vector.load %arg9[%c0_114, %c1_115, %c0_116] : memref<10x10x32xf32, #tpu.memory_space<vmem>>, vector<8x8x32xf32>
    %71 = arith.truncf %70 : vector<8x8x32xf32> to vector<8x8x32xbf16>
    %c0_117 = arith.constant 0 : index
    %c0_118 = arith.constant 0 : index
    %c32_119 = arith.constant 32 : index
    %72 = vector.load %arg10[%c0_117, %c0_118, %c32_119] : memref<8x8x96xbf16, #tpu.memory_space<vmem>>, vector<8x8x32xbf16>
    tpu.vector_store %arg10[%c0_117, %c0_118, %c32_119], %71 {strides = array<i32>} : memref<8x8x96xbf16, #tpu.memory_space<vmem>>, vector<8x8x32xbf16>,
    %c0_120 = arith.constant 0 : index
    %c2_121 = arith.constant 2 : index
    %c0_122 = arith.constant 0 : index
    %73 = vector.load %arg9[%c0_120, %c2_121, %c0_122] : memref<10x10x32xf32, #tpu.memory_space<vmem>>, vector<8x8x32xf32>
    %74 = arith.truncf %73 : vector<8x8x32xf32> to vector<8x8x32xbf16>
    %c0_123 = arith.constant 0 : index
    %c0_124 = arith.constant 0 : index
    %c64_125 = arith.constant 64 : index
    %75 = vector.load %arg10[%c0_123, %c0_124, %c64_125] : memref<8x8x96xbf16, #tpu.memory_space<vmem>>, vector<8x8x32xbf16>
    tpu.vector_store %arg10[%c0_123, %c0_124, %c64_125], %74 {strides = array<i32>} : memref<8x8x96xbf16, #tpu.memory_space<vmem>>, vector<8x8x32xbf16>,
    %c0_126 = arith.constant 0 : index
    %c0_127 = arith.constant 0 : index
    %c0_128 = arith.constant 0 : index
    %76 = vector.load %arg10[%c0_126, %c0_127, %c0_128] : memref<8x8x96xbf16, #tpu.memory_space<vmem>>, vector<8x8x96xbf16>
    %77 = vector.shape_cast %76 : vector<8x8x96xbf16> to vector<64x96xbf16>
    %c0_129 = arith.constant 0 : index
    %c0_130 = arith.constant 0 : index
    %c0_131 = arith.constant 0 : index
    %c0_132 = arith.constant 0 : index
    %78 = vector.load %arg5[%c0_129, %c0_130, %c0_131, %c0_132] : memref<1x3x96x32xbf16, #tpu.memory_space<vmem>>, vector<1x1x96x32xbf16>
    %79 = vector.shape_cast %78 : vector<1x1x96x32xbf16> to vector<96x32xbf16>
    %cst_133 = arith.constant dense<0.000000e+00> : vector<64x32xf32>
    %80 = tpu.matmul %77, %79, %cst_133 {dimension_numbers = #tpu.dot_dimension_numbers<[1], [0], [0], [1], [0, 0, 1, 1], [], []>} : vector<64x96xbf16>, vector<96x32xbf16>, vector<64x32xf32> -> vector<64x32xf32>
    %c1_134 = arith.constant 1 : index
    %c0_135 = arith.constant 0 : index
    %c0_136 = arith.constant 0 : index
    %81 = vector.load %arg9[%c1_134, %c0_135, %c0_136] : memref<10x10x32xf32, #tpu.memory_space<vmem>>, vector<8x8x32xf32>
    %82 = arith.truncf %81 : vector<8x8x32xf32> to vector<8x8x32xbf16>
    %c0_137 = arith.constant 0 : index
    %c0_138 = arith.constant 0 : index
    %c0_139 = arith.constant 0 : index
    %83 = vector.load %arg10[%c0_137, %c0_138, %c0_139] : memref<8x8x96xbf16, #tpu.memory_space<vmem>>, vector<8x8x32xbf16>
    tpu.vector_store %arg10[%c0_137, %c0_138, %c0_139], %82 {strides = array<i32>} : memref<8x8x96xbf16, #tpu.memory_space<vmem>>, vector<8x8x32xbf16>,
    %c1_140 = arith.constant 1 : index
    %c1_141 = arith.constant 1 : index
    %c0_142 = arith.constant 0 : index
    %84 = vector.load %arg9[%c1_140, %c1_141, %c0_142] : memref<10x10x32xf32, #tpu.memory_space<vmem>>, vector<8x8x32xf32>
    %85 = arith.truncf %84 : vector<8x8x32xf32> to vector<8x8x32xbf16>
    %c0_143 = arith.constant 0 : index
    %c0_144 = arith.constant 0 : index
    %c32_145 = arith.constant 32 : index
    %86 = vector.load %arg10[%c0_143, %c0_144, %c32_145] : memref<8x8x96xbf16, #tpu.memory_space<vmem>>, vector<8x8x32xbf16>
    tpu.vector_store %arg10[%c0_143, %c0_144, %c32_145], %85 {strides = array<i32>} : memref<8x8x96xbf16, #tpu.memory_space<vmem>>, vector<8x8x32xbf16>,
    %c1_146 = arith.constant 1 : index
    %c2_147 = arith.constant 2 : index
    %c0_148 = arith.constant 0 : index
    %87 = vector.load %arg9[%c1_146, %c2_147, %c0_148] : memref<10x10x32xf32, #tpu.memory_space<vmem>>, vector<8x8x32xf32>
    %88 = arith.truncf %87 : vector<8x8x32xf32> to vector<8x8x32xbf16>
    %c0_149 = arith.constant 0 : index
    %c0_150 = arith.constant 0 : index
    %c64_151 = arith.constant 64 : index
    %89 = vector.load %arg10[%c0_149, %c0_150, %c64_151] : memref<8x8x96xbf16, #tpu.memory_space<vmem>>, vector<8x8x32xbf16>
    tpu.vector_store %arg10[%c0_149, %c0_150, %c64_151], %88 {strides = array<i32>} : memref<8x8x96xbf16, #tpu.memory_space<vmem>>, vector<8x8x32xbf16>,
    %c0_152 = arith.constant 0 : index
    %c0_153 = arith.constant 0 : index
    %c0_154 = arith.constant 0 : index
    %90 = vector.load %arg10[%c0_152, %c0_153, %c0_154] : memref<8x8x96xbf16, #tpu.memory_space<vmem>>, vector<8x8x96xbf16>
    %91 = vector.shape_cast %90 : vector<8x8x96xbf16> to vector<64x96xbf16>
    %c0_155 = arith.constant 0 : index
    %c1_156 = arith.constant 1 : index
    %c0_157 = arith.constant 0 : index
    %c0_158 = arith.constant 0 : index
    %92 = vector.load %arg5[%c0_155, %c1_156, %c0_157, %c0_158] : memref<1x3x96x32xbf16, #tpu.memory_space<vmem>>, vector<1x1x96x32xbf16>
    %93 = vector.shape_cast %92 : vector<1x1x96x32xbf16> to vector<96x32xbf16>
    %cst_159 = arith.constant dense<0.000000e+00> : vector<64x32xf32>
    %94 = tpu.matmul %91, %93, %cst_159 {dimension_numbers = #tpu.dot_dimension_numbers<[1], [0], [0], [1], [0, 0, 1, 1], [], []>} : vector<64x96xbf16>, vector<96x32xbf16>, vector<64x32xf32> -> vector<64x32xf32>
    %95 = arith.addf %80, %94 : vector<64x32xf32>
    %c2_160 = arith.constant 2 : index
    %c0_161 = arith.constant 0 : index
    %c0_162 = arith.constant 0 : index
    %96 = vector.load %arg9[%c2_160, %c0_161, %c0_162] : memref<10x10x32xf32, #tpu.memory_space<vmem>>, vector<8x8x32xf32>
    %97 = arith.truncf %96 : vector<8x8x32xf32> to vector<8x8x32xbf16>
    %c0_163 = arith.constant 0 : index
    %c0_164 = arith.constant 0 : index
    %c0_165 = arith.constant 0 : index
    %98 = vector.load %arg10[%c0_163, %c0_164, %c0_165] : memref<8x8x96xbf16, #tpu.memory_space<vmem>>, vector<8x8x32xbf16>
    tpu.vector_store %arg10[%c0_163, %c0_164, %c0_165], %97 {strides = array<i32>} : memref<8x8x96xbf16, #tpu.memory_space<vmem>>, vector<8x8x32xbf16>,
    %c2_166 = arith.constant 2 : index
    %c1_167 = arith.constant 1 : index
    %c0_168 = arith.constant 0 : index
    %99 = vector.load %arg9[%c2_166, %c1_167, %c0_168] : memref<10x10x32xf32, #tpu.memory_space<vmem>>, vector<8x8x32xf32>
    %100 = arith.truncf %99 : vector<8x8x32xf32> to vector<8x8x32xbf16>
    %c0_169 = arith.constant 0 : index
    %c0_170 = arith.constant 0 : index
    %c32_171 = arith.constant 32 : index
    %101 = vector.load %arg10[%c0_169, %c0_170, %c32_171] : memref<8x8x96xbf16, #tpu.memory_space<vmem>>, vector<8x8x32xbf16>
    tpu.vector_store %arg10[%c0_169, %c0_170, %c32_171], %100 {strides = array<i32>} : memref<8x8x96xbf16, #tpu.memory_space<vmem>>, vector<8x8x32xbf16>,
    %c2_172 = arith.constant 2 : index
    %c2_173 = arith.constant 2 : index
    %c0_174 = arith.constant 0 : index
    %102 = vector.load %arg9[%c2_172, %c2_173, %c0_174] : memref<10x10x32xf32, #tpu.memory_space<vmem>>, vector<8x8x32xf32>
    %103 = arith.truncf %102 : vector<8x8x32xf32> to vector<8x8x32xbf16>
    %c0_175 = arith.constant 0 : index
    %c0_176 = arith.constant 0 : index
    %c64_177 = arith.constant 64 : index
    %104 = vector.load %arg10[%c0_175, %c0_176, %c64_177] : memref<8x8x96xbf16, #tpu.memory_space<vmem>>, vector<8x8x32xbf16>
    tpu.vector_store %arg10[%c0_175, %c0_176, %c64_177], %103 {strides = array<i32>} : memref<8x8x96xbf16, #tpu.memory_space<vmem>>, vector<8x8x32xbf16>,
    %c0_178 = arith.constant 0 : index
    %c0_179 = arith.constant 0 : index
    %c0_180 = arith.constant 0 : index
    %105 = vector.load %arg10[%c0_178, %c0_179, %c0_180] : memref<8x8x96xbf16, #tpu.memory_space<vmem>>, vector<8x8x96xbf16>
    %106 = vector.shape_cast %105 : vector<8x8x96xbf16> to vector<64x96xbf16>
    %c0_181 = arith.constant 0 : index
    %c2_182 = arith.constant 2 : index
    %c0_183 = arith.constant 0 : index
    %c0_184 = arith.constant 0 : index
    %107 = vector.load %arg5[%c0_181, %c2_182, %c0_183, %c0_184] : memref<1x3x96x32xbf16, #tpu.memory_space<vmem>>, vector<1x1x96x32xbf16>
    %108 = vector.shape_cast %107 : vector<1x1x96x32xbf16> to vector<96x32xbf16>
    %cst_185 = arith.constant dense<0.000000e+00> : vector<64x32xf32>
    %109 = tpu.matmul %106, %108, %cst_185 {dimension_numbers = #tpu.dot_dimension_numbers<[1], [0], [0], [1], [0, 0, 1, 1], [], []>} : vector<64x96xbf16>, vector<96x32xbf16>, vector<64x32xf32> -> vector<64x32xf32>
    %110 = arith.addf %95, %109 : vector<64x32xf32>
    %111 = arith.addf %66, %110 : vector<64x32xf32>
    %c0_186 = arith.constant 0 : index
    %c0_187 = arith.constant 0 : index
    %c0_188 = arith.constant 0 : index
    %112 = vector.load %arg6[%c0_186, %c0_187, %c0_188] : memref<1x1x32xf32, #tpu.memory_space<vmem>>, vector<1x1x32xf32>
    %113 = vector.shape_cast %112 : vector<1x1x32xf32> to vector<1x32xf32>
    %114 = vector.broadcast %113 : vector<1x32xf32> to vector<64x32xf32>
    %115 = arith.addf %111, %114 : vector<64x32xf32>
    %116 = vector.shape_cast %115 : vector<64x32xf32> to vector<8x8x32xf32>
    %c1_189 = arith.constant 1 : index
    %c1_190 = arith.constant 1 : index
    %c0_191 = arith.constant 0 : index
    %117 = vector.load %arg8[%c1_189, %c1_190, %c0_191] : memref<10x10x32xf32, #tpu.memory_space<vmem>>, vector<8x8x32xf32>
    tpu.vector_store %arg8[%c1_189, %c1_190, %c0_191], %116 {strides = array<i32>} : memref<10x10x32xf32, #tpu.memory_space<vmem>>, vector<8x8x32xf32>,
    %c1_i32 = arith.constant 1 : i32
    %118 = arith.cmpi eq, %arg1, %c1_i32 : i32
    %119 = arith.extui %118 : i1 to i32
    %c0_i32_192 = arith.constant 0 : i32
    %120 = arith.cmpi ne, %119, %c0_i32_192 : i32
    scf.if %120 {
      %c1_193 = arith.constant 1 : index
      %c1_194 = arith.constant 1 : index
      %c0_195 = arith.constant 0 : index
      %121 = vector.load %arg8[%c1_193, %c1_194, %c0_195] : memref<10x10x32xf32, #tpu.memory_space<vmem>>, vector<8x8x32xf32>
      %c0_196 = arith.constant 0 : index
      %c0_197 = arith.constant 0 : index
      %c0_198 = arith.constant 0 : index
      %c0_199 = arith.constant 0 : index
      %122 = vector.load %arg7[%c0_196, %c0_197, %c0_198, %c0_199] : memref<1x8x8x32xf32, #tpu.memory_space<vmem>>, vector<1x8x8x32xf32>
      %123 = vector.shape_cast %122 : vector<1x8x8x32xf32> to vector<8x8x32xf32>
      %124 = vector.shape_cast %121 : vector<8x8x32xf32> to vector<1x8x8x32xf32>
      tpu.vector_store %arg7[%c0_196, %c0_197, %c0_198, %c0_199], %124 {strides = array<i32>} : memref<1x8x8x32xf32, #tpu.memory_space<vmem>>, vector<1x8x8x32xf32>,
    } else {
    }
    return
  }
  func.func @transform_0(%arg0: i32, %arg1: i32) -> (i32, i32, i32, i32) {
    %c0_i32 = arith.constant 0 : i32
    %c0_i32_0 = arith.constant 0 : i32
    %c0_i32_1 = arith.constant 0 : i32
    %c0_i32_2 = arith.constant 0 : i32
    return %arg0, %c0_i32, %c0_i32_0, %c0_i32_1 : i32, i32, i32, i32
  }
  func.func @transform_1(%arg0: i32, %arg1: i32) -> (i32, i32, i32, i32) {
    %c0_i32 = arith.constant 0 : i32
    %c0_i32_0 = arith.constant 0 : i32
    %c0_i32_1 = arith.constant 0 : i32
    %c0_i32_2 = arith.constant 0 : i32
    return %arg1, %c0_i32, %c0_i32_0, %c0_i32_1 : i32, i32, i32, i32
  }
  func.func @transform_2(%arg0: i32, %arg1: i32) -> (i32, i32, i32) {
    %c0_i32 = arith.constant 0 : i32
    %c0_i32_0 = arith.constant 0 : i32
    %c0_i32_1 = arith.constant 0 : i32
    return %arg1, %c0_i32, %c0_i32_0 : i32, i32, i32
  }
  func.func @transform_3(%arg0: i32, %arg1: i32) -> (i32, i32, i32, i32) {
    %c0_i32 = arith.constant 0 : i32
    %c0_i32_0 = arith.constant 0 : i32
    %c0_i32_1 = arith.constant 0 : i32
    %c0_i32_2 = arith.constant 0 : i32
    return %arg1, %c0_i32, %c0_i32_0, %c0_i32_1 : i32, i32, i32, i32
  }
  func.func @transform_4(%arg0: i32, %arg1: i32) -> (i32, i32, i32) {
    %c0_i32 = arith.constant 0 : i32
    %c0_i32_0 = arith.constant 0 : i32
    %c0_i32_1 = arith.constant 0 : i32
    return %arg1, %c0_i32, %c0_i32_0 : i32, i32, i32
  }
  func.func @transform_5(%arg0: i32, %arg1: i32) -> (i32, i32, i32, i32) {
    %c0_i32 = arith.constant 0 : i32
    %c0_i32_0 = arith.constant 0 : i32
    %c0_i32_1 = arith.constant 0 : i32
    %c0_i32_2 = arith.constant 0 : i32
    return %arg0, %c0_i32, %c0_i32_0, %c0_i32_1 : i32, i32, i32, i32
  }
}

</mosaic_0001>

<llo_original>
// kernel: conv_res_block_forward.2
$region0: #{conv_res_block_forward.2}
  #allocation0 [shape = 'u32[]', space=smem, size = 0x4, offset = 0x4, fixed_abs, tag = 'smem constant byte address 0x4 - core index']
  #allocation1 [shape = 'u32[144,128]{1,0:T(1,128)}', space=vmem, size = 0x12000, scoped, tag = 'internal scratch']
  %s0 = inlined_call_operand.vmem [shape: bf16[2,8,8,48], index: 0, kind: input, shape index: {}]
  %s1 = inlined_call_operand.vmem [shape: bf16[48,32], index: 1, kind: input, shape index: {}]
  %s2 = inlined_call_operand.vmem [shape: f32[1,32], index: 2, kind: input, shape index: {}]
  %s3 = inlined_call_operand.vmem [shape: f32[2,8,8,32], index: 3, kind: output, shape index: {}]
  %s4 = sld [smem:[#allocation0]]
  $region45: #{conv_res_block_forward.2} parent=0
    _
  %s6 = ssub.s32 1, %s4
  %s7 = scalar_select 0, %s6, %s4
  loop: start=0, step=1, limit=4
  $region2: #{conv_res_block_forward.2} parent=0 // loop_pre_header
    _
  $region3: #{conv_res_block_forward.2} parent=0 // loop_header
    %s9 = sphi 0, %s13
    %p10 = scmp.ge.s32.totalorder %s9, 4
    %s19 = sphi 0, %s21
    %s22 = sphi 0, %s19
    %s23 = sphi 0, %s22
    %s39 = sphi 0, %s23
    %s43 = sphi 0, %s43
    %s45 = sphi 0, %s43
    %s46 = sphi 0, %s45
    %s60 = sphi 0, %s46
    %s64 = sphi 0, %s64
    %s66 = sphi 0, %s64
    %s67 = sphi 0, %s66
    %s81 = sphi 0, %s67
    %s87 = sphi 0, %s89
    %s90 = sphi 0, %s87
    %s91 = sphi 0, %s90
    %s107 = sphi 0, %s91
  $region4: #{conv_res_block_forward.2} parent=0 // loop_header_branch
    %12 = sbr.rel (%p10) target = $region8
  $region5: #{conv_res_block_forward.2} parent=0 // loop_body
    %s14 = ssub.s32 %s9, 1
    %s15 = ssub.s32 %s9, 2
    %s16 = sadd.s32 %s9, 1
    %s17 = ssub.s32 %s9, %s16
    %p18 = scmp.eq.s32.totalorder %s17, 0
    %s20 = sadd.s32 %s19, 1
    %s21 = scalar_select %p18, %s19, %s20
    %p24 = pneg %p18
    %p25 = scmp.eq.s32.totalorder %s9, 1
    %p26 = por %p24, %p25
    %p27 = scmp.ne.s32.totalorder %s19, %s22
    %p28 = scmp.eq.s32.totalorder %s9, 0
    %p29 = por %p27, %p28
    %p30 = scmp.ne.s32.totalorder %s19, %s22
    %p31 = scmp.eq.s32.totalorder %s14, 1
    %p32 = por %p30, %p31
    %p33 = scmp.ne.s32.totalorder %s22, %s23
    %p34 = scmp.eq.s32.totalorder %s14, 0
    %p35 = por %p33, %p34
    %p36 = scmp.ne.s32.totalorder %s22, %s23
    %p37 = scmp.eq.s32.totalorder %s15, 1
    %p38 = por %p36, %p37
    %p40 = scmp.ne.s32.totalorder %s23, %s39
    %p41 = scmp.eq.s32.totalorder %s15, 0
    %p42 = por %p40, %p41
    %s44 = sadd.s32 %s43, 1
    %p47 = scmp.eq.s32.totalorder %s9, 1
    %p48 = scmp.ne.s32.totalorder %s43, %s45
    %p49 = scmp.eq.s32.totalorder %s9, 0
    %p50 = por %p48, %p49
    %p51 = scmp.ne.s32.totalorder %s43, %s45
    %p52 = scmp.eq.s32.totalorder %s14, 1
    %p53 = por %p51, %p52
    %p54 = scmp.ne.s32.totalorder %s45, %s46
    %p55 = scmp.eq.s32.totalorder %s14, 0
    %p56 = por %p54, %p55
    %p57 = scmp.ne.s32.totalorder %s45, %s46
    %p58 = scmp.eq.s32.totalorder %s15, 1
    %p59 = por %p57, %p58
    %p61 = scmp.ne.s32.totalorder %s46, %s60
    %p62 = scmp.eq.s32.totalorder %s15, 0
    %p63 = por %p61, %p62
    %s65 = sadd.s32 %s64, 1
    %p68 = scmp.eq.s32.totalorder %s9, 1
    %p69 = scmp.ne.s32.totalorder %s64, %s66
    %p70 = scmp.eq.s32.totalorder %s9, 0
    %p71 = por %p69, %p70
    %p72 = scmp.ne.s32.totalorder %s64, %s66
    %p73 = scmp.eq.s32.totalorder %s14, 1
    %p74 = por %p72, %p73
    %p75 = scmp.ne.s32.totalorder %s66, %s67
    %p76 = scmp.eq.s32.totalorder %s14, 0
    %p77 = por %p75, %p76
    %p78 = scmp.ne.s32.totalorder %s66, %s67
    %p79 = scmp.eq.s32.totalorder %s15, 1
    %p80 = por %p78, %p79
    %p82 = scmp.ne.s32.totalorder %s67, %s81
    %p83 = scmp.eq.s32.totalorder %s15, 0
    %p84 = por %p82, %p83
    %s85 = ssub.s32 %s9, %s16
    %p86 = scmp.eq.s32.totalorder %s85, 0
    %s88 = sadd.s32 %s87, 1
    %s89 = scalar_select %p86, %s87, %s88
    %p92 = pneg %p86
    %p93 = scmp.eq.s32.totalorder %s9, 1
    %p94 = por %p92, %p93
    %p95 = scmp.ne.s32.totalorder %s87, %s90
    %p96 = scmp.eq.s32.totalorder %s9, 0
    %p97 = por %p95, %p96
    %p98 = scmp.ne.s32.totalorder %s87, %s90
    %p99 = scmp.eq.s32.totalorder %s14, 1
    %p100 = por %p98, %p99
    %p101 = scmp.ne.s32.totalorder %s90, %s91
    %p102 = scmp.eq.s32.totalorder %s14, 0
    %p103 = por %p101, %p102
    %p104 = scmp.ne.s32.totalorder %s90, %s91
    %p105 = scmp.eq.s32.totalorder %s15, 1
    %p106 = por %p104, %p105
    %p108 = scmp.ne.s32.totalorder %s91, %s107
    %p109 = scmp.eq.s32.totalorder %s15, 0
    %p110 = por %p108, %p109
    %p111 = scmp.le.s32.totalorder 1, %s9
    %p112 = scmp.lt.s32.totalorder %s9, 3
    %p113 = pnand %p111, %p112
    %p114 = pneg %p113
    // Predicated region
    $region9: #{conv_res_block_forward.2} parent=5 // pred_check
      _
    $region10: #{conv_res_block_forward.2} parent=5 // pred_check_branch
      %116 = sbr.rel (%p113) target = $region12
    $region11: #{conv_res_block_forward.2} parent=5 // pred_region
      %s117 = ssub.s32 %s9, 1
      // Predicated region
      $region13: #{conv_res_block_forward.2} parent=11 // pred_check
        %p118 = pneg %p56
      $region14: #{conv_res_block_forward.2} parent=11 // pred_check_branch
        %120 = sbr.rel (%p118) target = $region16
      $region15: #{conv_res_block_forward.2} parent=11 // pred_region
        _
      $region16: #{conv_res_block_forward.2} parent=11 // pred_fallthru
        _
      // Predicated region
      $region17: #{conv_res_block_forward.2} parent=11 // pred_check
        %p121 = pneg %p77
      $region18: #{conv_res_block_forward.2} parent=11 // pred_check_branch
        %123 = sbr.rel (%p121) target = $region20
      $region19: #{conv_res_block_forward.2} parent=11 // pred_region
        _
      $region20: #{conv_res_block_forward.2} parent=11 // pred_fallthru
        _
    $region12: #{conv_res_block_forward.2} parent=5 // pred_fallthru
      _
    %p124 = scmp.lt.s32.totalorder %s9, 2
    // Predicated region
    $region21: #{conv_res_block_forward.2} parent=5 // pred_check
      %p125 = pneg %p124
    $region22: #{conv_res_block_forward.2} parent=5 // pred_check_branch
      %127 = sbr.rel (%p125) target = $region24
    $region23: #{conv_res_block_forward.2} parent=5 // pred_region
      // Predicated region
      $region25: #{conv_res_block_forward.2} parent=23 // pred_check
        %p128 = pneg %p29
      $region26: #{conv_res_block_forward.2} parent=23 // pred_check_branch
        %130 = sbr.rel (%p128) target = $region28
      $region27: #{conv_res_block_forward.2} parent=23 // pred_region
        %p131 = scmp.lt.s32.totalorder %s9, 1
        %s132 = scalar_select %p131, %s9, 1
        %s133 = smul.addr %s132, 8
        %s134 = smul.addr %s133, 4
        %s135 = scalar_lea.vmem %s0, %s134
      $region28: #{conv_res_block_forward.2} parent=23 // pred_fallthru
        _
    $region24: #{conv_res_block_forward.2} parent=5 // pred_fallthru
      _
    %p136 = scmp.le.s32.totalorder 1, %s9
    %p137 = scmp.lt.s32.totalorder %s9, 3
    %p138 = pnand %p136, %p137
    %p139 = pneg %p138
    // Predicated region
    $region29: #{conv_res_block_forward.2} parent=5 // pred_check
      _
    $region30: #{conv_res_block_forward.2} parent=5 // pred_check_branch
      %141 = sbr.rel (%p138) target = $region32
    $region31: #{conv_res_block_forward.2} parent=5 // pred_region
      %s142 = ssub.s32 %s9, 1
      %p143 = scmp.lt.s32.totalorder %s14, 1
      %s144 = scalar_select %p143, %s14, 1
      %s145 = smul.addr %s144, 8
      %s146 = smul.addr %s145, 4
      %s147 = scalar_lea.vmem %s0, %s146
      %p148 = pneg %p35
      %p149 = pneg %p32
      %p150 = pneg %p56
      %p151 = pneg %p53
      %p152 = pneg %p77
      %p153 = pneg %p74
      %p154 = pneg %p103
      %p155 = pneg %p100
      %p156 = scmp.lt.s32.totalorder %s14, 1
      %s157 = scalar_select %p156, %s14, 1
      %s158 = smul.addr %s157, 8
      %s159 = smul.addr %s158, 8
      %s160 = scalar_lea.vmem %s3, %s159
      %p161 = scmp.lt.s32.totalorder %s14, 1
      %s162 = scalar_select %p161, %s14, 1
      %s163 = smul.addr %s162, 8
      %s164 = smul.addr %s163, 4
      %s165 = scalar_lea.vmem %s0, %s164
      %p166 = scmp.lt.s32.totalorder %s14, 1
      %s167 = scalar_select %p166, %s14, 1
      %s168 = smul.addr %s167, 8
      %s169 = smul.addr %s168, 8
      %s170 = scalar_lea.vmem %s3, %s169
      %v172 = vld [vmem:[%s165] sm:$0xf]
      %v173 = vld [vmem:[%s165 + $0x4] sm:$0xf]
      %v174 = vld [vmem:[%s165 + $0x8] sm:$0xf]
      %v175 = vld [vmem:[%s165 + $0xc] sm:$0xf]
      %v176 = vld [vmem:[%s165 + $0x10] sm:$0xf]
      %v177 = vld [vmem:[%s165 + $0x14] sm:$0xf]
      %v178 = vld [vmem:[%s165 + $0x18] sm:$0xf]
      %v179 = vld [vmem:[%s165 + $0x1c] sm:$0xf]
      %v180 = vld [vmem:[%s1] sm:$0xf]
      %v181 = vld [vmem:[%s1 + $0x4] sm:$0xf]
      %v182 = vld [vmem:[%s1 + $0x8] sm:$0xf]
      %v183 = vld [vmem:[%s1 + $0xc] sm:$0xf]
      %v184 = vld [vmem:[%s1 + $0x10] sm:$0xf]
      %v185 = vld [vmem:[%s1 + $0x14] sm:$0xf]
      %v186 = vld [vmem:[%s2] sm:$0x1]
      %v188 = vlaneseq
      %v189 = vshrl.u32 %v188, 7
      %v190 = vsub.s32 0, %v189
      %v191 = vrot.slane %v186, %v190
      %v201 = vunpack.c.l.b16 %v172
      %v202 = vunpack.c.l.b16 %v173
      %v203 = vunpack.c.l.b16 %v174
      %v204 = vunpack.c.l.b16 %v175
      %v205 = vunpack.c.l.b16 %v176
      %v206 = vunpack.c.l.b16 %v177
      %v207 = vunpack.c.l.b16 %v178
      %v208 = vunpack.c.l.b16 %v179
      %v209 = vpack.c.b16 %v202, %v201
      %v210 = vpack.c.b16 %v204, %v203
      %v211 = vpack.c.b16 %v206, %v205
      %v212 = vpack.c.b16 %v208, %v207
      %v219 = vunpack.c.l.b16 %v180
      %v220 = vunpack.c.l.b16 %v181
      %v221 = vunpack.c.l.b16 %v182
      %v222 = vunpack.c.l.b16 %v183
      %v223 = vunpack.c.l.b16 %v184
      %v224 = vunpack.c.l.b16 %v185
      %v225 = vpack.c.b16 %v220, %v219
      %v226 = vpack.c.b16 %v222, %v221
      %v227 = vpack.c.b16 %v224, %v223
      %vm231 = vcmask 392192
      %v233 = vsel %vm231, %v209, 0
      %v236 = vsel %vm231, %v210, 0
      %v239 = vsel %vm231, %v211, 0
      %v242 = vsel %vm231, %v212, 0
      %244 = vmatprep.subr.bf16.mxu0 0
      %245 = vmatpush1.bf16.msra.mxu0 %v225
      %246 = vmatprep.subr.bf16.mxu0 0
      %247 = vmatpush1.bf16.msra.mxu0 %v226
      %248 = vmatprep.subr.bf16.mxu0 0
      %249 = vmatpush1.bf16.msra.mxu0 %v227
      %250 = vmatprep.subr.bf16.mxu0 0
      %251 = vmatpush1.bf16.msra.mxu0 0
      %252 = vmatprep.subr.bf16.mxu0 0
      %253 = vmatpush1.bf16.msra.mxu0 0
      %254 = vmatprep.subr.bf16.mxu0 0
      %255 = vmatpush1.bf16.msra.mxu0 0
      %256 = vmatprep.subr.bf16.mxu0 0
      %257 = vmatpush1.bf16.msra.mxu0 0
      %258 = vmatprep.subr.bf16.mxu0 0
      %259 = vmatpush1.bf16.msra.mxu0 0
      %260 = vmatprep.subr.bf16.mxu0 0
      %261 = vmatpush1.bf16.msra.mxu0 0
      %262 = vmatprep.subr.bf16.mxu0 0
      %263 = vmatpush1.bf16.msra.mxu0 0
      %264 = vmatprep.subr.bf16.mxu0 0
      %265 = vmatpush1.bf16.msra.mxu0 0
      %266 = vmatprep.subr.bf16.mxu0 0
      %267 = vmatpush1.bf16.msra.mxu0 0
      %268 = vmatprep.subr.bf16.mxu0 0
      %269 = vmatpush1.bf16.msra.mxu0 0
      %270 = vmatprep.subr.bf16.mxu0 0
      %271 = vmatpush1.bf16.msra.mxu0 0
      %272 = vmatprep.subr.bf16.mxu0 0
      %273 = vmatpush1.bf16.msra.mxu0 0
      %274 = vmatprep.subr.bf16.mxu0 0
      %275 = vmatpush1.bf16.msra.mxu0 0
      %276 = vmatprep.mubr.bf16.mxu0 0
      %277 = vmatmul.mubr.bf16.gmra.mrb[0].mxu0 %v233
      %v278 = vpop.f32.mrb[0].mxu0
      %v279 = vadd.f32 %v191, %v278
      %v280 = vpop.f32.mrb[0].mxu0
      %v281 = vpop.f32.mrb[0].mxu0
      %v282 = vadd.f32 %v191, %v281
      %v283 = vpop.f32.mrb[0].mxu0
      %284 = vmatprep.mubr.bf16.mxu0 0
      %285 = vmatmul.mubr.bf16.gmra.mrb[0].mxu0 %v236
      %v286 = vpop.f32.mrb[0].mxu0
      %v287 = vadd.f32 %v191, %v286
      %v288 = vpop.f32.mrb[0].mxu0
      %v289 = vpop.f32.mrb[0].mxu0
      %v290 = vadd.f32 %v191, %v289
      %v291 = vpop.f32.mrb[0].mxu0
      %292 = vmatprep.mubr.bf16.mxu0 0
      %293 = vmatmul.mubr.bf16.gmra.mrb[0].mxu0 %v239
      %v294 = vpop.f32.mrb[0].mxu0
      %v295 = vadd.f32 %v191, %v294
      %v296 = vpop.f32.mrb[0].mxu0
      %v297 = vpop.f32.mrb[0].mxu0
      %v298 = vadd.f32 %v191, %v297
      %v299 = vpop.f32.mrb[0].mxu0
      %300 = vmatprep.mubr.bf16.mxu0 0
      %301 = vmatmul.mubr.bf16.gmra.mrb[0].mxu0 %v242
      %v302 = vpop.f32.mrb[0].mxu0
      %v303 = vadd.f32 %v191, %v302
      %v304 = vpop.f32.mrb[0].mxu0
      %v305 = vpop.f32.mrb[0].mxu0
      %v306 = vadd.f32 %v191, %v305
      %v307 = vpop.f32.mrb[0].mxu0
      %308 = vdwg.mxu0
      %vm309 = vcmp.ge.f32.partialorder %v279, 0.0
      %vm310 = vcmp.ge.f32.partialorder %v282, 0.0
      %vm311 = vcmp.ge.f32.partialorder %v287, 0.0
      %vm312 = vcmp.ge.f32.partialorder %v290, 0.0
      %vm313 = vcmp.ge.f32.partialorder %v295, 0.0
      %vm314 = vcmp.ge.f32.partialorder %v298, 0.0
      %vm315 = vcmp.ge.f32.partialorder %v303, 0.0
      %vm316 = vcmp.ge.f32.partialorder %v306, 0.0
      %v317 = vmul.f32 %v279, 0.1
      %v318 = vmul.f32 %v282, 0.1
      %v319 = vmul.f32 %v287, 0.1
      %v320 = vmul.f32 %v290, 0.1
      %v321 = vmul.f32 %v295, 0.1
      %v322 = vmul.f32 %v298, 0.1
      %v323 = vmul.f32 %v303, 0.1
      %v324 = vmul.f32 %v306, 0.1
      %v325 = vsel %vm309, %v279, %v317
      %v326 = vsel %vm310, %v282, %v318
      %v327 = vsel %vm311, %v287, %v319
      %v328 = vsel %vm312, %v290, %v320
      %v329 = vsel %vm313, %v295, %v321
      %v330 = vsel %vm314, %v298, %v322
      %v331 = vsel %vm315, %v303, %v323
      %v332 = vsel %vm316, %v306, %v324
      %vm333 = vcmask 261120
      %334 = vst.msk [vmem:[%s170] sm:$0xff] %vm333, %v325
      %335 = vst.msk [vmem:[%s170 + $0x8] sm:$0xff] %vm333, %v326
      %336 = vst.msk [vmem:[%s170 + $0x10] sm:$0xff] %vm333, %v327
      %337 = vst.msk [vmem:[%s170 + $0x18] sm:$0xff] %vm333, %v328
      %338 = vst.msk [vmem:[%s170 + $0x20] sm:$0xff] %vm333, %v329
      %339 = vst.msk [vmem:[%s170 + $0x28] sm:$0xff] %vm333, %v330
      %340 = vst.msk [vmem:[%s170 + $0x30] sm:$0xff] %vm333, %v331
      %341 = vst.msk [vmem:[%s170 + $0x38] sm:$0xff] %vm333, %v332
      %p342 = scmp.lt.s32.totalorder %s14, 1
      %s343 = scalar_select %p342, %s14, 1
      %s344 = smul.addr %s343, 8
      %s345 = smul.addr %s344, 8
      %s346 = scalar_lea.vmem %s3, %s345
      // Predicated region
      $region33: #{conv_res_block_forward.2} parent=31 // pred_check
        %p347 = pneg %p100
      $region34: #{conv_res_block_forward.2} parent=31 // pred_check_branch
        %349 = sbr.rel (%p347) target = $region36
      $region35: #{conv_res_block_forward.2} parent=31 // pred_region
        _
      $region36: #{conv_res_block_forward.2} parent=31 // pred_fallthru
        _
    $region32: #{conv_res_block_forward.2} parent=5 // pred_fallthru
      _
    %p350 = scmp.le.s32.totalorder 2, %s9
    // Predicated region
    $region37: #{conv_res_block_forward.2} parent=5 // pred_check
      %p351 = pneg %p350
    $region38: #{conv_res_block_forward.2} parent=5 // pred_check_branch
      %353 = sbr.rel (%p351) target = $region40
    $region39: #{conv_res_block_forward.2} parent=5 // pred_region
      %s354 = ssub.s32 %s9, 2
      // Predicated region
      $region41: #{conv_res_block_forward.2} parent=39 // pred_check
        %p355 = pneg %p106
      $region42: #{conv_res_block_forward.2} parent=39 // pred_check_branch
        %357 = sbr.rel (%p355) target = $region44
      $region43: #{conv_res_block_forward.2} parent=39 // pred_region
        %p358 = scmp.lt.s32.totalorder %s15, 1
        %s359 = scalar_select %p358, %s15, 1
        %s360 = smul.addr %s359, 8
        %s361 = smul.addr %s360, 8
        %s362 = scalar_lea.vmem %s3, %s361
      $region44: #{conv_res_block_forward.2} parent=39 // pred_fallthru
        _
    $region40: #{conv_res_block_forward.2} parent=5 // pred_fallthru
      _
  $region6: #{conv_res_block_forward.2} parent=0 // loop_footer
    %s13 = sadd.s32 1, %s9
  $region7: #{conv_res_block_forward.2} parent=0 // loop_footer_branch
    %8 = sbr.rel target = $region3
  $region8: #{conv_res_block_forward.2} parent=0 // loop_exit
    _

// kernel: conv_res_block_forward.3
$region0: #{conv_res_block_forward.3}
  #allocation0 [shape = 'u32[]', space=smem, size = 0x4, offset = 0x4, fixed_abs, tag = 'smem constant byte address 0x4 - core index']
  #allocation1 [shape = 'u32[144,128]{1,0:T(1,128)}', space=vmem, size = 0x12000, scoped, tag = 'internal scratch']
  #allocation2 [shape = 'f32[10,10,32]{2,1,0:T(8,128)}', space=vmem, size = 0x14000, scoped, tag = 'scratch operand']
  #allocation3 [shape = 'f32[10,10,32]{2,1,0:T(8,128)}', space=vmem, size = 0x14000, scoped, tag = 'scratch operand']
  #allocation4 [shape = 'bf16[8,8,96]{2,1,0:T(8,128)(2,1)}', space=vmem, size = 0x4000, scoped, tag = 'scratch operand']
  %s0 = inlined_call_operand.vmem [shape: f32[2,8,8,32], index: 0, kind: input, shape index: {}]
  %s1 = inlined_call_operand.vmem [shape: bf16[2,3,96,32], index: 1, kind: input, shape index: {}]
  %s2 = inlined_call_operand.vmem [shape: f32[2,1,32], index: 2, kind: input, shape index: {}]
  %s3 = inlined_call_operand.vmem [shape: bf16[2,3,96,32], index: 3, kind: input, shape index: {}]
  %s4 = inlined_call_operand.vmem [shape: f32[2,1,32], index: 4, kind: input, shape index: {}]
  %s5 = inlined_call_operand.hbm [shape: f32[2,8,8,32], index: 5, kind: output, shape index: {}]
  %s6 = sld [smem:[#allocation0]]
  $region61: #{conv_res_block_forward.3} parent=0
    _
  %s8 = ssub.s32 1, %s6
  %s9 = scalar_select 0, %s8, %s6
  $region1: #{conv_res_block_forward.3} parent=0
    #allocation5 [shape = 'u8[65536]{0}', space=vmem, size = 0x10000, scoped, tag = 'output window, operand 0']
    #allocation6 [shape = 's32[2]{0}', space=sflag, size = 0x8, scoped, tag = 'scoped memory for conv_res_block_forward.3']
    %10 = vsyncpa [#allocation6], 0
    %s11 = scalar_lea.sflag [#allocation6], 1
    %12 = vsyncpa %s11, 0
    loop: start=0, step=1, limit=6
    $region2: #{conv_res_block_forward.3} parent=1 // loop_pre_header
      _
    $region3: #{conv_res_block_forward.3} parent=1 // loop_header
      %s14 = sphi 0, %s18
      %p15 = scmp.ge.s32.totalorder %s14, 6
      %s21 = sphi 0, %s33
      %s22 = sphi 0, %s29
      %s23 = sphi 0, %s21
      %s24 = sphi 0, %s22
      %s25 = sphi 0, %s23
      %s26 = sphi 0, %s24
      %s36 = sphi 0, %s38
      %s39 = sphi 0, %s36
      %s40 = sphi 0, %s39
      %s56 = sphi 0, %s40
      %s62 = sphi 0, %s64
      %s65 = sphi 0, %s62
      %s66 = sphi 0, %s65
      %s82 = sphi 0, %s66
      %s88 = sphi 0, %s90
      %s91 = sphi 0, %s88
      %s92 = sphi 0, %s91
      %s108 = sphi 0, %s92
      %s114 = sphi 0, %s116
      %s117 = sphi 0, %s114
      %s118 = sphi 0, %s117
      %s134 = sphi 0, %s118
      %s140 = sphi 0, %s142
      %s143 = sphi 0, %s140
      %s144 = sphi 0, %s143
      %s160 = sphi 0, %s144
      %s166 = sphi 0, %s168
      %s169 = sphi 0, %s166
      %s170 = sphi 0, %s169
      %s186 = sphi 0, %s170
    $region4: #{conv_res_block_forward.3} parent=1 // loop_header_branch
      %17 = sbr.rel (%p15) target = $region8
    $region5: #{conv_res_block_forward.3} parent=1 // loop_body
      %s19 = ssub.s32 %s14, 1
      %s20 = ssub.s32 %s14, 2
      %s27 = sadd.s32 1, %s22
      %p28 = scmp.ge.s32.totalorder %s27, 2
      %s29 = scalar_select %p28, 0, %s27
      %s30 = sadd.s32 1, %s21
      %s31 = scalar_select %p28, %s30, %s21
      %p32 = scmp.ge.s32.totalorder %s31, 2
      %s33 = scalar_select %p32, 0, %s31
      %s34 = ssub.s32 %s21, %s33
      %p35 = scmp.eq.s32.totalorder %s34, 0
      %s37 = sadd.s32 %s36, 1
      %s38 = scalar_select %p35, %s36, %s37
      %p41 = pneg %p35
      %p42 = scmp.eq.s32.totalorder %s14, 3
      %p43 = por %p41, %p42
      %p44 = scmp.ne.s32.totalorder %s36, %s39
      %p45 = scmp.eq.s32.totalorder %s14, 0
      %p46 = por %p44, %p45
      %p47 = scmp.ne.s32.totalorder %s36, %s39
      %p48 = scmp.eq.s32.totalorder %s19, 3
      %p49 = por %p47, %p48
      %p50 = scmp.ne.s32.totalorder %s39, %s40
      %p51 = scmp.eq.s32.totalorder %s19, 0
      %p52 = por %p50, %p51
      %p53 = scmp.ne.s32.totalorder %s39, %s40
      %p54 = scmp.eq.s32.totalorder %s20, 3
      %p55 = por %p53, %p54
      %p57 = scmp.ne.s32.totalorder %s40, %s56
      %p58 = scmp.eq.s32.totalorder %s20, 0
      %p59 = por %p57, %p58
      %s60 = ssub.s32 %s22, %s29
      %p61 = scmp.eq.s32.totalorder %s60, 0
      %s63 = sadd.s32 %s62, 1
      %s64 = scalar_select %p61, %s62, %s63
      %p67 = pneg %p61
      %p68 = scmp.eq.s32.totalorder %s14, 3
      %p69 = por %p67, %p68
      %p70 = scmp.ne.s32.totalorder %s62, %s65
      %p71 = scmp.eq.s32.totalorder %s14, 0
      %p72 = por %p70, %p71
      %p73 = scmp.ne.s32.totalorder %s62, %s65
      %p74 = scmp.eq.s32.totalorder %s19, 3
      %p75 = por %p73, %p74
      %p76 = scmp.ne.s32.totalorder %s65, %s66
      %p77 = scmp.eq.s32.totalorder %s19, 0
      %p78 = por %p76, %p77
      %p79 = scmp.ne.s32.totalorder %s65, %s66
      %p80 = scmp.eq.s32.totalorder %s20, 3
      %p81 = por %p79, %p80
      %p83 = scmp.ne.s32.totalorder %s66, %s82
      %p84 = scmp.eq.s32.totalorder %s20, 0
      %p85 = por %p83, %p84
      %s86 = ssub.s32 %s22, %s29
      %p87 = scmp.eq.s32.totalorder %s86, 0
      %s89 = sadd.s32 %s88, 1
      %s90 = scalar_select %p87, %s88, %s89
      %p93 = pneg %p87
      %p94 = scmp.eq.s32.totalorder %s14, 3
      %p95 = por %p93, %p94
      %p96 = scmp.ne.s32.totalorder %s88, %s91
      %p97 = scmp.eq.s32.totalorder %s14, 0
      %p98 = por %p96, %p97
      %p99 = scmp.ne.s32.totalorder %s88, %s91
      %p100 = scmp.eq.s32.totalorder %s19, 3
      %p101 = por %p99, %p100
      %p102 = scmp.ne.s32.totalorder %s91, %s92
      %p103 = scmp.eq.s32.totalorder %s19, 0
      %p104 = por %p102, %p103
      %p105 = scmp.ne.s32.totalorder %s91, %s92
      %p106 = scmp.eq.s32.totalorder %s20, 3
      %p107 = por %p105, %p106
      %p109 = scmp.ne.s32.totalorder %s92, %s108
      %p110 = scmp.eq.s32.totalorder %s20, 0
      %p111 = por %p109, %p110
      %s112 = ssub.s32 %s22, %s29
      %p113 = scmp.eq.s32.totalorder %s112, 0
      %s115 = sadd.s32 %s114, 1
      %s116 = scalar_select %p113, %s114, %s115
      %p119 = pneg %p113
      %p120 = scmp.eq.s32.totalorder %s14, 3
      %p121 = por %p119, %p120
      %p122 = scmp.ne.s32.totalorder %s114, %s117
      %p123 = scmp.eq.s32.totalorder %s14, 0
      %p124 = por %p122, %p123
      %p125 = scmp.ne.s32.totalorder %s114, %s117
      %p126 = scmp.eq.s32.totalorder %s19, 3
      %p127 = por %p125, %p126
      %p128 = scmp.ne.s32.totalorder %s117, %s118
      %p129 = scmp.eq.s32.totalorder %s19, 0
      %p130 = por %p128, %p129
      %p131 = scmp.ne.s32.totalorder %s117, %s118
      %p132 = scmp.eq.s32.totalorder %s20, 3
      %p133 = por %p131, %p132
      %p135 = scmp.ne.s32.totalorder %s118, %s134
      %p136 = scmp.eq.s32.totalorder %s20, 0
      %p137 = por %p135, %p136
      %s138 = ssub.s32 %s22, %s29
      %p139 = scmp.eq.s32.totalorder %s138, 0
      %s141 = sadd.s32 %s140, 1
      %s142 = scalar_select %p139, %s140, %s141
      %p145 = pneg %p139
      %p146 = scmp.eq.s32.totalorder %s14, 3
      %p147 = por %p145, %p146
      %p148 = scmp.ne.s32.totalorder %s140, %s143
      %p149 = scmp.eq.s32.totalorder %s14, 0
      %p150 = por %p148, %p149
      %p151 = scmp.ne.s32.totalorder %s140, %s143
      %p152 = scmp.eq.s32.totalorder %s19, 3
      %p153 = por %p151, %p152
      %p154 = scmp.ne.s32.totalorder %s143, %s144
      %p155 = scmp.eq.s32.totalorder %s19, 0
      %p156 = por %p154, %p155
      %p157 = scmp.ne.s32.totalorder %s143, %s144
      %p158 = scmp.eq.s32.totalorder %s20, 3
      %p159 = por %p157, %p158
      %p161 = scmp.ne.s32.totalorder %s144, %s160
      %p162 = scmp.eq.s32.totalorder %s20, 0
      %p163 = por %p161, %p162
      %s164 = ssub.s32 %s21, %s33
      %p165 = scmp.eq.s32.totalorder %s164, 0
      %s167 = sadd.s32 %s166, 1
      %s168 = scalar_select %p165, %s166, %s167
      %p171 = pneg %p165
      %p172 = scmp.eq.s32.totalorder %s14, 3
      %p173 = por %p171, %p172
      %p174 = scmp.ne.s32.totalorder %s166, %s169
      %p175 = scmp.eq.s32.totalorder %s14, 0
      %p176 = por %p174, %p175
      %p177 = scmp.ne.s32.totalorder %s166, %s169
      %p178 = scmp.eq.s32.totalorder %s19, 3
      %p179 = por %p177, %p178
      %p180 = scmp.ne.s32.totalorder %s169, %s170
      %p181 = scmp.eq.s32.totalorder %s19, 0
      %p182 = por %p180, %p181
      %p183 = scmp.ne.s32.totalorder %s169, %s170
      %p184 = scmp.eq.s32.totalorder %s20, 3
      %p185 = por %p183, %p184
      %p187 = scmp.ne.s32.totalorder %s170, %s186
      %p188 = scmp.eq.s32.totalorder %s20, 0
      %p189 = por %p187, %p188
      %p190 = scmp.le.s32.totalorder 1, %s14
      %p191 = scmp.lt.s32.totalorder %s14, 5
      %p192 = pnand %p190, %p191
      %p193 = pneg %p192
      // Predicated region
      $region9: #{conv_res_block_forward.3} parent=5 // pred_check
        _
      $region10: #{conv_res_block_forward.3} parent=5 // pred_check_branch
        %195 = sbr.rel (%p192) target = $region12
      $region11: #{conv_res_block_forward.3} parent=5 // pred_region
        %s196 = ssub.s32 %s14, 1
      $region12: #{conv_res_block_forward.3} parent=5 // pred_fallthru
        _
      %p197 = scmp.lt.s32.totalorder %s14, 4
      // Predicated region
      $region13: #{conv_res_block_forward.3} parent=5 // pred_check
        %p198 = pneg %p197
      $region14: #{conv_res_block_forward.3} parent=5 // pred_check_branch
        %200 = sbr.rel (%p198) target = $region16
      $region15: #{conv_res_block_forward.3} parent=5 // pred_region
        // Predicated region
        $region17: #{conv_res_block_forward.3} parent=15 // pred_check
          %p201 = pneg %p46
        $region18: #{conv_res_block_forward.3} parent=15 // pred_check_branch
          %203 = sbr.rel (%p201) target = $region20
        $region19: #{conv_res_block_forward.3} parent=15 // pred_region
          %p204 = scmp.lt.s32.totalorder %s21, 1
          %s205 = scalar_select %p204, %s21, 1
          %s206 = smul.addr %s205, 8
          %s207 = smul.addr %s206, 8
          %s208 = scalar_lea.vmem %s0, %s207
        $region20: #{conv_res_block_forward.3} parent=15 // pred_fallthru
          _
        // Predicated region
        $region21: #{conv_res_block_forward.3} parent=15 // pred_check
          %p209 = pneg %p72
        $region22: #{conv_res_block_forward.3} parent=15 // pred_check_branch
          %211 = sbr.rel (%p209) target = $region24
        $region23: #{conv_res_block_forward.3} parent=15 // pred_region
          %p212 = scmp.lt.s32.totalorder %s22, 1
          %s213 = scalar_select %p212, %s22, 1
          %s214 = smul.addr %s213, 36
          %s215 = smul.addr %s214, 4
          %s216 = scalar_lea.vmem %s1, %s215
        $region24: #{conv_res_block_forward.3} parent=15 // pred_fallthru
          _
        // Predicated region
        $region25: #{conv_res_block_forward.3} parent=15 // pred_check
          %p217 = pneg %p98
        $region26: #{conv_res_block_forward.3} parent=15 // pred_check_branch
          %219 = sbr.rel (%p217) target = $region28
        $region27: #{conv_res_block_forward.3} parent=15 // pred_region
          %p220 = scmp.lt.s32.totalorder %s22, 1
          %s221 = scalar_select %p220, %s22, 1
          %s222 = scalar_lea.vmem %s2, %s221
        $region28: #{conv_res_block_forward.3} parent=15 // pred_fallthru
          _
        // Predicated region
        $region29: #{conv_res_block_forward.3} parent=15 // pred_check
          %p223 = pneg %p124
        $region30: #{conv_res_block_forward.3} parent=15 // pred_check_branch
          %225 = sbr.rel (%p223) target = $region32
        $region31: #{conv_res_block_forward.3} parent=15 // pred_region
          %p226 = scmp.lt.s32.totalorder %s22, 1
          %s227 = scalar_select %p226, %s22, 1
          %s228 = smul.addr %s227, 36
          %s229 = smul.addr %s228, 4
          %s230 = scalar_lea.vmem %s3, %s229
        $region32: #{conv_res_block_forward.3} parent=15 // pred_fallthru
          _
        // Predicated region
        $region33: #{conv_res_block_forward.3} parent=15 // pred_check
          %p231 = pneg %p150
        $region34: #{conv_res_block_forward.3} parent=15 // pred_check_branch
          %233 = sbr.rel (%p231) target = $region36
        $region35: #{conv_res_block_forward.3} parent=15 // pred_region
          %p234 = scmp.lt.s32.totalorder %s22, 1
          %s235 = scalar_select %p234, %s22, 1
          %s236 = scalar_lea.vmem %s4, %s235
        $region36: #{conv_res_block_forward.3} parent=15 // pred_fallthru
          _
      $region16: #{conv_res_block_forward.3} parent=5 // pred_fallthru
        _
      %p237 = scmp.le.s32.totalorder 1, %s14
      %p238 = scmp.lt.s32.totalorder %s14, 5
      %p239 = pnand %p237, %p238
      %p240 = pneg %p239
      // Predicated region
      $region37: #{conv_res_block_forward.3} parent=5 // pred_check
        _
      $region38: #{conv_res_block_forward.3} parent=5 // pred_check_branch
        %242 = sbr.rel (%p239) target = $region40
      $region39: #{conv_res_block_forward.3} parent=5 // pred_region
        %s243 = ssub.s32 %s14, 1
        %p244 = scmp.lt.s32.totalorder %s23, 1
        %s245 = scalar_select %p244, %s23, 1
        %s246 = smul.addr %s245, 8
        %s247 = smul.addr %s246, 8
        %s248 = scalar_lea.vmem %s0, %s247
        %p249 = pneg %p52
        %p250 = pneg %p49
        %p251 = scmp.lt.s32.totalorder %s24, 1
        %s252 = scalar_select %p251, %s24, 1
        %s253 = smul.addr %s252, 36
        %s254 = smul.addr %s253, 4
        %s255 = scalar_lea.vmem %s1, %s254
        %p256 = pneg %p78
        %p257 = pneg %p75
        %p258 = scmp.lt.s32.totalorder %s24, 1
        %s259 = scalar_select %p258, %s24, 1
        %s260 = scalar_lea.vmem %s2, %s259
        %p261 = pneg %p104
        %p262 = pneg %p101
        %p263 = scmp.lt.s32.totalorder %s24, 1
        %s264 = scalar_select %p263, %s24, 1
        %s265 = smul.addr %s264, 36
        %s266 = smul.addr %s265, 4
        %s267 = scalar_lea.vmem %s3, %s266
        %p268 = pneg %p130
        %p269 = pneg %p127
        %p270 = scmp.lt.s32.totalorder %s24, 1
        %s271 = scalar_select %p270, %s24, 1
        %s272 = scalar_lea.vmem %s4, %s271
        %p273 = pneg %p156
        %p274 = pneg %p153
        %p275 = pneg %p182
        %p276 = pneg %p179
        %s277 = sand.u32 %s169, 1
        %s278 = scalar_lea.sflag [#allocation6], %s277
        %s279 = sand.u32 %s169, 1
        %s280 = smul.addr %s279, 64
        %s281 = scalar_lea.vmem [#allocation5], %s280
        %p282 = scmp.lt.s32.totalorder %s23, 1
        %s283 = scalar_select %p282, %s23, 1
        %s284 = smul.addr %s283, 8
        %s285 = smul.addr %s284, 8
        %s286 = scalar_lea.vmem %s0, %s285
        %p287 = scmp.lt.s32.totalorder %s24, 1
        %s288 = scalar_select %p287, %s24, 1
        %s289 = smul.addr %s288, 36
        %s290 = smul.addr %s289, 4
        %s291 = scalar_lea.vmem %s1, %s290
        %p292 = scmp.lt.s32.totalorder %s24, 1
        %s293 = scalar_select %p292, %s24, 1
        %s294 = scalar_lea.vmem %s2, %s293
        %p295 = scmp.lt.s32.totalorder %s24, 1
        %s296 = scalar_select %p295, %s24, 1
        %s297 = smul.addr %s296, 36
        %s298 = smul.addr %s297, 4
        %s299 = scalar_lea.vmem %s3, %s298
        %p300 = scmp.lt.s32.totalorder %s24, 1
        %s301 = scalar_select %p300, %s24, 1
        %s302 = scalar_lea.vmem %s4, %s301
        %vm304 = vcmask 261120
        %305 = vst.msk [vmem:[#allocation2] sm:$0xff] %vm304, 0.0
        %vm306 = vcmask 254976
        %307 = vst.msk [vmem:[#allocation2 + $0x8] sm:$0x3] %vm306, 0.0
        %s308 = scalar_lea.vmem [#allocation2], 144
        %309 = vst.msk [vmem:[%s308] sm:$0xff] %vm304, 0.0
        %310 = vst.msk [vmem:[%s308 + $0x8] sm:$0x3] %vm306, 0.0
        %vm311 = vcmask 253952
        %312 = vst.msk [vmem:[#allocation2] sm:$0x1] %vm311, 0.0
        %313 = vst.msk [vmem:[#allocation2 + $0x10] sm:$0x1] %vm311, 0.0
        %314 = vst.msk [vmem:[#allocation2 + $0x20] sm:$0x1] %vm311, 0.0
        %315 = vst.msk [vmem:[#allocation2 + $0x30] sm:$0x1] %vm311, 0.0
        %316 = vst.msk [vmem:[#allocation2 + $0x40] sm:$0x1] %vm311, 0.0
        %317 = vst.msk [vmem:[#allocation2 + $0x50] sm:$0x1] %vm311, 0.0
        %318 = vst.msk [vmem:[#allocation2 + $0x60] sm:$0x1] %vm311, 0.0
        %319 = vst.msk [vmem:[#allocation2 + $0x70] sm:$0x1] %vm311, 0.0
        %320 = vst.msk [vmem:[#allocation2 + $0x80] sm:$0x1] %vm311, 0.0
        %321 = vst.msk [vmem:[#allocation2 + $0x90] sm:$0x1] %vm311, 0.0
        %322 = vst.msk [vmem:[#allocation2 + $0x9] sm:$0x1] %vm311, 0.0
        %323 = vst.msk [vmem:[#allocation2 + $0x19] sm:$0x1] %vm311, 0.0
        %324 = vst.msk [vmem:[#allocation2 + $0x29] sm:$0x1] %vm311, 0.0
        %325 = vst.msk [vmem:[#allocation2 + $0x39] sm:$0x1] %vm311, 0.0
        %326 = vst.msk [vmem:[#allocation2 + $0x49] sm:$0x1] %vm311, 0.0
        %327 = vst.msk [vmem:[#allocation2 + $0x59] sm:$0x1] %vm311, 0.0
        %328 = vst.msk [vmem:[#allocation2 + $0x69] sm:$0x1] %vm311, 0.0
        %329 = vst.msk [vmem:[#allocation2 + $0x79] sm:$0x1] %vm311, 0.0
        %330 = vst.msk [vmem:[#allocation2 + $0x89] sm:$0x1] %vm311, 0.0
        %331 = vst.msk [vmem:[#allocation2 + $0x99] sm:$0x1] %vm311, 0.0
        %332 = vst.msk [vmem:[#allocation3] sm:$0xff] %vm304, 0.0
        %333 = vst.msk [vmem:[#allocation3 + $0x8] sm:$0x3] %vm306, 0.0
        %s334 = scalar_lea.vmem [#allocation3], 144
        %335 = vst.msk [vmem:[%s334] sm:$0xff] %vm304, 0.0
        %336 = vst.msk [vmem:[%s334 + $0x8] sm:$0x3] %vm306, 0.0
        %337 = vst.msk [vmem:[#allocation3] sm:$0x1] %vm311, 0.0
        %338 = vst.msk [vmem:[#allocation3 + $0x10] sm:$0x1] %vm311, 0.0
        %339 = vst.msk [vmem:[#allocation3 + $0x20] sm:$0x1] %vm311, 0.0
        %340 = vst.msk [vmem:[#allocation3 + $0x30] sm:$0x1] %vm311, 0.0
        %341 = vst.msk [vmem:[#allocation3 + $0x40] sm:$0x1] %vm311, 0.0
        %342 = vst.msk [vmem:[#allocation3 + $0x50] sm:$0x1] %vm311, 0.0
        %343 = vst.msk [vmem:[#allocation3 + $0x60] sm:$0x1] %vm311, 0.0
        %344 = vst.msk [vmem:[#allocation3 + $0x70] sm:$0x1] %vm311, 0.0
        %345 = vst.msk [vmem:[#allocation3 + $0x80] sm:$0x1] %vm311, 0.0
        %346 = vst.msk [vmem:[#allocation3 + $0x90] sm:$0x1] %vm311, 0.0
        %347 = vst.msk [vmem:[#allocation3 + $0x9] sm:$0x1] %vm311, 0.0
        %348 = vst.msk [vmem:[#allocation3 + $0x19] sm:$0x1] %vm311, 0.0
        %349 = vst.msk [vmem:[#allocation3 + $0x29] sm:$0x1] %vm311, 0.0
        %350 = vst.msk [vmem:[#allocation3 + $0x39] sm:$0x1] %vm311, 0.0
        %351 = vst.msk [vmem:[#allocation3 + $0x49] sm:$0x1] %vm311, 0.0
        %352 = vst.msk [vmem:[#allocation3 + $0x59] sm:$0x1] %vm311, 0.0
        %353 = vst.msk [vmem:[#allocation3 + $0x69] sm:$0x1] %vm311, 0.0
        %354 = vst.msk [vmem:[#allocation3 + $0x79] sm:$0x1] %vm311, 0.0
        %355 = vst.msk [vmem:[#allocation3 + $0x89] sm:$0x1] %vm311, 0.0
        %356 = vst.msk [vmem:[#allocation3 + $0x99] sm:$0x1] %vm311, 0.0
        %p357 = scmp.eq.s32.totalorder %s24, 0
        // Predicated region
        $region41: #{conv_res_block_forward.3} parent=39 // pred_check
          %p358 = pneg %p357
        $region42: #{conv_res_block_forward.3} parent=39 // pred_check_branch
          %360 = sbr.rel (%p358) target = $region44
        $region43: #{conv_res_block_forward.3} parent=39 // pred_region
          %v361 = vld [vmem:[%s286] sm:$0xff]
          %v362 = vld [vmem:[%s286 + $0x8] sm:$0xff]
          %v363 = vld [vmem:[%s286 + $0x10] sm:$0xff]
          %v364 = vld [vmem:[%s286 + $0x18] sm:$0xff]
          %v365 = vld [vmem:[%s286 + $0x20] sm:$0xff]
          %v366 = vld [vmem:[%s286 + $0x28] sm:$0xff]
          %v367 = vld [vmem:[%s286 + $0x30] sm:$0xff]
          %v368 = vld [vmem:[%s286 + $0x38] sm:$0xff]
          %s369 = scalar_lea.vmem [#allocation2], 16
          %370 = vst.msk [vmem:[%s369 + $0x1] sm:$0xff] %vm304, %v361
          %371 = vst.msk [vmem:[%s369 + $0x11] sm:$0xff] %vm304, %v362
          %372 = vst.msk [vmem:[%s369 + $0x21] sm:$0xff] %vm304, %v363
          %373 = vst.msk [vmem:[%s369 + $0x31] sm:$0xff] %vm304, %v364
          %374 = vst.msk [vmem:[%s369 + $0x41] sm:$0xff] %vm304, %v365
          %375 = vst.msk [vmem:[%s369 + $0x51] sm:$0xff] %vm304, %v366
          %376 = vst.msk [vmem:[%s369 + $0x61] sm:$0xff] %vm304, %v367
          %377 = vst.msk [vmem:[%s369 + $0x71] sm:$0xff] %vm304, %v368
        $region44: #{conv_res_block_forward.3} parent=39 // pred_fallthru
          _
        %v378 = vld [vmem:[#allocation2] sm:$0xff]
        %v379 = vld [vmem:[#allocation2 + $0x10] sm:$0xff]
        %v380 = vld [vmem:[#allocation2 + $0x20] sm:$0xff]
        %v381 = vld [vmem:[#allocation2 + $0x30] sm:$0xff]
        %v382 = vld [vmem:[#allocation2 + $0x40] sm:$0xff]
        %v383 = vld [vmem:[#allocation2 + $0x50] sm:$0xff]
        %v384 = vld [vmem:[#allocation2 + $0x60] sm:$0xff]
        %v385 = vld [vmem:[#allocation2 + $0x70] sm:$0xff]
        %v386 = vpack.c.bf16 %v378, %v378
        %v387 = vpack.c.bf16 %v379, %v379
        %v388 = vpack.c.bf16 %v380, %v380
        %v389 = vpack.c.bf16 %v381, %v381
        %v390 = vpack.c.bf16 %v382, %v382
        %v391 = vpack.c.bf16 %v383, %v383
        %v392 = vpack.c.bf16 %v384, %v384
        %v393 = vpack.c.bf16 %v385, %v385
        %vm394 = vcmask 257024
        %395 = vst.msk [vmem:[#allocation4] sm:$0xf] %vm394, %v386
        %396 = vst.msk [vmem:[#allocation4 + $0x4] sm:$0xf] %vm394, %v387
        %397 = vst.msk [vmem:[#allocation4 + $0x8] sm:$0xf] %vm394, %v388
        %398 = vst.msk [vmem:[#allocation4 + $0xc] sm:$0xf] %vm394, %v389
        %399 = vst.msk [vmem:[#allocation4 + $0x10] sm:$0xf] %vm394, %v390
        %400 = vst.msk [vmem:[#allocation4 + $0x14] sm:$0xf] %vm394, %v391
        %401 = vst.msk [vmem:[#allocation4 + $0x18] sm:$0xf] %vm394, %v392
        %402 = vst.msk [vmem:[#allocation4 + $0x1c] sm:$0xf] %vm394, %v393
        %v403 = vld [vmem:[#allocation2 + $0x1] sm:$0xff]
        %v404 = vld [vmem:[#allocation2 + $0x11] sm:$0xff]
        %v405 = vld [vmem:[#allocation2 + $0x21] sm:$0xff]
        %v406 = vld [vmem:[#allocation2 + $0x31] sm:$0xff]
        %v407 = vld [vmem:[#allocation2 + $0x41] sm:$0xff]
        %v408 = vld [vmem:[#allocation2 + $0x51] sm:$0xff]
        %v409 = vld [vmem:[#allocation2 + $0x61] sm:$0xff]
        %v410 = vld [vmem:[#allocation2 + $0x71] sm:$0xff]
        %v411 = vpack.c.bf16 %v403, %v403
        %v412 = vpack.c.bf16 %v404, %v404
        %v413 = vpack.c.bf16 %v405, %v405
        %v414 = vpack.c.bf16 %v406, %v406
        %v415 = vpack.c.bf16 %v407, %v407
        %v416 = vpack.c.bf16 %v408, %v408
        %v417 = vpack.c.bf16 %v409, %v409
        %v418 = vpack.c.bf16 %v410, %v410
        %v427 = vunpack.c.l.b16 %v411
        %v428 = vunpack.c.l.b16 %v412
        %v429 = vunpack.c.l.b16 %v413
        %v430 = vunpack.c.l.b16 %v414
        %v431 = vunpack.c.l.b16 %v415
        %v432 = vunpack.c.l.b16 %v416
        %v433 = vunpack.c.l.b16 %v417
        %v434 = vunpack.c.l.b16 %v418
        %v435 = vpack.c.b16 %v427, %v427
        %v436 = vpack.c.b16 %v428, %v428
        %v437 = vpack.c.b16 %v429, %v429
        %v438 = vpack.c.b16 %v430, %v430
        %v439 = vpack.c.b16 %v431, %v431
        %v440 = vpack.c.b16 %v432, %v432
        %v441 = vpack.c.b16 %v433, %v433
        %v442 = vpack.c.b16 %v434, %v434
        %443 = vrot.lane.b32.xlu0 %v435, 32
        %v444 = vpop.permute.xlu0 %443
        %445 = vrot.lane.b32.xlu0 %v436, 32
        %v446 = vpop.permute.xlu0 %445
        %447 = vrot.lane.b32.xlu0 %v437, 32
        %v448 = vpop.permute.xlu0 %447
        %449 = vrot.lane.b32.xlu0 %v438, 32
        %v450 = vpop.permute.xlu0 %449
        %451 = vrot.lane.b32.xlu0 %v439, 32
        %v452 = vpop.permute.xlu0 %451
        %453 = vrot.lane.b32.xlu0 %v440, 32
        %v454 = vpop.permute.xlu0 %453
        %455 = vrot.lane.b32.xlu0 %v441, 32
        %v456 = vpop.permute.xlu0 %455
        %457 = vrot.lane.b32.xlu0 %v442, 32
        %v458 = vpop.permute.xlu0 %457
        %vm467 = vcmask 519424
        %468 = vst.msk [vmem:[#allocation4] sm:$0xf] %vm467, %v444
        %469 = vst.msk [vmem:[#allocation4 + $0x4] sm:$0xf] %vm467, %v446
        %470 = vst.msk [vmem:[#allocation4 + $0x8] sm:$0xf] %vm467, %v448
        %471 = vst.msk [vmem:[#allocation4 + $0xc] sm:$0xf] %vm467, %v450
        %472 = vst.msk [vmem:[#allocation4 + $0x10] sm:$0xf] %vm467, %v452
        %473 = vst.msk [vmem:[#allocation4 + $0x14] sm:$0xf] %vm467, %v454
        %474 = vst.msk [vmem:[#allocation4 + $0x18] sm:$0xf] %vm467, %v456
        %475 = vst.msk [vmem:[#allocation4 + $0x1c] sm:$0xf] %vm467, %v458
        %v476 = vld [vmem:[#allocation2 + $0x2] sm:$0xff]
        %v477 = vld [vmem:[#allocation2 + $0x12] sm:$0xff]
        %v478 = vld [vmem:[#allocation2 + $0x22] sm:$0xff]
        %v479 = vld [vmem:[#allocation2 + $0x32] sm:$0xff]
        %v480 = vld [vmem:[#allocation2 + $0x42] sm:$0xff]
        %v481 = vld [vmem:[#allocation2 + $0x52] sm:$0xff]
        %v482 = vld [vmem:[#allocation2 + $0x62] sm:$0xff]
        %v483 = vld [vmem:[#allocation2 + $0x72] sm:$0xff]
        %v484 = vpack.c.bf16 %v476, %v476
        %v485 = vpack.c.bf16 %v477, %v477
        %v486 = vpack.c.bf16 %v478, %v478
        %v487 = vpack.c.bf16 %v479, %v479
        %v488 = vpack.c.bf16 %v480, %v480
        %v489 = vpack.c.bf16 %v481, %v481
        %v490 = vpack.c.bf16 %v482, %v482
        %v491 = vpack.c.bf16 %v483, %v483
        %v500 = vunpack.c.l.b16 %v484
        %v501 = vunpack.c.l.b16 %v485
        %v502 = vunpack.c.l.b16 %v486
        %v503 = vunpack.c.l.b16 %v487
        %v504 = vunpack.c.l.b16 %v488
        %v505 = vunpack.c.l.b16 %v489
        %v506 = vunpack.c.l.b16 %v490
        %v507 = vunpack.c.l.b16 %v491
        %v508 = vpack.c.b16 %v500, %v500
        %v509 = vpack.c.b16 %v501, %v501
        %v510 = vpack.c.b16 %v502, %v502
        %v511 = vpack.c.b16 %v503, %v503
        %v512 = vpack.c.b16 %v504, %v504
        %v513 = vpack.c.b16 %v505, %v505
        %v514 = vpack.c.b16 %v506, %v506
        %v515 = vpack.c.b16 %v507, %v507
        %516 = vrot.lane.b32.xlu0 %v508, 64
        %v517 = vpop.permute.xlu0 %516
        %518 = vrot.lane.b32.xlu0 %v509, 64
        %v519 = vpop.permute.xlu0 %518
        %520 = vrot.lane.b32.xlu0 %v510, 64
        %v521 = vpop.permute.xlu0 %520
        %522 = vrot.lane.b32.xlu0 %v511, 64
        %v523 = vpop.permute.xlu0 %522
        %524 = vrot.lane.b32.xlu0 %v512, 64
        %v525 = vpop.permute.xlu0 %524
        %526 = vrot.lane.b32.xlu0 %v513, 64
        %v527 = vpop.permute.xlu0 %526
        %528 = vrot.lane.b32.xlu0 %v514, 64
        %v529 = vpop.permute.xlu0 %528
        %530 = vrot.lane.b32.xlu0 %v515, 64
        %v531 = vpop.permute.xlu0 %530
        %vm540 = vcmask 781824
        %541 = vst.msk [vmem:[#allocation4] sm:$0xf] %vm540, %v517
        %542 = vst.msk [vmem:[#allocation4 + $0x4] sm:$0xf] %vm540, %v519
        %543 = vst.msk [vmem:[#allocation4 + $0x8] sm:$0xf] %vm540, %v521
        %544 = vst.msk [vmem:[#allocation4 + $0xc] sm:$0xf] %vm540, %v523
        %545 = vst.msk [vmem:[#allocation4 + $0x10] sm:$0xf] %vm540, %v525
        %546 = vst.msk [vmem:[#allocation4 + $0x14] sm:$0xf] %vm540, %v527
        %547 = vst.msk [vmem:[#allocation4 + $0x18] sm:$0xf] %vm540, %v529
        %548 = vst.msk [vmem:[#allocation4 + $0x1c] sm:$0xf] %vm540, %v531
        %v549 = vld [vmem:[#allocation4] sm:$0xf]
        %v550 = vld [vmem:[#allocation4 + $0x4] sm:$0xf]
        %v551 = vld [vmem:[#allocation4 + $0x8] sm:$0xf]
        %v552 = vld [vmem:[#allocation4 + $0xc] sm:$0xf]
        %v553 = vld [vmem:[#allocation4 + $0x10] sm:$0xf]
        %v554 = vld [vmem:[#allocation4 + $0x14] sm:$0xf]
        %v555 = vld [vmem:[#allocation4 + $0x18] sm:$0xf]
        %v556 = vld [vmem:[#allocation4 + $0x1c] sm:$0xf]
        %v557 = vld [vmem:[%s291] sm:$0xf]
        %v558 = vld [vmem:[%s291 + $0x4] sm:$0xf]
        %v559 = vld [vmem:[%s291 + $0x8] sm:$0xf]
        %v560 = vld [vmem:[%s291 + $0xc] sm:$0xf]
        %v561 = vld [vmem:[%s291 + $0x10] sm:$0xf]
        %v562 = vld [vmem:[%s291 + $0x14] sm:$0xf]
        %v563 = vld [vmem:[%s291 + $0x18] sm:$0xf]
        %v564 = vld [vmem:[%s291 + $0x1c] sm:$0xf]
        %v565 = vld [vmem:[%s291 + $0x20] sm:$0xf]
        %v566 = vld [vmem:[%s291 + $0x24] sm:$0xf]
        %v567 = vld [vmem:[%s291 + $0x28] sm:$0xf]
        %v568 = vld [vmem:[%s291 + $0x2c] sm:$0xf]
        %s569 = scalar_lea.vmem [#allocation2], 16
        %v570 = vld [vmem:[%s569] sm:$0xff]
        %v571 = vld [vmem:[%s569 + $0x10] sm:$0xff]
        %v572 = vld [vmem:[%s569 + $0x20] sm:$0xff]
        %v573 = vld [vmem:[%s569 + $0x30] sm:$0xff]
        %v574 = vld [vmem:[%s569 + $0x40] sm:$0xff]
        %v575 = vld [vmem:[%s569 + $0x50] sm:$0xff]
        %v576 = vld [vmem:[%s569 + $0x60] sm:$0xff]
        %v577 = vld [vmem:[%s569 + $0x70] sm:$0xff]
        %v578 = vpack.c.bf16 %v570, %v570
        %v579 = vpack.c.bf16 %v571, %v571
        %v580 = vpack.c.bf16 %v572, %v572
        %v581 = vpack.c.bf16 %v573, %v573
        %v582 = vpack.c.bf16 %v574, %v574
        %v583 = vpack.c.bf16 %v575, %v575
        %v584 = vpack.c.bf16 %v576, %v576
        %v585 = vpack.c.bf16 %v577, %v577
        %586 = vst.msk [vmem:[#allocation4] sm:$0xf] %vm394, %v578
        %587 = vst.msk [vmem:[#allocation4 + $0x4] sm:$0xf] %vm394, %v579
        %588 = vst.msk [vmem:[#allocation4 + $0x8] sm:$0xf] %vm394, %v580
        %589 = vst.msk [vmem:[#allocation4 + $0xc] sm:$0xf] %vm394, %v581
        %590 = vst.msk [vmem:[#allocation4 + $0x10] sm:$0xf] %vm394, %v582
        %591 = vst.msk [vmem:[#allocation4 + $0x14] sm:$0xf] %vm394, %v583
        %592 = vst.msk [vmem:[#allocation4 + $0x18] sm:$0xf] %vm394, %v584
        %593 = vst.msk [vmem:[#allocation4 + $0x1c] sm:$0xf] %vm394, %v585
        %v594 = vld [vmem:[%s569 + $0x1] sm:$0xff]
        %v595 = vld [vmem:[%s569 + $0x11] sm:$0xff]
        %v596 = vld [vmem:[%s569 + $0x21] sm:$0xff]
        %v597 = vld [vmem:[%s569 + $0x31] sm:$0xff]
        %v598 = vld [vmem:[%s569 + $0x41] sm:$0xff]
        %v599 = vld [vmem:[%s569 + $0x51] sm:$0xff]
        %v600 = vld [vmem:[%s569 + $0x61] sm:$0xff]
        %v601 = vld [vmem:[%s569 + $0x71] sm:$0xff]
        %v602 = vpack.c.bf16 %v594, %v594
        %v603 = vpack.c.bf16 %v595, %v595
        %v604 = vpack.c.bf16 %v596, %v596
        %v605 = vpack.c.bf16 %v597, %v597
        %v606 = vpack.c.bf16 %v598, %v598
        %v607 = vpack.c.bf16 %v599, %v599
        %v608 = vpack.c.bf16 %v600, %v600
        %v609 = vpack.c.bf16 %v601, %v601
        %v618 = vunpack.c.l.b16 %v602
        %v619 = vunpack.c.l.b16 %v603
        %v620 = vunpack.c.l.b16 %v604
        %v621 = vunpack.c.l.b16 %v605
        %v622 = vunpack.c.l.b16 %v606
        %v623 = vunpack.c.l.b16 %v607
        %v624 = vunpack.c.l.b16 %v608
        %v625 = vunpack.c.l.b16 %v609
        %v626 = vpack.c.b16 %v618, %v618
        %v627 = vpack.c.b16 %v619, %v619
        %v628 = vpack.c.b16 %v620, %v620
        %v629 = vpack.c.b16 %v621, %v621
        %v630 = vpack.c.b16 %v622, %v622
        %v631 = vpack.c.b16 %v623, %v623
        %v632 = vpack.c.b16 %v624, %v624
        %v633 = vpack.c.b16 %v625, %v625
        %634 = vrot.lane.b32.xlu0 %v626, 32
        %v635 = vpop.permute.xlu0 %634
        %636 = vrot.lane.b32.xlu0 %v627, 32
        %v637 = vpop.permute.xlu0 %636
        %638 = vrot.lane.b32.xlu0 %v628, 32
        %v639 = vpop.permute.xlu0 %638
        %640 = vrot.lane.b32.xlu0 %v629, 32
        %v641 = vpop.permute.xlu0 %640
        %642 = vrot.lane.b32.xlu0 %v630, 32
        %v643 = vpop.permute.xlu0 %642
        %644 = vrot.lane.b32.xlu0 %v631, 32
        %v645 = vpop.permute.xlu0 %644
        %646 = vrot.lane.b32.xlu0 %v632, 32
        %v647 = vpop.permute.xlu0 %646
        %648 = vrot.lane.b32.xlu0 %v633, 32
        %v649 = vpop.permute.xlu0 %648
        %658 = vst.msk [vmem:[#allocation4] sm:$0xf] %vm467, %v635
        %659 = vst.msk [vmem:[#allocation4 + $0x4] sm:$0xf] %vm467, %v637
        %660 = vst.msk [vmem:[#allocation4 + $0x8] sm:$0xf] %vm467, %v639
        %661 = vst.msk [vmem:[#allocation4 + $0xc] sm:$0xf] %vm467, %v641
        %662 = vst.msk [vmem:[#allocation4 + $0x10] sm:$0xf] %vm467, %v643
        %663 = vst.msk [vmem:[#allocation4 + $0x14] sm:$0xf] %vm467, %v645
        %664 = vst.msk [vmem:[#allocation4 + $0x18] sm:$0xf] %vm467, %v647
        %665 = vst.msk [vmem:[#allocation4 + $0x1c] sm:$0xf] %vm467, %v649
        %v666 = vld [vmem:[%s569 + $0x2] sm:$0xff]
        %v667 = vld [vmem:[%s569 + $0x12] sm:$0xff]
        %v668 = vld [vmem:[%s569 + $0x22] sm:$0xff]
        %v669 = vld [vmem:[%s569 + $0x32] sm:$0xff]
        %v670 = vld [vmem:[%s569 + $0x42] sm:$0xff]
        %v671 = vld [vmem:[%s569 + $0x52] sm:$0xff]
        %v672 = vld [vmem:[%s569 + $0x62] sm:$0xff]
        %v673 = vld [vmem:[%s569 + $0x72] sm:$0xff]
        %v674 = vpack.c.bf16 %v666, %v666
        %v675 = vpack.c.bf16 %v667, %v667
        %v676 = vpack.c.bf16 %v668, %v668
        %v677 = vpack.c.bf16 %v669, %v669
        %v678 = vpack.c.bf16 %v670, %v670
        %v679 = vpack.c.bf16 %v671, %v671
        %v680 = vpack.c.bf16 %v672, %v672
        %v681 = vpack.c.bf16 %v673, %v673
        %v690 = vunpack.c.l.b16 %v674
        %v691 = vunpack.c.l.b16 %v675
        %v692 = vunpack.c.l.b16 %v676
        %v693 = vunpack.c.l.b16 %v677
        %v694 = vunpack.c.l.b16 %v678
        %v695 = vunpack.c.l.b16 %v679
        %v696 = vunpack.c.l.b16 %v680
        %v697 = vunpack.c.l.b16 %v681
        %v698 = vpack.c.b16 %v690, %v690
        %v699 = vpack.c.b16 %v691, %v691
        %v700 = vpack.c.b16 %v692, %v692
        %v701 = vpack.c.b16 %v693, %v693
        %v702 = vpack.c.b16 %v694, %v694
        %v703 = vpack.c.b16 %v695, %v695
        %v704 = vpack.c.b16 %v696, %v696
        %v705 = vpack.c.b16 %v697, %v697
        %706 = vrot.lane.b32.xlu0 %v698, 64
        %v707 = vpop.permute.xlu0 %706
        %708 = vrot.lane.b32.xlu0 %v699, 64
        %v709 = vpop.permute.xlu0 %708
        %710 = vrot.lane.b32.xlu0 %v700, 64
        %v711 = vpop.permute.xlu0 %710
        %712 = vrot.lane.b32.xlu0 %v701, 64
        %v713 = vpop.permute.xlu0 %712
        %714 = vrot.lane.b32.xlu0 %v702, 64
        %v715 = vpop.permute.xlu0 %714
        %716 = vrot.lane.b32.xlu0 %v703, 64
        %v717 = vpop.permute.xlu0 %716
        %718 = vrot.lane.b32.xlu0 %v704, 64
        %v719 = vpop.permute.xlu0 %718
        %720 = vrot.lane.b32.xlu0 %v705, 64
        %v721 = vpop.permute.xlu0 %720
        %730 = vst.msk [vmem:[#allocation4] sm:$0xf] %vm540, %v707
        %731 = vst.msk [vmem:[#allocation4 + $0x4] sm:$0xf] %vm540, %v709
        %732 = vst.msk [vmem:[#allocation4 + $0x8] sm:$0xf] %vm540, %v711
        %733 = vst.msk [vmem:[#allocation4 + $0xc] sm:$0xf] %vm540, %v713
        %734 = vst.msk [vmem:[#allocation4 + $0x10] sm:$0xf] %vm540, %v715
        %735 = vst.msk [vmem:[#allocation4 + $0x14] sm:$0xf] %vm540, %v717
        %736 = vst.msk [vmem:[#allocation4 + $0x18] sm:$0xf] %vm540, %v719
        %737 = vst.msk [vmem:[#allocation4 + $0x1c] sm:$0xf] %vm540, %v721
        %v738 = vld [vmem:[#allocation4] sm:$0xf]
        %v739 = vld [vmem:[#allocation4 + $0x4] sm:$0xf]
        %v740 = vld [vmem:[#allocation4 + $0x8] sm:$0xf]
        %v741 = vld [vmem:[#allocation4 + $0xc] sm:$0xf]
        %v742 = vld [vmem:[#allocation4 + $0x10] sm:$0xf]
        %v743 = vld [vmem:[#allocation4 + $0x14] sm:$0xf]
        %v744 = vld [vmem:[#allocation4 + $0x18] sm:$0xf]
        %v745 = vld [vmem:[#allocation4 + $0x1c] sm:$0xf]
        %s746 = scalar_lea.vmem %s291, 48
        %v747 = vld [vmem:[%s746] sm:$0xf]
        %v748 = vld [vmem:[%s746 + $0x4] sm:$0xf]
        %v749 = vld [vmem:[%s746 + $0x8] sm:$0xf]
        %v750 = vld [vmem:[%s746 + $0xc] sm:$0xf]
        %v751 = vld [vmem:[%s746 + $0x10] sm:$0xf]
        %v752 = vld [vmem:[%s746 + $0x14] sm:$0xf]
        %v753 = vld [vmem:[%s746 + $0x18] sm:$0xf]
        %v754 = vld [vmem:[%s746 + $0x1c] sm:$0xf]
        %v755 = vld [vmem:[%s746 + $0x20] sm:$0xf]
        %v756 = vld [vmem:[%s746 + $0x24] sm:$0xf]
        %v757 = vld [vmem:[%s746 + $0x28] sm:$0xf]
        %v758 = vld [vmem:[%s746 + $0x2c] sm:$0xf]
        %v767 = vunpack.c.l.b16 %v738
        %v768 = vunpack.c.l.b16 %v739
        %v769 = vunpack.c.l.b16 %v740
        %v770 = vunpack.c.l.b16 %v741
        %v771 = vunpack.c.l.b16 %v742
        %v772 = vunpack.c.l.b16 %v743
        %v773 = vunpack.c.l.b16 %v744
        %v774 = vunpack.c.l.b16 %v745
        %v775 = vpack.c.b16 %v768, %v767
        %v776 = vpack.c.b16 %v770, %v769
        %v777 = vpack.c.b16 %v772, %v771
        %v778 = vpack.c.b16 %v774, %v773
        %v791 = vunpack.c.l.b16 %v747
        %v792 = vunpack.c.l.b16 %v748
        %v793 = vunpack.c.l.b16 %v749
        %v794 = vunpack.c.l.b16 %v750
        %v795 = vunpack.c.l.b16 %v751
        %v796 = vunpack.c.l.b16 %v752
        %v797 = vunpack.c.l.b16 %v753
        %v798 = vunpack.c.l.b16 %v754
        %v799 = vunpack.c.l.b16 %v755
        %v800 = vunpack.c.l.b16 %v756
        %v801 = vunpack.c.l.b16 %v757
        %v802 = vunpack.c.l.b16 %v758
        %v803 = vpack.c.b16 %v792, %v791
        %v804 = vpack.c.b16 %v794, %v793
        %v805 = vpack.c.b16 %v796, %v795
        %v806 = vpack.c.b16 %v798, %v797
        %v807 = vpack.c.b16 %v800, %v799
        %v808 = vpack.c.b16 %v802, %v801
        %vm815 = vcmask 785408
        %v817 = vsel %vm815, %v775, 0
        %v820 = vsel %vm815, %v776, 0
        %v823 = vsel %vm815, %v777, 0
        %v826 = vsel %vm815, %v778, 0
        %828 = vmatprep.subr.bf16.mxu0 0
        %829 = vmatpush1.bf16.msra.mxu0 %v803
        %830 = vmatprep.subr.bf16.mxu0 0
        %831 = vmatpush1.bf16.msra.mxu0 %v804
        %832 = vmatprep.subr.bf16.mxu0 0
        %833 = vmatpush1.bf16.msra.mxu0 %v805
        %834 = vmatprep.subr.bf16.mxu0 0
        %835 = vmatpush1.bf16.msra.mxu0 %v806
        %836 = vmatprep.subr.bf16.mxu0 0
        %837 = vmatpush1.bf16.msra.mxu0 %v807
        %838 = vmatprep.subr.bf16.mxu0 0
        %839 = vmatpush1.bf16.msra.mxu0 %v808
        %840 = vmatprep.subr.bf16.mxu0 0
        %841 = vmatpush1.bf16.msra.mxu0 0
        %842 = vmatprep.subr.bf16.mxu0 0
        %843 = vmatpush1.bf16.msra.mxu0 0
        %844 = vmatprep.subr.bf16.mxu0 0
        %845 = vmatpush1.bf16.msra.mxu0 0
        %846 = vmatprep.subr.bf16.mxu0 0
        %847 = vmatpush1.bf16.msra.mxu0 0
        %848 = vmatprep.subr.bf16.mxu0 0
        %849 = vmatpush1.bf16.msra.mxu0 0
        %850 = vmatprep.subr.bf16.mxu0 0
        %851 = vmatpush1.bf16.msra.mxu0 0
        %852 = vmatprep.subr.bf16.mxu0 0
        %853 = vmatpush1.bf16.msra.mxu0 0
        %854 = vmatprep.subr.bf16.mxu0 0
        %855 = vmatpush1.bf16.msra.mxu0 0
        %856 = vmatprep.subr.bf16.mxu0 0
        %857 = vmatpush1.bf16.msra.mxu0 0
        %858 = vmatprep.subr.bf16.mxu0 0
        %859 = vmatpush1.bf16.msra.mxu0 0
        %860 = vmatprep.mubr.bf16.mxu0 0
        %861 = vmatmul.mubr.bf16.gmra.mrb[0].mxu0 %v817
        %v862 = vpop.f32.mrb[0].mxu0
        %v863 = vadd.f32 0.0, %v862
        %v864 = vpop.f32.mrb[0].mxu0
        %v865 = vpop.f32.mrb[0].mxu0
        %v866 = vadd.f32 0.0, %v865
        %v867 = vpop.f32.mrb[0].mxu0
        %868 = vmatprep.mubr.bf16.mxu0 0
        %869 = vmatmul.mubr.bf16.gmra.mrb[0].mxu0 %v820
        %v870 = vpop.f32.mrb[0].mxu0
        %v871 = vadd.f32 0.0, %v870
        %v872 = vpop.f32.mrb[0].mxu0
        %v873 = vpop.f32.mrb[0].mxu0
        %v874 = vadd.f32 0.0, %v873
        %v875 = vpop.f32.mrb[0].mxu0
        %876 = vmatprep.mubr.bf16.mxu0 0
        %877 = vmatmul.mubr.bf16.gmra.mrb[0].mxu0 %v823
        %v878 = vpop.f32.mrb[0].mxu0
        %v879 = vadd.f32 0.0, %v878
        %v880 = vpop.f32.mrb[0].mxu0
        %v881 = vpop.f32.mrb[0].mxu0
        %v882 = vadd.f32 0.0, %v881
        %v883 = vpop.f32.mrb[0].mxu0
        %884 = vmatprep.mubr.bf16.mxu0 0
        %885 = vmatmul.mubr.bf16.gmra.mrb[0].mxu0 %v826
        %v886 = vpop.f32.mrb[0].mxu0
        %v887 = vadd.f32 0.0, %v886
        %v888 = vpop.f32.mrb[0].mxu0
        %v889 = vpop.f32.mrb[0].mxu0
        %v890 = vadd.f32 0.0, %v889
        %v891 = vpop.f32.mrb[0].mxu0
        %892 = vdwg.mxu0
        %v901 = vunpack.c.l.b16 %v549
        %v902 = vunpack.c.l.b16 %v550
        %v903 = vunpack.c.l.b16 %v551
        %v904 = vunpack.c.l.b16 %v552
        %v905 = vunpack.c.l.b16 %v553
        %v906 = vunpack.c.l.b16 %v554
        %v907 = vunpack.c.l.b16 %v555
        %v908 = vunpack.c.l.b16 %v556
        %v909 = vpack.c.b16 %v902, %v901
        %v910 = vpack.c.b16 %v904, %v903
        %v911 = vpack.c.b16 %v906, %v905
        %v912 = vpack.c.b16 %v908, %v907
        %v925 = vunpack.c.l.b16 %v557
        %v926 = vunpack.c.l.b16 %v558
        %v927 = vunpack.c.l.b16 %v559
        %v928 = vunpack.c.l.b16 %v560
        %v929 = vunpack.c.l.b16 %v561
        %v930 = vunpack.c.l.b16 %v562
        %v931 = vunpack.c.l.b16 %v563
        %v932 = vunpack.c.l.b16 %v564
        %v933 = vunpack.c.l.b16 %v565
        %v934 = vunpack.c.l.b16 %v566
        %v935 = vunpack.c.l.b16 %v567
        %v936 = vunpack.c.l.b16 %v568
        %v937 = vpack.c.b16 %v926, %v925
        %v938 = vpack.c.b16 %v928, %v927
        %v939 = vpack.c.b16 %v930, %v929
        %v940 = vpack.c.b16 %v932, %v931
        %v941 = vpack.c.b16 %v934, %v933
        %v942 = vpack.c.b16 %v936, %v935
        %v950 = vsel %vm815, %v909, 0
        %v953 = vsel %vm815, %v910, 0
        %v956 = vsel %vm815, %v911, 0
        %v959 = vsel %vm815, %v912, 0
        %961 = vmatprep.subr.bf16.mxu0 0
        %962 = vmatpush1.bf16.msra.mxu0 %v937
        %963 = vmatprep.subr.bf16.mxu0 0
        %964 = vmatpush1.bf16.msra.mxu0 %v938
        %965 = vmatprep.subr.bf16.mxu0 0
        %966 = vmatpush1.bf16.msra.mxu0 %v939
        %967 = vmatprep.subr.bf16.mxu0 0
        %968 = vmatpush1.bf16.msra.mxu0 %v940
        %969 = vmatprep.subr.bf16.mxu0 0
        %970 = vmatpush1.bf16.msra.mxu0 %v941
        %971 = vmatprep.subr.bf16.mxu0 0
        %972 = vmatpush1.bf16.msra.mxu0 %v942
        %973 = vmatprep.subr.bf16.mxu0 0
        %974 = vmatpush1.bf16.msra.mxu0 0
        %975 = vmatprep.subr.bf16.mxu0 0
        %976 = vmatpush1.bf16.msra.mxu0 0
        %977 = vmatprep.subr.bf16.mxu0 0
        %978 = vmatpush1.bf16.msra.mxu0 0
        %979 = vmatprep.subr.bf16.mxu0 0
        %980 = vmatpush1.bf16.msra.mxu0 0
        %981 = vmatprep.subr.bf16.mxu0 0
        %982 = vmatpush1.bf16.msra.mxu0 0
        %983 = vmatprep.subr.bf16.mxu0 0
        %984 = vmatpush1.bf16.msra.mxu0 0
        %985 = vmatprep.subr.bf16.mxu0 0
        %986 = vmatpush1.bf16.msra.mxu0 0
        %987 = vmatprep.subr.bf16.mxu0 0
        %988 = vmatpush1.bf16.msra.mxu0 0
        %989 = vmatprep.subr.bf16.mxu0 0
        %990 = vmatpush1.bf16.msra.mxu0 0
        %991 = vmatprep.subr.bf16.mxu0 0
        %992 = vmatpush1.bf16.msra.mxu0 0
        %993 = vmatprep.mubr.bf16.mxu0 0
        %994 = vmatmul.mubr.bf16.gmra.mrb[0].mxu0 %v950
        %v995 = vpop.f32.mrb[0].mxu0
        %v996 = vadd.f32 %v863, %v995
        %v997 = vpop.f32.mrb[0].mxu0
        %v998 = vpop.f32.mrb[0].mxu0
        %v999 = vadd.f32 %v866, %v998
        %v1000 = vpop.f32.mrb[0].mxu0
        %1001 = vmatprep.mubr.bf16.mxu0 0
        %1002 = vmatmul.mubr.bf16.gmra.mrb[0].mxu0 %v953
        %v1003 = vpop.f32.mrb[0].mxu0
        %v1004 = vadd.f32 %v871, %v1003
        %v1005 = vpop.f32.mrb[0].mxu0
        %v1006 = vpop.f32.mrb[0].mxu0
        %v1007 = vadd.f32 %v874, %v1006
        %v1008 = vpop.f32.mrb[0].mxu0
        %1009 = vmatprep.mubr.bf16.mxu0 0
        %1010 = vmatmul.mubr.bf16.gmra.mrb[0].mxu0 %v956
        %v1011 = vpop.f32.mrb[0].mxu0
        %v1012 = vadd.f32 %v879, %v1011
        %v1013 = vpop.f32.mrb[0].mxu0
        %v1014 = vpop.f32.mrb[0].mxu0
        %v1015 = vadd.f32 %v882, %v1014
        %v1016 = vpop.f32.mrb[0].mxu0
        %1017 = vmatprep.mubr.bf16.mxu0 0
        %1018 = vmatmul.mubr.bf16.gmra.mrb[0].mxu0 %v959
        %v1019 = vpop.f32.mrb[0].mxu0
        %v1020 = vadd.f32 %v887, %v1019
        %v1021 = vpop.f32.mrb[0].mxu0
        %v1022 = vpop.f32.mrb[0].mxu0
        %v1023 = vadd.f32 %v890, %v1022
        %v1024 = vpop.f32.mrb[0].mxu0
        %1025 = vdwg.mxu0
        %s1026 = scalar_lea.vmem [#allocation2], 32
        %v1027 = vld [vmem:[%s1026] sm:$0xff]
        %v1028 = vld [vmem:[%s1026 + $0x10] sm:$0xff]
        %v1029 = vld [vmem:[%s1026 + $0x20] sm:$0xff]
        %v1030 = vld [vmem:[%s1026 + $0x30] sm:$0xff]
        %v1031 = vld [vmem:[%s1026 + $0x40] sm:$0xff]
        %v1032 = vld [vmem:[%s1026 + $0x50] sm:$0xff]
        %v1033 = vld [vmem:[%s1026 + $0x60] sm:$0xff]
        %v1034 = vld [vmem:[%s1026 + $0x70] sm:$0xff]
        %v1035 = vpack.c.bf16 %v1027, %v1027
        %v1036 = vpack.c.bf16 %v1028, %v1028
        %v1037 = vpack.c.bf16 %v1029, %v1029
        %v1038 = vpack.c.bf16 %v1030, %v1030
        %v1039 = vpack.c.bf16 %v1031, %v1031
        %v1040 = vpack.c.bf16 %v1032, %v1032
        %v1041 = vpack.c.bf16 %v1033, %v1033
        %v1042 = vpack.c.bf16 %v1034, %v1034
        %1043 = vst.msk [vmem:[#allocation4] sm:$0xf] %vm394, %v1035
        %1044 = vst.msk [vmem:[#allocation4 + $0x4] sm:$0xf] %vm394, %v1036
        %1045 = vst.msk [vmem:[#allocation4 + $0x8] sm:$0xf] %vm394, %v1037
        %1046 = vst.msk [vmem:[#allocation4 + $0xc] sm:$0xf] %vm394, %v1038
        %1047 = vst.msk [vmem:[#allocation4 + $0x10] sm:$0xf] %vm394, %v1039
        %1048 = vst.msk [vmem:[#allocation4 + $0x14] sm:$0xf] %vm394, %v1040
        %1049 = vst.msk [vmem:[#allocation4 + $0x18] sm:$0xf] %vm394, %v1041
        %1050 = vst.msk [vmem:[#allocation4 + $0x1c] sm:$0xf] %vm394, %v1042
        %v1051 = vld [vmem:[%s1026 + $0x1] sm:$0xff]
        %v1052 = vld [vmem:[%s1026 + $0x11] sm:$0xff]
        %v1053 = vld [vmem:[%s1026 + $0x21] sm:$0xff]
        %v1054 = vld [vmem:[%s1026 + $0x31] sm:$0xff]
        %v1055 = vld [vmem:[%s1026 + $0x41] sm:$0xff]
        %v1056 = vld [vmem:[%s1026 + $0x51] sm:$0xff]
        %v1057 = vld [vmem:[%s1026 + $0x61] sm:$0xff]
        %v1058 = vld [vmem:[%s1026 + $0x71] sm:$0xff]
        %v1059 = vpack.c.bf16 %v1051, %v1051
        %v1060 = vpack.c.bf16 %v1052, %v1052
        %v1061 = vpack.c.bf16 %v1053, %v1053
        %v1062 = vpack.c.bf16 %v1054, %v1054
        %v1063 = vpack.c.bf16 %v1055, %v1055
        %v1064 = vpack.c.bf16 %v1056, %v1056
        %v1065 = vpack.c.bf16 %v1057, %v1057
        %v1066 = vpack.c.bf16 %v1058, %v1058
        %v1075 = vunpack.c.l.b16 %v1059
        %v1076 = vunpack.c.l.b16 %v1060
        %v1077 = vunpack.c.l.b16 %v1061
        %v1078 = vunpack.c.l.b16 %v1062
        %v1079 = vunpack.c.l.b16 %v1063
        %v1080 = vunpack.c.l.b16 %v1064
        %v1081 = vunpack.c.l.b16 %v1065
        %v1082 = vunpack.c.l.b16 %v1066
        %v1083 = vpack.c.b16 %v1075, %v1075
        %v1084 = vpack.c.b16 %v1076, %v1076
        %v1085 = vpack.c.b16 %v1077, %v1077
        %v1086 = vpack.c.b16 %v1078, %v1078
        %v1087 = vpack.c.b16 %v1079, %v1079
        %v1088 = vpack.c.b16 %v1080, %v1080
        %v1089 = vpack.c.b16 %v1081, %v1081
        %v1090 = vpack.c.b16 %v1082, %v1082
        %1091 = vrot.lane.b32.xlu0 %v1083, 32
        %v1092 = vpop.permute.xlu0 %1091
        %1093 = vrot.lane.b32.xlu0 %v1084, 32
        %v1094 = vpop.permute.xlu0 %1093
        %1095 = vrot.lane.b32.xlu0 %v1085, 32
        %v1096 = vpop.permute.xlu0 %1095
        %1097 = vrot.lane.b32.xlu0 %v1086, 32
        %v1098 = vpop.permute.xlu0 %1097
        %1099 = vrot.lane.b32.xlu0 %v1087, 32
        %v1100 = vpop.permute.xlu0 %1099
        %1101 = vrot.lane.b32.xlu0 %v1088, 32
        %v1102 = vpop.permute.xlu0 %1101
        %1103 = vrot.lane.b32.xlu0 %v1089, 32
        %v1104 = vpop.permute.xlu0 %1103
        %1105 = vrot.lane.b32.xlu0 %v1090, 32
        %v1106 = vpop.permute.xlu0 %1105
        %1115 = vst.msk [vmem:[#allocation4] sm:$0xf] %vm467, %v1092
        %1116 = vst.msk [vmem:[#allocation4 + $0x4] sm:$0xf] %vm467, %v1094
        %1117 = vst.msk [vmem:[#allocation4 + $0x8] sm:$0xf] %vm467, %v1096
        %1118 = vst.msk [vmem:[#allocation4 + $0xc] sm:$0xf] %vm467, %v1098
        %1119 = vst.msk [vmem:[#allocation4 + $0x10] sm:$0xf] %vm467, %v1100
        %1120 = vst.msk [vmem:[#allocation4 + $0x14] sm:$0xf] %vm467, %v1102
        %1121 = vst.msk [vmem:[#allocation4 + $0x18] sm:$0xf] %vm467, %v1104
        %1122 = vst.msk [vmem:[#allocation4 + $0x1c] sm:$0xf] %vm467, %v1106
        %v1123 = vld [vmem:[%s1026 + $0x2] sm:$0xff]
        %v1124 = vld [vmem:[%s1026 + $0x12] sm:$0xff]
        %v1125 = vld [vmem:[%s1026 + $0x22] sm:$0xff]
        %v1126 = vld [vmem:[%s1026 + $0x32] sm:$0xff]
        %v1127 = vld [vmem:[%s1026 + $0x42] sm:$0xff]
        %v1128 = vld [vmem:[%s1026 + $0x52] sm:$0xff]
        %v1129 = vld [vmem:[%s1026 + $0x62] sm:$0xff]
        %v1130 = vld [vmem:[%s1026 + $0x72] sm:$0xff]
        %v1131 = vpack.c.bf16 %v1123, %v1123
        %v1132 = vpack.c.bf16 %v1124, %v1124
        %v1133 = vpack.c.bf16 %v1125, %v1125
        %v1134 = vpack.c.bf16 %v1126, %v1126
        %v1135 = vpack.c.bf16 %v1127, %v1127
        %v1136 = vpack.c.bf16 %v1128, %v1128
        %v1137 = vpack.c.bf16 %v1129, %v1129
        %v1138 = vpack.c.bf16 %v1130, %v1130
        %v1147 = vunpack.c.l.b16 %v1131
        %v1148 = vunpack.c.l.b16 %v1132
        %v1149 = vunpack.c.l.b16 %v1133
        %v1150 = vunpack.c.l.b16 %v1134
        %v1151 = vunpack.c.l.b16 %v1135
        %v1152 = vunpack.c.l.b16 %v1136
        %v1153 = vunpack.c.l.b16 %v1137
        %v1154 = vunpack.c.l.b16 %v1138
        %v1155 = vpack.c.b16 %v1147, %v1147
        %v1156 = vpack.c.b16 %v1148, %v1148
        %v1157 = vpack.c.b16 %v1149, %v1149
        %v1158 = vpack.c.b16 %v1150, %v1150
        %v1159 = vpack.c.b16 %v1151, %v1151
        %v1160 = vpack.c.b16 %v1152, %v1152
        %v1161 = vpack.c.b16 %v1153, %v1153
        %v1162 = vpack.c.b16 %v1154, %v1154
        %1163 = vrot.lane.b32.xlu0 %v1155, 64
        %v1164 = vpop.permute.xlu0 %1163
        %1165 = vrot.lane.b32.xlu0 %v1156, 64
        %v1166 = vpop.permute.xlu0 %1165
        %1167 = vrot.lane.b32.xlu0 %v1157, 64
        %v1168 = vpop.permute.xlu0 %1167
        %1169 = vrot.lane.b32.xlu0 %v1158, 64
        %v1170 = vpop.permute.xlu0 %1169
        %1171 = vrot.lane.b32.xlu0 %v1159, 64
        %v1172 = vpop.permute.xlu0 %1171
        %1173 = vrot.lane.b32.xlu0 %v1160, 64
        %v1174 = vpop.permute.xlu0 %1173
        %1175 = vrot.lane.b32.xlu0 %v1161, 64
        %v1176 = vpop.permute.xlu0 %1175
        %1177 = vrot.lane.b32.xlu0 %v1162, 64
        %v1178 = vpop.permute.xlu0 %1177
        %1187 = vst.msk [vmem:[#allocation4] sm:$0xf] %vm540, %v1164
        %1188 = vst.msk [vmem:[#allocation4 + $0x4] sm:$0xf] %vm540, %v1166
        %1189 = vst.msk [vmem:[#allocation4 + $0x8] sm:$0xf] %vm540, %v1168
        %1190 = vst.msk [vmem:[#allocation4 + $0xc] sm:$0xf] %vm540, %v1170
        %1191 = vst.msk [vmem:[#allocation4 + $0x10] sm:$0xf] %vm540, %v1172
        %1192 = vst.msk [vmem:[#allocation4 + $0x14] sm:$0xf] %vm540, %v1174
        %1193 = vst.msk [vmem:[#allocation4 + $0x18] sm:$0xf] %vm540, %v1176
        %1194 = vst.msk [vmem:[#allocation4 + $0x1c] sm:$0xf] %vm540, %v1178
        %v1195 = vld [vmem:[#allocation4] sm:$0xf]
        %v1196 = vld [vmem:[#allocation4 + $0x4] sm:$0xf]
        %v1197 = vld [vmem:[#allocation4 + $0x8] sm:$0xf]
        %v1198 = vld [vmem:[#allocation4 + $0xc] sm:$0xf]
        %v1199 = vld [vmem:[#allocation4 + $0x10] sm:$0xf]
        %v1200 = vld [vmem:[#allocation4 + $0x14] sm:$0xf]
        %v1201 = vld [vmem:[#allocation4 + $0x18] sm:$0xf]
        %v1202 = vld [vmem:[#allocation4 + $0x1c] sm:$0xf]
        %s1203 = scalar_lea.vmem %s291, 96
        %v1204 = vld [vmem:[%s1203] sm:$0xf]
        %v1205 = vld [vmem:[%s1203 + $0x4] sm:$0xf]
        %v1206 = vld [vmem:[%s1203 + $0x8] sm:$0xf]
        %v1207 = vld [vmem:[%s1203 + $0xc] sm:$0xf]
        %v1208 = vld [vmem:[%s1203 + $0x10] sm:$0xf]
        %v1209 = vld [vmem:[%s1203 + $0x14] sm:$0xf]
        %v1210 = vld [vmem:[%s1203 + $0x18] sm:$0xf]
        %v1211 = vld [vmem:[%s1203 + $0x1c] sm:$0xf]
        %v1212 = vld [vmem:[%s1203 + $0x20] sm:$0xf]
        %v1213 = vld [vmem:[%s1203 + $0x24] sm:$0xf]
        %v1214 = vld [vmem:[%s1203 + $0x28] sm:$0xf]
        %v1215 = vld [vmem:[%s1203 + $0x2c] sm:$0xf]
        %v1224 = vunpack.c.l.b16 %v1195
        %v1225 = vunpack.c.l.b16 %v1196
        %v1226 = vunpack.c.l.b16 %v1197
        %v1227 = vunpack.c.l.b16 %v1198
        %v1228 = vunpack.c.l.b16 %v1199
        %v1229 = vunpack.c.l.b16 %v1200
        %v1230 = vunpack.c.l.b16 %v1201
        %v1231 = vunpack.c.l.b16 %v1202
        %v1232 = vpack.c.b16 %v1225, %v1224
        %v1233 = vpack.c.b16 %v1227, %v1226
        %v1234 = vpack.c.b16 %v1229, %v1228
        %v1235 = vpack.c.b16 %v1231, %v1230
        %v1248 = vunpack.c.l.b16 %v1204
        %v1249 = vunpack.c.l.b16 %v1205
        %v1250 = vunpack.c.l.b16 %v1206
        %v1251 = vunpack.c.l.b16 %v1207
        %v1252 = vunpack.c.l.b16 %v1208
        %v1253 = vunpack.c.l.b16 %v1209
        %v1254 = vunpack.c.l.b16 %v1210
        %v1255 = vunpack.c.l.b16 %v1211
        %v1256 = vunpack.c.l.b16 %v1212
        %v1257 = vunpack.c.l.b16 %v1213
        %v1258 = vunpack.c.l.b16 %v1214
        %v1259 = vunpack.c.l.b16 %v1215
        %v1260 = vpack.c.b16 %v1249, %v1248
        %v1261 = vpack.c.b16 %v1251, %v1250
        %v1262 = vpack.c.b16 %v1253, %v1252
        %v1263 = vpack.c.b16 %v1255, %v1254
        %v1264 = vpack.c.b16 %v1257, %v1256
        %v1265 = vpack.c.b16 %v1259, %v1258
        %v1273 = vsel %vm815, %v1232, 0
        %v1276 = vsel %vm815, %v1233, 0
        %v1279 = vsel %vm815, %v1234, 0
        %v1282 = vsel %vm815, %v1235, 0
        %1284 = vmatprep.subr.bf16.mxu0 0
        %1285 = vmatpush1.bf16.msra.mxu0 %v1260
        %1286 = vmatprep.subr.bf16.mxu0 0
        %1287 = vmatpush1.bf16.msra.mxu0 %v1261
        %1288 = vmatprep.subr.bf16.mxu0 0
        %1289 = vmatpush1.bf16.msra.mxu0 %v1262
        %1290 = vmatprep.subr.bf16.mxu0 0
        %1291 = vmatpush1.bf16.msra.mxu0 %v1263
        %1292 = vmatprep.subr.bf16.mxu0 0
        %1293 = vmatpush1.bf16.msra.mxu0 %v1264
        %1294 = vmatprep.subr.bf16.mxu0 0
        %1295 = vmatpush1.bf16.msra.mxu0 %v1265
        %1296 = vmatprep.subr.bf16.mxu0 0
        %1297 = vmatpush1.bf16.msra.mxu0 0
        %1298 = vmatprep.subr.bf16.mxu0 0
        %1299 = vmatpush1.bf16.msra.mxu0 0
        %1300 = vmatprep.subr.bf16.mxu0 0
        %1301 = vmatpush1.bf16.msra.mxu0 0
        %1302 = vmatprep.subr.bf16.mxu0 0
        %1303 = vmatpush1.bf16.msra.mxu0 0
        %1304 = vmatprep.subr.bf16.mxu0 0
        %1305 = vmatpush1.bf16.msra.mxu0 0
        %1306 = vmatprep.subr.bf16.mxu0 0
        %1307 = vmatpush1.bf16.msra.mxu0 0
        %1308 = vmatprep.subr.bf16.mxu0 0
        %1309 = vmatpush1.bf16.msra.mxu0 0
        %1310 = vmatprep.subr.bf16.mxu0 0
        %1311 = vmatpush1.bf16.msra.mxu0 0
        %1312 = vmatprep.subr.bf16.mxu0 0
        %1313 = vmatpush1.bf16.msra.mxu0 0
        %1314 = vmatprep.subr.bf16.mxu0 0
        %1315 = vmatpush1.bf16.msra.mxu0 0
        %1316 = vmatprep.mubr.bf16.mxu0 0
        %1317 = vmatmul.mubr.bf16.gmra.mrb[0].mxu0 %v1273
        %v1318 = vpop.f32.mrb[0].mxu0
        %v1319 = vadd.f32 0.0, %v1318
        %v1320 = vpop.f32.mrb[0].mxu0
        %v1321 = vpop.f32.mrb[0].mxu0
        %v1322 = vadd.f32 0.0, %v1321
        %v1323 = vpop.f32.mrb[0].mxu0
        %1324 = vmatprep.mubr.bf16.mxu0 0
        %1325 = vmatmul.mubr.bf16.gmra.mrb[0].mxu0 %v1276
        %v1326 = vpop.f32.mrb[0].mxu0
        %v1327 = vadd.f32 0.0, %v1326
        %v1328 = vpop.f32.mrb[0].mxu0
        %v1329 = vpop.f32.mrb[0].mxu0
        %v1330 = vadd.f32 0.0, %v1329
        %v1331 = vpop.f32.mrb[0].mxu0
        %1332 = vmatprep.mubr.bf16.mxu0 0
        %1333 = vmatmul.mubr.bf16.gmra.mrb[0].mxu0 %v1279
        %v1334 = vpop.f32.mrb[0].mxu0
        %v1335 = vadd.f32 0.0, %v1334
        %v1336 = vpop.f32.mrb[0].mxu0
        %v1337 = vpop.f32.mrb[0].mxu0
        %v1338 = vadd.f32 0.0, %v1337
        %v1339 = vpop.f32.mrb[0].mxu0
        %1340 = vmatprep.mubr.bf16.mxu0 0
        %1341 = vmatmul.mubr.bf16.gmra.mrb[0].mxu0 %v1282
        %v1342 = vpop.f32.mrb[0].mxu0
        %v1343 = vadd.f32 0.0, %v1342
        %v1344 = vpop.f32.mrb[0].mxu0
        %v1345 = vpop.f32.mrb[0].mxu0
        %v1346 = vadd.f32 0.0, %v1345
        %v1347 = vpop.f32.mrb[0].mxu0
        %1348 = vdwg.mxu0
        %v1349 = vadd.f32 %v996, %v1319
        %v1350 = vadd.f32 %v999, %v1322
        %v1351 = vadd.f32 %v1004, %v1327
        %v1352 = vadd.f32 %v1007, %v1330
        %v1353 = vadd.f32 %v1012, %v1335
        %v1354 = vadd.f32 %v1015, %v1338
        %v1355 = vadd.f32 %v1020, %v1343
        %v1356 = vadd.f32 %v1023, %v1346
        %v1357 = vld [vmem:[%s294] sm:$0x1]
        %v1359 = vlaneseq
        %v1360 = vshrl.u32 %v1359, 7
        %v1361 = vsub.s32 0, %v1360
        %v1362 = vrot.slane %v1357, %v1361
        %v1364 = vadd.f32 %v1349, %v1362
        %v1365 = vadd.f32 %v1350, %v1362
        %v1366 = vadd.f32 %v1351, %v1362
        %v1367 = vadd.f32 %v1352, %v1362
        %v1368 = vadd.f32 %v1353, %v1362
        %v1369 = vadd.f32 %v1354, %v1362
        %v1370 = vadd.f32 %v1355, %v1362
        %v1371 = vadd.f32 %v1356, %v1362
        %v1372 = vmax.f32 %v1364, 0.0
        %v1373 = vmax.f32 %v1365, 0.0
        %v1374 = vmax.f32 %v1366, 0.0
        %v1375 = vmax.f32 %v1367, 0.0
        %v1376 = vmax.f32 %v1368, 0.0
        %v1377 = vmax.f32 %v1369, 0.0
        %v1378 = vmax.f32 %v1370, 0.0
        %v1379 = vmax.f32 %v1371, 0.0
        %s1380 = scalar_lea.vmem [#allocation3], 16
        %1381 = vst.msk [vmem:[%s1380 + $0x1] sm:$0xff] %vm304, %v1372
        %1382 = vst.msk [vmem:[%s1380 + $0x11] sm:$0xff] %vm304, %v1373
        %1383 = vst.msk [vmem:[%s1380 + $0x21] sm:$0xff] %vm304, %v1374
        %1384 = vst.msk [vmem:[%s1380 + $0x31] sm:$0xff] %vm304, %v1375
        %1385 = vst.msk [vmem:[%s1380 + $0x41] sm:$0xff] %vm304, %v1376
        %1386 = vst.msk [vmem:[%s1380 + $0x51] sm:$0xff] %vm304, %v1377
        %1387 = vst.msk [vmem:[%s1380 + $0x61] sm:$0xff] %vm304, %v1378
        %1388 = vst.msk [vmem:[%s1380 + $0x71] sm:$0xff] %vm304, %v1379
        %v1389 = vld [vmem:[%s569 + $0x1] sm:$0xff]
        %v1390 = vld [vmem:[%s569 + $0x11] sm:$0xff]
        %v1391 = vld [vmem:[%s569 + $0x21] sm:$0xff]
        %v1392 = vld [vmem:[%s569 + $0x31] sm:$0xff]
        %v1393 = vld [vmem:[%s569 + $0x41] sm:$0xff]
        %v1394 = vld [vmem:[%s569 + $0x51] sm:$0xff]
        %v1395 = vld [vmem:[%s569 + $0x61] sm:$0xff]
        %v1396 = vld [vmem:[%s569 + $0x71] sm:$0xff]
        %v1397 = vld [vmem:[#allocation3] sm:$0xff]
        %v1398 = vld [vmem:[#allocation3 + $0x10] sm:$0xff]
        %v1399 = vld [vmem:[#allocation3 + $0x20] sm:$0xff]
        %v1400 = vld [vmem:[#allocation3 + $0x30] sm:$0xff]
        %v1401 = vld [vmem:[#allocation3 + $0x40] sm:$0xff]
        %v1402 = vld [vmem:[#allocation3 + $0x50] sm:$0xff]
        %v1403 = vld [vmem:[#allocation3 + $0x60] sm:$0xff]
        %v1404 = vld [vmem:[#allocation3 + $0x70] sm:$0xff]
        %v1405 = vpack.c.bf16 %v1397, %v1397
        %v1406 = vpack.c.bf16 %v1398, %v1398
        %v1407 = vpack.c.bf16 %v1399, %v1399
        %v1408 = vpack.c.bf16 %v1400, %v1400
        %v1409 = vpack.c.bf16 %v1401, %v1401
        %v1410 = vpack.c.bf16 %v1402, %v1402
        %v1411 = vpack.c.bf16 %v1403, %v1403
        %v1412 = vpack.c.bf16 %v1404, %v1404
        %1413 = vst.msk [vmem:[#allocation4] sm:$0xf] %vm394, %v1405
        %1414 = vst.msk [vmem:[#allocation4 + $0x4] sm:$0xf] %vm394, %v1406
        %1415 = vst.msk [vmem:[#allocation4 + $0x8] sm:$0xf] %vm394, %v1407
        %1416 = vst.msk [vmem:[#allocation4 + $0xc] sm:$0xf] %vm394, %v1408
        %1417 = vst.msk [vmem:[#allocation4 + $0x10] sm:$0xf] %vm394, %v1409
        %1418 = vst.msk [vmem:[#allocation4 + $0x14] sm:$0xf] %vm394, %v1410
        %1419 = vst.msk [vmem:[#allocation4 + $0x18] sm:$0xf] %vm394, %v1411
        %1420 = vst.msk [vmem:[#allocation4 + $0x1c] sm:$0xf] %vm394, %v1412
        %v1421 = vld [vmem:[#allocation3 + $0x1] sm:$0xff]
        %v1422 = vld [vmem:[#allocation3 + $0x11] sm:$0xff]
        %v1423 = vld [vmem:[#allocation3 + $0x21] sm:$0xff]
        %v1424 = vld [vmem:[#allocation3 + $0x31] sm:$0xff]
        %v1425 = vld [vmem:[#allocation3 + $0x41] sm:$0xff]
        %v1426 = vld [vmem:[#allocation3 + $0x51] sm:$0xff]
        %v1427 = vld [vmem:[#allocation3 + $0x61] sm:$0xff]
        %v1428 = vld [vmem:[#allocation3 + $0x71] sm:$0xff]
        %v1429 = vpack.c.bf16 %v1421, %v1421
        %v1430 = vpack.c.bf16 %v1422, %v1422
        %v1431 = vpack.c.bf16 %v1423, %v1423
        %v1432 = vpack.c.bf16 %v1424, %v1424
        %v1433 = vpack.c.bf16 %v1425, %v1425
        %v1434 = vpack.c.bf16 %v1426, %v1426
        %v1435 = vpack.c.bf16 %v1427, %v1427
        %v1436 = vpack.c.bf16 %v1428, %v1428
        %v1445 = vunpack.c.l.b16 %v1429
        %v1446 = vunpack.c.l.b16 %v1430
        %v1447 = vunpack.c.l.b16 %v1431
        %v1448 = vunpack.c.l.b16 %v1432
        %v1449 = vunpack.c.l.b16 %v1433
        %v1450 = vunpack.c.l.b16 %v1434
        %v1451 = vunpack.c.l.b16 %v1435
        %v1452 = vunpack.c.l.b16 %v1436
        %v1453 = vpack.c.b16 %v1445, %v1445
        %v1454 = vpack.c.b16 %v1446, %v1446
        %v1455 = vpack.c.b16 %v1447, %v1447
        %v1456 = vpack.c.b16 %v1448, %v1448
        %v1457 = vpack.c.b16 %v1449, %v1449
        %v1458 = vpack.c.b16 %v1450, %v1450
        %v1459 = vpack.c.b16 %v1451, %v1451
        %v1460 = vpack.c.b16 %v1452, %v1452
        %1461 = vrot.lane.b32.xlu0 %v1453, 32
        %v1462 = vpop.permute.xlu0 %1461
        %1463 = vrot.lane.b32.xlu0 %v1454, 32
        %v1464 = vpop.permute.xlu0 %1463
        %1465 = vrot.lane.b32.xlu0 %v1455, 32
        %v1466 = vpop.permute.xlu0 %1465
        %1467 = vrot.lane.b32.xlu0 %v1456, 32
        %v1468 = vpop.permute.xlu0 %1467
        %1469 = vrot.lane.b32.xlu0 %v1457, 32
        %v1470 = vpop.permute.xlu0 %1469
        %1471 = vrot.lane.b32.xlu0 %v1458, 32
        %v1472 = vpop.permute.xlu0 %1471
        %1473 = vrot.lane.b32.xlu0 %v1459, 32
        %v1474 = vpop.permute.xlu0 %1473
        %1475 = vrot.lane.b32.xlu0 %v1460, 32
        %v1476 = vpop.permute.xlu0 %1475
        %1485 = vst.msk [vmem:[#allocation4] sm:$0xf] %vm467, %v1462
        %1486 = vst.msk [vmem:[#allocation4 + $0x4] sm:$0xf] %vm467, %v1464
        %1487 = vst.msk [vmem:[#allocation4 + $0x8] sm:$0xf] %vm467, %v1466
        %1488 = vst.msk [vmem:[#allocation4 + $0xc] sm:$0xf] %vm467, %v1468
        %1489 = vst.msk [vmem:[#allocation4 + $0x10] sm:$0xf] %vm467, %v1470
        %1490 = vst.msk [vmem:[#allocation4 + $0x14] sm:$0xf] %vm467, %v1472
        %1491 = vst.msk [vmem:[#allocation4 + $0x18] sm:$0xf] %vm467, %v1474
        %1492 = vst.msk [vmem:[#allocation4 + $0x1c] sm:$0xf] %vm467, %v1476
        %v1493 = vld [vmem:[#allocation3 + $0x2] sm:$0xff]
        %v1494 = vld [vmem:[#allocation3 + $0x12] sm:$0xff]
        %v1495 = vld [vmem:[#allocation3 + $0x22] sm:$0xff]
        %v1496 = vld [vmem:[#allocation3 + $0x32] sm:$0xff]
        %v1497 = vld [vmem:[#allocation3 + $0x42] sm:$0xff]
        %v1498 = vld [vmem:[#allocation3 + $0x52] sm:$0xff]
        %v1499 = vld [vmem:[#allocation3 + $0x62] sm:$0xff]
        %v1500 = vld [vmem:[#allocation3 + $0x72] sm:$0xff]
        %v1501 = vpack.c.bf16 %v1493, %v1493
        %v1502 = vpack.c.bf16 %v1494, %v1494
        %v1503 = vpack.c.bf16 %v1495, %v1495
        %v1504 = vpack.c.bf16 %v1496, %v1496
        %v1505 = vpack.c.bf16 %v1497, %v1497
        %v1506 = vpack.c.bf16 %v1498, %v1498
        %v1507 = vpack.c.bf16 %v1499, %v1499
        %v1508 = vpack.c.bf16 %v1500, %v1500
        %v1517 = vunpack.c.l.b16 %v1501
        %v1518 = vunpack.c.l.b16 %v1502
        %v1519 = vunpack.c.l.b16 %v1503
        %v1520 = vunpack.c.l.b16 %v1504
        %v1521 = vunpack.c.l.b16 %v1505
        %v1522 = vunpack.c.l.b16 %v1506
        %v1523 = vunpack.c.l.b16 %v1507
        %v1524 = vunpack.c.l.b16 %v1508
        %v1525 = vpack.c.b16 %v1517, %v1517
        %v1526 = vpack.c.b16 %v1518, %v1518
        %v1527 = vpack.c.b16 %v1519, %v1519
        %v1528 = vpack.c.b16 %v1520, %v1520
        %v1529 = vpack.c.b16 %v1521, %v1521
        %v1530 = vpack.c.b16 %v1522, %v1522
        %v1531 = vpack.c.b16 %v1523, %v1523
        %v1532 = vpack.c.b16 %v1524, %v1524
        %1533 = vrot.lane.b32.xlu0 %v1525, 64
        %v1534 = vpop.permute.xlu0 %1533
        %1535 = vrot.lane.b32.xlu0 %v1526, 64
        %v1536 = vpop.permute.xlu0 %1535
        %1537 = vrot.lane.b32.xlu0 %v1527, 64
        %v1538 = vpop.permute.xlu0 %1537
        %1539 = vrot.lane.b32.xlu0 %v1528, 64
        %v1540 = vpop.permute.xlu0 %1539
        %1541 = vrot.lane.b32.xlu0 %v1529, 64
        %v1542 = vpop.permute.xlu0 %1541
        %1543 = vrot.lane.b32.xlu0 %v1530, 64
        %v1544 = vpop.permute.xlu0 %1543
        %1545 = vrot.lane.b32.xlu0 %v1531, 64
        %v1546 = vpop.permute.xlu0 %1545
        %1547 = vrot.lane.b32.xlu0 %v1532, 64
        %v1548 = vpop.permute.xlu0 %1547
        %1557 = vst.msk [vmem:[#allocation4] sm:$0xf] %vm540, %v1534
        %1558 = vst.msk [vmem:[#allocation4 + $0x4] sm:$0xf] %vm540, %v1536
        %1559 = vst.msk [vmem:[#allocation4 + $0x8] sm:$0xf] %vm540, %v1538
        %1560 = vst.msk [vmem:[#allocation4 + $0xc] sm:$0xf] %vm540, %v1540
        %1561 = vst.msk [vmem:[#allocation4 + $0x10] sm:$0xf] %vm540, %v1542
        %1562 = vst.msk [vmem:[#allocation4 + $0x14] sm:$0xf] %vm540, %v1544
        %1563 = vst.msk [vmem:[#allocation4 + $0x18] sm:$0xf] %vm540, %v1546
        %1564 = vst.msk [vmem:[#allocation4 + $0x1c] sm:$0xf] %vm540, %v1548
        %v1565 = vld [vmem:[#allocation4] sm:$0xf]
        %v1566 = vld [vmem:[#allocation4 + $0x4] sm:$0xf]
        %v1567 = vld [vmem:[#allocation4 + $0x8] sm:$0xf]
        %v1568 = vld [vmem:[#allocation4 + $0xc] sm:$0xf]
        %v1569 = vld [vmem:[#allocation4 + $0x10] sm:$0xf]
        %v1570 = vld [vmem:[#allocation4 + $0x14] sm:$0xf]
        %v1571 = vld [vmem:[#allocation4 + $0x18] sm:$0xf]
        %v1572 = vld [vmem:[#allocation4 + $0x1c] sm:$0xf]
        %v1573 = vld [vmem:[%s299] sm:$0xf]
        %v1574 = vld [vmem:[%s299 + $0x4] sm:$0xf]
        %v1575 = vld [vmem:[%s299 + $0x8] sm:$0xf]
        %v1576 = vld [vmem:[%s299 + $0xc] sm:$0xf]
        %v1577 = vld [vmem:[%s299 + $0x10] sm:$0xf]
        %v1578 = vld [vmem:[%s299 + $0x14] sm:$0xf]
        %v1579 = vld [vmem:[%s299 + $0x18] sm:$0xf]
        %v1580 = vld [vmem:[%s299 + $0x1c] sm:$0xf]
        %v1581 = vld [vmem:[%s299 + $0x20] sm:$0xf]
        %v1582 = vld [vmem:[%s299 + $0x24] sm:$0xf]
        %v1583 = vld [vmem:[%s299 + $0x28] sm:$0xf]
        %v1584 = vld [vmem:[%s299 + $0x2c] sm:$0xf]
        %v1585 = vld [vmem:[%s1380] sm:$0xff]
        %v1586 = vld [vmem:[%s1380 + $0x10] sm:$0xff]
        %v1587 = vld [vmem:[%s1380 + $0x20] sm:$0xff]
        %v1588 = vld [vmem:[%s1380 + $0x30] sm:$0xff]
        %v1589 = vld [vmem:[%s1380 + $0x40] sm:$0xff]
        %v1590 = vld [vmem:[%s1380 + $0x50] sm:$0xff]
        %v1591 = vld [vmem:[%s1380 + $0x60] sm:$0xff]
        %v1592 = vld [vmem:[%s1380 + $0x70] sm:$0xff]
        %v1593 = vpack.c.bf16 %v1585, %v1585
        %v1594 = vpack.c.bf16 %v1586, %v1586
        %v1595 = vpack.c.bf16 %v1587, %v1587
        %v1596 = vpack.c.bf16 %v1588, %v1588
        %v1597 = vpack.c.bf16 %v1589, %v1589
        %v1598 = vpack.c.bf16 %v1590, %v1590
        %v1599 = vpack.c.bf16 %v1591, %v1591
        %v1600 = vpack.c.bf16 %v1592, %v1592
        %1601 = vst.msk [vmem:[#allocation4] sm:$0xf] %vm394, %v1593
        %1602 = vst.msk [vmem:[#allocation4 + $0x4] sm:$0xf] %vm394, %v1594
        %1603 = vst.msk [vmem:[#allocation4 + $0x8] sm:$0xf] %vm394, %v1595
        %1604 = vst.msk [vmem:[#allocation4 + $0xc] sm:$0xf] %vm394, %v1596
        %1605 = vst.msk [vmem:[#allocation4 + $0x10] sm:$0xf] %vm394, %v1597
        %1606 = vst.msk [vmem:[#allocation4 + $0x14] sm:$0xf] %vm394, %v1598
        %1607 = vst.msk [vmem:[#allocation4 + $0x18] sm:$0xf] %vm394, %v1599
        %1608 = vst.msk [vmem:[#allocation4 + $0x1c] sm:$0xf] %vm394, %v1600
        %v1609 = vld [vmem:[%s1380 + $0x1] sm:$0xff]
        %v1610 = vld [vmem:[%s1380 + $0x11] sm:$0xff]
        %v1611 = vld [vmem:[%s1380 + $0x21] sm:$0xff]
        %v1612 = vld [vmem:[%s1380 + $0x31] sm:$0xff]
        %v1613 = vld [vmem:[%s1380 + $0x41] sm:$0xff]
        %v1614 = vld [vmem:[%s1380 + $0x51] sm:$0xff]
        %v1615 = vld [vmem:[%s1380 + $0x61] sm:$0xff]
        %v1616 = vld [vmem:[%s1380 + $0x71] sm:$0xff]
        %v1617 = vpack.c.bf16 %v1609, %v1609
        %v1618 = vpack.c.bf16 %v1610, %v1610
        %v1619 = vpack.c.bf16 %v1611, %v1611
        %v1620 = vpack.c.bf16 %v1612, %v1612
        %v1621 = vpack.c.bf16 %v1613, %v1613
        %v1622 = vpack.c.bf16 %v1614, %v1614
        %v1623 = vpack.c.bf16 %v1615, %v1615
        %v1624 = vpack.c.bf16 %v1616, %v1616
        %v1633 = vunpack.c.l.b16 %v1617
        %v1634 = vunpack.c.l.b16 %v1618
        %v1635 = vunpack.c.l.b16 %v1619
        %v1636 = vunpack.c.l.b16 %v1620
        %v1637 = vunpack.c.l.b16 %v1621
        %v1638 = vunpack.c.l.b16 %v1622
        %v1639 = vunpack.c.l.b16 %v1623
        %v1640 = vunpack.c.l.b16 %v1624
        %v1641 = vpack.c.b16 %v1633, %v1633
        %v1642 = vpack.c.b16 %v1634, %v1634
        %v1643 = vpack.c.b16 %v1635, %v1635
        %v1644 = vpack.c.b16 %v1636, %v1636
        %v1645 = vpack.c.b16 %v1637, %v1637
        %v1646 = vpack.c.b16 %v1638, %v1638
        %v1647 = vpack.c.b16 %v1639, %v1639
        %v1648 = vpack.c.b16 %v1640, %v1640
        %1649 = vrot.lane.b32.xlu0 %v1641, 32
        %v1650 = vpop.permute.xlu0 %1649
        %1651 = vrot.lane.b32.xlu0 %v1642, 32
        %v1652 = vpop.permute.xlu0 %1651
        %1653 = vrot.lane.b32.xlu0 %v1643, 32
        %v1654 = vpop.permute.xlu0 %1653
        %1655 = vrot.lane.b32.xlu0 %v1644, 32
        %v1656 = vpop.permute.xlu0 %1655
        %1657 = vrot.lane.b32.xlu0 %v1645, 32
        %v1658 = vpop.permute.xlu0 %1657
        %1659 = vrot.lane.b32.xlu0 %v1646, 32
        %v1660 = vpop.permute.xlu0 %1659
        %1661 = vrot.lane.b32.xlu0 %v1647, 32
        %v1662 = vpop.permute.xlu0 %1661
        %1663 = vrot.lane.b32.xlu0 %v1648, 32
        %v1664 = vpop.permute.xlu0 %1663
        %1673 = vst.msk [vmem:[#allocation4] sm:$0xf] %vm467, %v1650
        %1674 = vst.msk [vmem:[#allocation4 + $0x4] sm:$0xf] %vm467, %v1652
        %1675 = vst.msk [vmem:[#allocation4 + $0x8] sm:$0xf] %vm467, %v1654
        %1676 = vst.msk [vmem:[#allocation4 + $0xc] sm:$0xf] %vm467, %v1656
        %1677 = vst.msk [vmem:[#allocation4 + $0x10] sm:$0xf] %vm467, %v1658
        %1678 = vst.msk [vmem:[#allocation4 + $0x14] sm:$0xf] %vm467, %v1660
        %1679 = vst.msk [vmem:[#allocation4 + $0x18] sm:$0xf] %vm467, %v1662
        %1680 = vst.msk [vmem:[#allocation4 + $0x1c] sm:$0xf] %vm467, %v1664
        %v1681 = vld [vmem:[%s1380 + $0x2] sm:$0xff]
        %v1682 = vld [vmem:[%s1380 + $0x12] sm:$0xff]
        %v1683 = vld [vmem:[%s1380 + $0x22] sm:$0xff]
        %v1684 = vld [vmem:[%s1380 + $0x32] sm:$0xff]
        %v1685 = vld [vmem:[%s1380 + $0x42] sm:$0xff]
        %v1686 = vld [vmem:[%s1380 + $0x52] sm:$0xff]
        %v1687 = vld [vmem:[%s1380 + $0x62] sm:$0xff]
        %v1688 = vld [vmem:[%s1380 + $0x72] sm:$0xff]
        %v1689 = vpack.c.bf16 %v1681, %v1681
        %v1690 = vpack.c.bf16 %v1682, %v1682
        %v1691 = vpack.c.bf16 %v1683, %v1683
        %v1692 = vpack.c.bf16 %v1684, %v1684
        %v1693 = vpack.c.bf16 %v1685, %v1685
        %v1694 = vpack.c.bf16 %v1686, %v1686
        %v1695 = vpack.c.bf16 %v1687, %v1687
        %v1696 = vpack.c.bf16 %v1688, %v1688
        %v1705 = vunpack.c.l.b16 %v1689
        %v1706 = vunpack.c.l.b16 %v1690
        %v1707 = vunpack.c.l.b16 %v1691
        %v1708 = vunpack.c.l.b16 %v1692
        %v1709 = vunpack.c.l.b16 %v1693
        %v1710 = vunpack.c.l.b16 %v1694
        %v1711 = vunpack.c.l.b16 %v1695
        %v1712 = vunpack.c.l.b16 %v1696
        %v1713 = vpack.c.b16 %v1705, %v1705
        %v1714 = vpack.c.b16 %v1706, %v1706
        %v1715 = vpack.c.b16 %v1707, %v1707
        %v1716 = vpack.c.b16 %v1708, %v1708
        %v1717 = vpack.c.b16 %v1709, %v1709
        %v1718 = vpack.c.b16 %v1710, %v1710
        %v1719 = vpack.c.b16 %v1711, %v1711
        %v1720 = vpack.c.b16 %v1712, %v1712
        %1721 = vrot.lane.b32.xlu0 %v1713, 64
        %v1722 = vpop.permute.xlu0 %1721
        %1723 = vrot.lane.b32.xlu0 %v1714, 64
        %v1724 = vpop.permute.xlu0 %1723
        %1725 = vrot.lane.b32.xlu0 %v1715, 64
        %v1726 = vpop.permute.xlu0 %1725
        %1727 = vrot.lane.b32.xlu0 %v1716, 64
        %v1728 = vpop.permute.xlu0 %1727
        %1729 = vrot.lane.b32.xlu0 %v1717, 64
        %v1730 = vpop.permute.xlu0 %1729
        %1731 = vrot.lane.b32.xlu0 %v1718, 64
        %v1732 = vpop.permute.xlu0 %1731
        %1733 = vrot.lane.b32.xlu0 %v1719, 64
        %v1734 = vpop.permute.xlu0 %1733
        %1735 = vrot.lane.b32.xlu0 %v1720, 64
        %v1736 = vpop.permute.xlu0 %1735
        %1745 = vst.msk [vmem:[#allocation4] sm:$0xf] %vm540, %v1722
        %1746 = vst.msk [vmem:[#allocation4 + $0x4] sm:$0xf] %vm540, %v1724
        %1747 = vst.msk [vmem:[#allocation4 + $0x8] sm:$0xf] %vm540, %v1726
        %1748 = vst.msk [vmem:[#allocation4 + $0xc] sm:$0xf] %vm540, %v1728
        %1749 = vst.msk [vmem:[#allocation4 + $0x10] sm:$0xf] %vm540, %v1730
        %1750 = vst.msk [vmem:[#allocation4 + $0x14] sm:$0xf] %vm540, %v1732
        %1751 = vst.msk [vmem:[#allocation4 + $0x18] sm:$0xf] %vm540, %v1734
        %1752 = vst.msk [vmem:[#allocation4 + $0x1c] sm:$0xf] %vm540, %v1736
        %v1753 = vld [vmem:[#allocation4] sm:$0xf]
        %v1754 = vld [vmem:[#allocation4 + $0x4] sm:$0xf]
        %v1755 = vld [vmem:[#allocation4 + $0x8] sm:$0xf]
        %v1756 = vld [vmem:[#allocation4 + $0xc] sm:$0xf]
        %v1757 = vld [vmem:[#allocation4 + $0x10] sm:$0xf]
        %v1758 = vld [vmem:[#allocation4 + $0x14] sm:$0xf]
        %v1759 = vld [vmem:[#allocation4 + $0x18] sm:$0xf]
        %v1760 = vld [vmem:[#allocation4 + $0x1c] sm:$0xf]
        %s1761 = scalar_lea.vmem %s299, 48
        %v1762 = vld [vmem:[%s1761] sm:$0xf]
        %v1763 = vld [vmem:[%s1761 + $0x4] sm:$0xf]
        %v1764 = vld [vmem:[%s1761 + $0x8] sm:$0xf]
        %v1765 = vld [vmem:[%s1761 + $0xc] sm:$0xf]
        %v1766 = vld [vmem:[%s1761 + $0x10] sm:$0xf]
        %v1767 = vld [vmem:[%s1761 + $0x14] sm:$0xf]
        %v1768 = vld [vmem:[%s1761 + $0x18] sm:$0xf]
        %v1769 = vld [vmem:[%s1761 + $0x1c] sm:$0xf]
        %v1770 = vld [vmem:[%s1761 + $0x20] sm:$0xf]
        %v1771 = vld [vmem:[%s1761 + $0x24] sm:$0xf]
        %v1772 = vld [vmem:[%s1761 + $0x28] sm:$0xf]
        %v1773 = vld [vmem:[%s1761 + $0x2c] sm:$0xf]
        %v1782 = vunpack.c.l.b16 %v1753
        %v1783 = vunpack.c.l.b16 %v1754
        %v1784 = vunpack.c.l.b16 %v1755
        %v1785 = vunpack.c.l.b16 %v1756
        %v1786 = vunpack.c.l.b16 %v1757
        %v1787 = vunpack.c.l.b16 %v1758
        %v1788 = vunpack.c.l.b16 %v1759
        %v1789 = vunpack.c.l.b16 %v1760
        %v1790 = vpack.c.b16 %v1783, %v1782
        %v1791 = vpack.c.b16 %v1785, %v1784
        %v1792 = vpack.c.b16 %v1787, %v1786
        %v1793 = vpack.c.b16 %v1789, %v1788
        %v1806 = vunpack.c.l.b16 %v1762
        %v1807 = vunpack.c.l.b16 %v1763
        %v1808 = vunpack.c.l.b16 %v1764
        %v1809 = vunpack.c.l.b16 %v1765
        %v1810 = vunpack.c.l.b16 %v1766
        %v1811 = vunpack.c.l.b16 %v1767
        %v1812 = vunpack.c.l.b16 %v1768
        %v1813 = vunpack.c.l.b16 %v1769
        %v1814 = vunpack.c.l.b16 %v1770
        %v1815 = vunpack.c.l.b16 %v1771
        %v1816 = vunpack.c.l.b16 %v1772
        %v1817 = vunpack.c.l.b16 %v1773
        %v1818 = vpack.c.b16 %v1807, %v1806
        %v1819 = vpack.c.b16 %v1809, %v1808
        %v1820 = vpack.c.b16 %v1811, %v1810
        %v1821 = vpack.c.b16 %v1813, %v1812
        %v1822 = vpack.c.b16 %v1815, %v1814
        %v1823 = vpack.c.b16 %v1817, %v1816
        %v1831 = vsel %vm815, %v1790, 0
        %v1834 = vsel %vm815, %v1791, 0
        %v1837 = vsel %vm815, %v1792, 0
        %v1840 = vsel %vm815, %v1793, 0
        %1842 = vmatprep.subr.bf16.mxu0 0
        %1843 = vmatpush1.bf16.msra.mxu0 %v1818
        %1844 = vmatprep.subr.bf16.mxu0 0
        %1845 = vmatpush1.bf16.msra.mxu0 %v1819
        %1846 = vmatprep.subr.bf16.mxu0 0
        %1847 = vmatpush1.bf16.msra.mxu0 %v1820
        %1848 = vmatprep.subr.bf16.mxu0 0
        %1849 = vmatpush1.bf16.msra.mxu0 %v1821
        %1850 = vmatprep.subr.bf16.mxu0 0
        %1851 = vmatpush1.bf16.msra.mxu0 %v1822
        %1852 = vmatprep.subr.bf16.mxu0 0
        %1853 = vmatpush1.bf16.msra.mxu0 %v1823
        %1854 = vmatprep.subr.bf16.mxu0 0
        %1855 = vmatpush1.bf16.msra.mxu0 0
        %1856 = vmatprep.subr.bf16.mxu0 0
        %1857 = vmatpush1.bf16.msra.mxu0 0
        %1858 = vmatprep.subr.bf16.mxu0 0
        %1859 = vmatpush1.bf16.msra.mxu0 0
        %1860 = vmatprep.subr.bf16.mxu0 0
        %1861 = vmatpush1.bf16.msra.mxu0 0
        %1862 = vmatprep.subr.bf16.mxu0 0
        %1863 = vmatpush1.bf16.msra.mxu0 0
        %1864 = vmatprep.subr.bf16.mxu0 0
        %1865 = vmatpush1.bf16.msra.mxu0 0
        %1866 = vmatprep.subr.bf16.mxu0 0
        %1867 = vmatpush1.bf16.msra.mxu0 0
        %1868 = vmatprep.subr.bf16.mxu0 0
        %1869 = vmatpush1.bf16.msra.mxu0 0
        %1870 = vmatprep.subr.bf16.mxu0 0
        %1871 = vmatpush1.bf16.msra.mxu0 0
        %1872 = vmatprep.subr.bf16.mxu0 0
        %1873 = vmatpush1.bf16.msra.mxu0 0
        %1874 = vmatprep.mubr.bf16.mxu0 0
        %1875 = vmatmul.mubr.bf16.gmra.mrb[0].mxu0 %v1831
        %v1876 = vpop.f32.mrb[0].mxu0
        %v1877 = vadd.f32 0.0, %v1876
        %v1878 = vpop.f32.mrb[0].mxu0
        %v1879 = vpop.f32.mrb[0].mxu0
        %v1880 = vadd.f32 0.0, %v1879
        %v1881 = vpop.f32.mrb[0].mxu0
        %1882 = vmatprep.mubr.bf16.mxu0 0
        %1883 = vmatmul.mubr.bf16.gmra.mrb[0].mxu0 %v1834
        %v1884 = vpop.f32.mrb[0].mxu0
        %v1885 = vadd.f32 0.0, %v1884
        %v1886 = vpop.f32.mrb[0].mxu0
        %v1887 = vpop.f32.mrb[0].mxu0
        %v1888 = vadd.f32 0.0, %v1887
        %v1889 = vpop.f32.mrb[0].mxu0
        %1890 = vmatprep.mubr.bf16.mxu0 0
        %1891 = vmatmul.mubr.bf16.gmra.mrb[0].mxu0 %v1837
        %v1892 = vpop.f32.mrb[0].mxu0
        %v1893 = vadd.f32 0.0, %v1892
        %v1894 = vpop.f32.mrb[0].mxu0
        %v1895 = vpop.f32.mrb[0].mxu0
        %v1896 = vadd.f32 0.0, %v1895
        %v1897 = vpop.f32.mrb[0].mxu0
        %1898 = vmatprep.mubr.bf16.mxu0 0
        %1899 = vmatmul.mubr.bf16.gmra.mrb[0].mxu0 %v1840
        %v1900 = vpop.f32.mrb[0].mxu0
        %v1901 = vadd.f32 0.0, %v1900
        %v1902 = vpop.f32.mrb[0].mxu0
        %v1903 = vpop.f32.mrb[0].mxu0
        %v1904 = vadd.f32 0.0, %v1903
        %v1905 = vpop.f32.mrb[0].mxu0
        %1906 = vdwg.mxu0
        %v1915 = vunpack.c.l.b16 %v1565
        %v1916 = vunpack.c.l.b16 %v1566
        %v1917 = vunpack.c.l.b16 %v1567
        %v1918 = vunpack.c.l.b16 %v1568
        %v1919 = vunpack.c.l.b16 %v1569
        %v1920 = vunpack.c.l.b16 %v1570
        %v1921 = vunpack.c.l.b16 %v1571
        %v1922 = vunpack.c.l.b16 %v1572
        %v1923 = vpack.c.b16 %v1916, %v1915
        %v1924 = vpack.c.b16 %v1918, %v1917
        %v1925 = vpack.c.b16 %v1920, %v1919
        %v1926 = vpack.c.b16 %v1922, %v1921
        %v1939 = vunpack.c.l.b16 %v1573
        %v1940 = vunpack.c.l.b16 %v1574
        %v1941 = vunpack.c.l.b16 %v1575
        %v1942 = vunpack.c.l.b16 %v1576
        %v1943 = vunpack.c.l.b16 %v1577
        %v1944 = vunpack.c.l.b16 %v1578
        %v1945 = vunpack.c.l.b16 %v1579
        %v1946 = vunpack.c.l.b16 %v1580
        %v1947 = vunpack.c.l.b16 %v1581
        %v1948 = vunpack.c.l.b16 %v1582
        %v1949 = vunpack.c.l.b16 %v1583
        %v1950 = vunpack.c.l.b16 %v1584
        %v1951 = vpack.c.b16 %v1940, %v1939
        %v1952 = vpack.c.b16 %v1942, %v1941
        %v1953 = vpack.c.b16 %v1944, %v1943
        %v1954 = vpack.c.b16 %v1946, %v1945
        %v1955 = vpack.c.b16 %v1948, %v1947
        %v1956 = vpack.c.b16 %v1950, %v1949
        %v1964 = vsel %vm815, %v1923, 0
        %v1967 = vsel %vm815, %v1924, 0
        %v1970 = vsel %vm815, %v1925, 0
        %v1973 = vsel %vm815, %v1926, 0
        %1975 = vmatprep.subr.bf16.mxu0 0
        %1976 = vmatpush1.bf16.msra.mxu0 %v1951
        %1977 = vmatprep.subr.bf16.mxu0 0
        %1978 = vmatpush1.bf16.msra.mxu0 %v1952
        %1979 = vmatprep.subr.bf16.mxu0 0
        %1980 = vmatpush1.bf16.msra.mxu0 %v1953
        %1981 = vmatprep.subr.bf16.mxu0 0
        %1982 = vmatpush1.bf16.msra.mxu0 %v1954
        %1983 = vmatprep.subr.bf16.mxu0 0
        %1984 = vmatpush1.bf16.msra.mxu0 %v1955
        %1985 = vmatprep.subr.bf16.mxu0 0
        %1986 = vmatpush1.bf16.msra.mxu0 %v1956
        %1987 = vmatprep.subr.bf16.mxu0 0
        %1988 = vmatpush1.bf16.msra.mxu0 0
        %1989 = vmatprep.subr.bf16.mxu0 0
        %1990 = vmatpush1.bf16.msra.mxu0 0
        %1991 = vmatprep.subr.bf16.mxu0 0
        %1992 = vmatpush1.bf16.msra.mxu0 0
        %1993 = vmatprep.subr.bf16.mxu0 0
        %1994 = vmatpush1.bf16.msra.mxu0 0
        %1995 = vmatprep.subr.bf16.mxu0 0
        %1996 = vmatpush1.bf16.msra.mxu0 0
        %1997 = vmatprep.subr.bf16.mxu0 0
        %1998 = vmatpush1.bf16.msra.mxu0 0
        %1999 = vmatprep.subr.bf16.mxu0 0
        %2000 = vmatpush1.bf16.msra.mxu0 0
        %2001 = vmatprep.subr.bf16.mxu0 0
        %2002 = vmatpush1.bf16.msra.mxu0 0
        %2003 = vmatprep.subr.bf16.mxu0 0
        %2004 = vmatpush1.bf16.msra.mxu0 0
        %2005 = vmatprep.subr.bf16.mxu0 0
        %2006 = vmatpush1.bf16.msra.mxu0 0
        %2007 = vmatprep.mubr.bf16.mxu0 0
        %2008 = vmatmul.mubr.bf16.gmra.mrb[0].mxu0 %v1964
        %v2009 = vpop.f32.mrb[0].mxu0
        %v2010 = vadd.f32 %v1877, %v2009
        %v2011 = vpop.f32.mrb[0].mxu0
        %v2012 = vpop.f32.mrb[0].mxu0
        %v2013 = vadd.f32 %v1880, %v2012
        %v2014 = vpop.f32.mrb[0].mxu0
        %2015 = vmatprep.mubr.bf16.mxu0 0
        %2016 = vmatmul.mubr.bf16.gmra.mrb[0].mxu0 %v1967
        %v2017 = vpop.f32.mrb[0].mxu0
        %v2018 = vadd.f32 %v1885, %v2017
        %v2019 = vpop.f32.mrb[0].mxu0
        %v2020 = vpop.f32.mrb[0].mxu0
        %v2021 = vadd.f32 %v1888, %v2020
        %v2022 = vpop.f32.mrb[0].mxu0
        %2023 = vmatprep.mubr.bf16.mxu0 0
        %2024 = vmatmul.mubr.bf16.gmra.mrb[0].mxu0 %v1970
        %v2025 = vpop.f32.mrb[0].mxu0
        %v2026 = vadd.f32 %v1893, %v2025
        %v2027 = vpop.f32.mrb[0].mxu0
        %v2028 = vpop.f32.mrb[0].mxu0
        %v2029 = vadd.f32 %v1896, %v2028
        %v2030 = vpop.f32.mrb[0].mxu0
        %2031 = vmatprep.mubr.bf16.mxu0 0
        %2032 = vmatmul.mubr.bf16.gmra.mrb[0].mxu0 %v1973
        %v2033 = vpop.f32.mrb[0].mxu0
        %v2034 = vadd.f32 %v1901, %v2033
        %v2035 = vpop.f32.mrb[0].mxu0
        %v2036 = vpop.f32.mrb[0].mxu0
        %v2037 = vadd.f32 %v1904, %v2036
        %v2038 = vpop.f32.mrb[0].mxu0
        %2039 = vdwg.mxu0
        %s2040 = scalar_lea.vmem [#allocation3], 32
        %v2041 = vld [vmem:[%s2040] sm:$0xff]
        %v2042 = vld [vmem:[%s2040 + $0x10] sm:$0xff]
        %v2043 = vld [vmem:[%s2040 + $0x20] sm:$0xff]
        %v2044 = vld [vmem:[%s2040 + $0x30] sm:$0xff]
        %v2045 = vld [vmem:[%s2040 + $0x40] sm:$0xff]
        %v2046 = vld [vmem:[%s2040 + $0x50] sm:$0xff]
        %v2047 = vld [vmem:[%s2040 + $0x60] sm:$0xff]
        %v2048 = vld [vmem:[%s2040 + $0x70] sm:$0xff]
        %v2049 = vpack.c.bf16 %v2041, %v2041
        %v2050 = vpack.c.bf16 %v2042, %v2042
        %v2051 = vpack.c.bf16 %v2043, %v2043
        %v2052 = vpack.c.bf16 %v2044, %v2044
        %v2053 = vpack.c.bf16 %v2045, %v2045
        %v2054 = vpack.c.bf16 %v2046, %v2046
        %v2055 = vpack.c.bf16 %v2047, %v2047
        %v2056 = vpack.c.bf16 %v2048, %v2048
        %2057 = vst.msk [vmem:[#allocation4] sm:$0xf] %vm394, %v2049
        %2058 = vst.msk [vmem:[#allocation4 + $0x4] sm:$0xf] %vm394, %v2050
        %2059 = vst.msk [vmem:[#allocation4 + $0x8] sm:$0xf] %vm394, %v2051
        %2060 = vst.msk [vmem:[#allocation4 + $0xc] sm:$0xf] %vm394, %v2052
        %2061 = vst.msk [vmem:[#allocation4 + $0x10] sm:$0xf] %vm394, %v2053
        %2062 = vst.msk [vmem:[#allocation4 + $0x14] sm:$0xf] %vm394, %v2054
        %2063 = vst.msk [vmem:[#allocation4 + $0x18] sm:$0xf] %vm394, %v2055
        %2064 = vst.msk [vmem:[#allocation4 + $0x1c] sm:$0xf] %vm394, %v2056
        %v2065 = vld [vmem:[%s2040 + $0x1] sm:$0xff]
        %v2066 = vld [vmem:[%s2040 + $0x11] sm:$0xff]
        %v2067 = vld [vmem:[%s2040 + $0x21] sm:$0xff]
        %v2068 = vld [vmem:[%s2040 + $0x31] sm:$0xff]
        %v2069 = vld [vmem:[%s2040 + $0x41] sm:$0xff]
        %v2070 = vld [vmem:[%s2040 + $0x51] sm:$0xff]
        %v2071 = vld [vmem:[%s2040 + $0x61] sm:$0xff]
        %v2072 = vld [vmem:[%s2040 + $0x71] sm:$0xff]
        %v2073 = vpack.c.bf16 %v2065, %v2065
        %v2074 = vpack.c.bf16 %v2066, %v2066
        %v2075 = vpack.c.bf16 %v2067, %v2067
        %v2076 = vpack.c.bf16 %v2068, %v2068
        %v2077 = vpack.c.bf16 %v2069, %v2069
        %v2078 = vpack.c.bf16 %v2070, %v2070
        %v2079 = vpack.c.bf16 %v2071, %v2071
        %v2080 = vpack.c.bf16 %v2072, %v2072
        %v2089 = vunpack.c.l.b16 %v2073
        %v2090 = vunpack.c.l.b16 %v2074
        %v2091 = vunpack.c.l.b16 %v2075
        %v2092 = vunpack.c.l.b16 %v2076
        %v2093 = vunpack.c.l.b16 %v2077
        %v2094 = vunpack.c.l.b16 %v2078
        %v2095 = vunpack.c.l.b16 %v2079
        %v2096 = vunpack.c.l.b16 %v2080
        %v2097 = vpack.c.b16 %v2089, %v2089
        %v2098 = vpack.c.b16 %v2090, %v2090
        %v2099 = vpack.c.b16 %v2091, %v2091
        %v2100 = vpack.c.b16 %v2092, %v2092
        %v2101 = vpack.c.b16 %v2093, %v2093
        %v2102 = vpack.c.b16 %v2094, %v2094
        %v2103 = vpack.c.b16 %v2095, %v2095
        %v2104 = vpack.c.b16 %v2096, %v2096
        %2105 = vrot.lane.b32.xlu0 %v2097, 32
        %v2106 = vpop.permute.xlu0 %2105
        %2107 = vrot.lane.b32.xlu0 %v2098, 32
        %v2108 = vpop.permute.xlu0 %2107
        %2109 = vrot.lane.b32.xlu0 %v2099, 32
        %v2110 = vpop.permute.xlu0 %2109
        %2111 = vrot.lane.b32.xlu0 %v2100, 32
        %v2112 = vpop.permute.xlu0 %2111
        %2113 = vrot.lane.b32.xlu0 %v2101, 32
        %v2114 = vpop.permute.xlu0 %2113
        %2115 = vrot.lane.b32.xlu0 %v2102, 32
        %v2116 = vpop.permute.xlu0 %2115
        %2117 = vrot.lane.b32.xlu0 %v2103, 32
        %v2118 = vpop.permute.xlu0 %2117
        %2119 = vrot.lane.b32.xlu0 %v2104, 32
        %v2120 = vpop.permute.xlu0 %2119
        %2129 = vst.msk [vmem:[#allocation4] sm:$0xf] %vm467, %v2106
        %2130 = vst.msk [vmem:[#allocation4 + $0x4] sm:$0xf] %vm467, %v2108
        %2131 = vst.msk [vmem:[#allocation4 + $0x8] sm:$0xf] %vm467, %v2110
        %2132 = vst.msk [vmem:[#allocation4 + $0xc] sm:$0xf] %vm467, %v2112
        %2133 = vst.msk [vmem:[#allocation4 + $0x10] sm:$0xf] %vm467, %v2114
        %2134 = vst.msk [vmem:[#allocation4 + $0x14] sm:$0xf] %vm467, %v2116
        %2135 = vst.msk [vmem:[#allocation4 + $0x18] sm:$0xf] %vm467, %v2118
        %2136 = vst.msk [vmem:[#allocation4 + $0x1c] sm:$0xf] %vm467, %v2120
        %v2137 = vld [vmem:[%s2040 + $0x2] sm:$0xff]
        %v2138 = vld [vmem:[%s2040 + $0x12] sm:$0xff]
        %v2139 = vld [vmem:[%s2040 + $0x22] sm:$0xff]
        %v2140 = vld [vmem:[%s2040 + $0x32] sm:$0xff]
        %v2141 = vld [vmem:[%s2040 + $0x42] sm:$0xff]
        %v2142 = vld [vmem:[%s2040 + $0x52] sm:$0xff]
        %v2143 = vld [vmem:[%s2040 + $0x62] sm:$0xff]
        %v2144 = vld [vmem:[%s2040 + $0x72] sm:$0xff]
        %v2145 = vpack.c.bf16 %v2137, %v2137
        %v2146 = vpack.c.bf16 %v2138, %v2138
        %v2147 = vpack.c.bf16 %v2139, %v2139
        %v2148 = vpack.c.bf16 %v2140, %v2140
        %v2149 = vpack.c.bf16 %v2141, %v2141
        %v2150 = vpack.c.bf16 %v2142, %v2142
        %v2151 = vpack.c.bf16 %v2143, %v2143
        %v2152 = vpack.c.bf16 %v2144, %v2144
        %v2161 = vunpack.c.l.b16 %v2145
        %v2162 = vunpack.c.l.b16 %v2146
        %v2163 = vunpack.c.l.b16 %v2147
        %v2164 = vunpack.c.l.b16 %v2148
        %v2165 = vunpack.c.l.b16 %v2149
        %v2166 = vunpack.c.l.b16 %v2150
        %v2167 = vunpack.c.l.b16 %v2151
        %v2168 = vunpack.c.l.b16 %v2152
        %v2169 = vpack.c.b16 %v2161, %v2161
        %v2170 = vpack.c.b16 %v2162, %v2162
        %v2171 = vpack.c.b16 %v2163, %v2163
        %v2172 = vpack.c.b16 %v2164, %v2164
        %v2173 = vpack.c.b16 %v2165, %v2165
        %v2174 = vpack.c.b16 %v2166, %v2166
        %v2175 = vpack.c.b16 %v2167, %v2167
        %v2176 = vpack.c.b16 %v2168, %v2168
        %2177 = vrot.lane.b32.xlu0 %v2169, 64
        %v2178 = vpop.permute.xlu0 %2177
        %2179 = vrot.lane.b32.xlu0 %v2170, 64
        %v2180 = vpop.permute.xlu0 %2179
        %2181 = vrot.lane.b32.xlu0 %v2171, 64
        %v2182 = vpop.permute.xlu0 %2181
        %2183 = vrot.lane.b32.xlu0 %v2172, 64
        %v2184 = vpop.permute.xlu0 %2183
        %2185 = vrot.lane.b32.xlu0 %v2173, 64
        %v2186 = vpop.permute.xlu0 %2185
        %2187 = vrot.lane.b32.xlu0 %v2174, 64
        %v2188 = vpop.permute.xlu0 %2187
        %2189 = vrot.lane.b32.xlu0 %v2175, 64
        %v2190 = vpop.permute.xlu0 %2189
        %2191 = vrot.lane.b32.xlu0 %v2176, 64
        %v2192 = vpop.permute.xlu0 %2191
        %2201 = vst.msk [vmem:[#allocation4] sm:$0xf] %vm540, %v2178
        %2202 = vst.msk [vmem:[#allocation4 + $0x4] sm:$0xf] %vm540, %v2180
        %2203 = vst.msk [vmem:[#allocation4 + $0x8] sm:$0xf] %vm540, %v2182
        %2204 = vst.msk [vmem:[#allocation4 + $0xc] sm:$0xf] %vm540, %v2184
        %2205 = vst.msk [vmem:[#allocation4 + $0x10] sm:$0xf] %vm540, %v2186
        %2206 = vst.msk [vmem:[#allocation4 + $0x14] sm:$0xf] %vm540, %v2188
        %2207 = vst.msk [vmem:[#allocation4 + $0x18] sm:$0xf] %vm540, %v2190
        %2208 = vst.msk [vmem:[#allocation4 + $0x1c] sm:$0xf] %vm540, %v2192
        %v2209 = vld [vmem:[#allocation4] sm:$0xf]
        %v2210 = vld [vmem:[#allocation4 + $0x4] sm:$0xf]
        %v2211 = vld [vmem:[#allocation4 + $0x8] sm:$0xf]
        %v2212 = vld [vmem:[#allocation4 + $0xc] sm:$0xf]
        %v2213 = vld [vmem:[#allocation4 + $0x10] sm:$0xf]
        %v2214 = vld [vmem:[#allocation4 + $0x14] sm:$0xf]
        %v2215 = vld [vmem:[#allocation4 + $0x18] sm:$0xf]
        %v2216 = vld [vmem:[#allocation4 + $0x1c] sm:$0xf]
        %s2217 = scalar_lea.vmem %s299, 96
        %v2218 = vld [vmem:[%s2217] sm:$0xf]
        %v2219 = vld [vmem:[%s2217 + $0x4] sm:$0xf]
        %v2220 = vld [vmem:[%s2217 + $0x8] sm:$0xf]
        %v2221 = vld [vmem:[%s2217 + $0xc] sm:$0xf]
        %v2222 = vld [vmem:[%s2217 + $0x10] sm:$0xf]
        %v2223 = vld [vmem:[%s2217 + $0x14] sm:$0xf]
        %v2224 = vld [vmem:[%s2217 + $0x18] sm:$0xf]
        %v2225 = vld [vmem:[%s2217 + $0x1c] sm:$0xf]
        %v2226 = vld [vmem:[%s2217 + $0x20] sm:$0xf]
        %v2227 = vld [vmem:[%s2217 + $0x24] sm:$0xf]
        %v2228 = vld [vmem:[%s2217 + $0x28] sm:$0xf]
        %v2229 = vld [vmem:[%s2217 + $0x2c] sm:$0xf]
        %v2238 = vunpack.c.l.b16 %v2209
        %v2239 = vunpack.c.l.b16 %v2210
        %v2240 = vunpack.c.l.b16 %v2211
        %v2241 = vunpack.c.l.b16 %v2212
        %v2242 = vunpack.c.l.b16 %v2213
        %v2243 = vunpack.c.l.b16 %v2214
        %v2244 = vunpack.c.l.b16 %v2215
        %v2245 = vunpack.c.l.b16 %v2216
        %v2246 = vpack.c.b16 %v2239, %v2238
        %v2247 = vpack.c.b16 %v2241, %v2240
        %v2248 = vpack.c.b16 %v2243, %v2242
        %v2249 = vpack.c.b16 %v2245, %v2244
        %v2262 = vunpack.c.l.b16 %v2218
        %v2263 = vunpack.c.l.b16 %v2219
        %v2264 = vunpack.c.l.b16 %v2220
        %v2265 = vunpack.c.l.b16 %v2221
        %v2266 = vunpack.c.l.b16 %v2222
        %v2267 = vunpack.c.l.b16 %v2223
        %v2268 = vunpack.c.l.b16 %v2224
        %v2269 = vunpack.c.l.b16 %v2225
        %v2270 = vunpack.c.l.b16 %v2226
        %v2271 = vunpack.c.l.b16 %v2227
        %v2272 = vunpack.c.l.b16 %v2228
        %v2273 = vunpack.c.l.b16 %v2229
        %v2274 = vpack.c.b16 %v2263, %v2262
        %v2275 = vpack.c.b16 %v2265, %v2264
        %v2276 = vpack.c.b16 %v2267, %v2266
        %v2277 = vpack.c.b16 %v2269, %v2268
        %v2278 = vpack.c.b16 %v2271, %v2270
        %v2279 = vpack.c.b16 %v2273, %v2272
        %v2287 = vsel %vm815, %v2246, 0
        %v2290 = vsel %vm815, %v2247, 0
        %v2293 = vsel %vm815, %v2248, 0
        %v2296 = vsel %vm815, %v2249, 0
        %2298 = vmatprep.subr.bf16.mxu0 0
        %2299 = vmatpush1.bf16.msra.mxu0 %v2274
        %2300 = vmatprep.subr.bf16.mxu0 0
        %2301 = vmatpush1.bf16.msra.mxu0 %v2275
        %2302 = vmatprep.subr.bf16.mxu0 0
        %2303 = vmatpush1.bf16.msra.mxu0 %v2276
        %2304 = vmatprep.subr.bf16.mxu0 0
        %2305 = vmatpush1.bf16.msra.mxu0 %v2277
        %2306 = vmatprep.subr.bf16.mxu0 0
        %2307 = vmatpush1.bf16.msra.mxu0 %v2278
        %2308 = vmatprep.subr.bf16.mxu0 0
        %2309 = vmatpush1.bf16.msra.mxu0 %v2279
        %2310 = vmatprep.subr.bf16.mxu0 0
        %2311 = vmatpush1.bf16.msra.mxu0 0
        %2312 = vmatprep.subr.bf16.mxu0 0
        %2313 = vmatpush1.bf16.msra.mxu0 0
        %2314 = vmatprep.subr.bf16.mxu0 0
        %2315 = vmatpush1.bf16.msra.mxu0 0
        %2316 = vmatprep.subr.bf16.mxu0 0
        %2317 = vmatpush1.bf16.msra.mxu0 0
        %2318 = vmatprep.subr.bf16.mxu0 0
        %2319 = vmatpush1.bf16.msra.mxu0 0
        %2320 = vmatprep.subr.bf16.mxu0 0
        %2321 = vmatpush1.bf16.msra.mxu0 0
        %2322 = vmatprep.subr.bf16.mxu0 0
        %2323 = vmatpush1.bf16.msra.mxu0 0
        %2324 = vmatprep.subr.bf16.mxu0 0
        %2325 = vmatpush1.bf16.msra.mxu0 0
        %2326 = vmatprep.subr.bf16.mxu0 0
        %2327 = vmatpush1.bf16.msra.mxu0 0
        %2328 = vmatprep.subr.bf16.mxu0 0
        %2329 = vmatpush1.bf16.msra.mxu0 0
        %2330 = vmatprep.mubr.bf16.mxu0 0
        %2331 = vmatmul.mubr.bf16.gmra.mrb[0].mxu0 %v2287
        %v2332 = vpop.f32.mrb[0].mxu0
        %v2333 = vadd.f32 0.0, %v2332
        %v2334 = vpop.f32.mrb[0].mxu0
        %v2335 = vpop.f32.mrb[0].mxu0
        %v2336 = vadd.f32 0.0, %v2335
        %v2337 = vpop.f32.mrb[0].mxu0
        %2338 = vmatprep.mubr.bf16.mxu0 0
        %2339 = vmatmul.mubr.bf16.gmra.mrb[0].mxu0 %v2290
        %v2340 = vpop.f32.mrb[0].mxu0
        %v2341 = vadd.f32 0.0, %v2340
        %v2342 = vpop.f32.mrb[0].mxu0
        %v2343 = vpop.f32.mrb[0].mxu0
        %v2344 = vadd.f32 0.0, %v2343
        %v2345 = vpop.f32.mrb[0].mxu0
        %2346 = vmatprep.mubr.bf16.mxu0 0
        %2347 = vmatmul.mubr.bf16.gmra.mrb[0].mxu0 %v2293
        %v2348 = vpop.f32.mrb[0].mxu0
        %v2349 = vadd.f32 0.0, %v2348
        %v2350 = vpop.f32.mrb[0].mxu0
        %v2351 = vpop.f32.mrb[0].mxu0
        %v2352 = vadd.f32 0.0, %v2351
        %v2353 = vpop.f32.mrb[0].mxu0
        %2354 = vmatprep.mubr.bf16.mxu0 0
        %2355 = vmatmul.mubr.bf16.gmra.mrb[0].mxu0 %v2296
        %v2356 = vpop.f32.mrb[0].mxu0
        %v2357 = vadd.f32 0.0, %v2356
        %v2358 = vpop.f32.mrb[0].mxu0
        %v2359 = vpop.f32.mrb[0].mxu0
        %v2360 = vadd.f32 0.0, %v2359
        %v2361 = vpop.f32.mrb[0].mxu0
        %2362 = vdwg.mxu0
        %v2363 = vadd.f32 %v2010, %v2333
        %v2364 = vadd.f32 %v2013, %v2336
        %v2365 = vadd.f32 %v2018, %v2341
        %v2366 = vadd.f32 %v2021, %v2344
        %v2367 = vadd.f32 %v2026, %v2349
        %v2368 = vadd.f32 %v2029, %v2352
        %v2369 = vadd.f32 %v2034, %v2357
        %v2370 = vadd.f32 %v2037, %v2360
        %v2371 = vadd.f32 %v1389, %v2363
        %v2372 = vadd.f32 %v1390, %v2364
        %v2373 = vadd.f32 %v1391, %v2365
        %v2374 = vadd.f32 %v1392, %v2366
        %v2375 = vadd.f32 %v1393, %v2367
        %v2376 = vadd.f32 %v1394, %v2368
        %v2377 = vadd.f32 %v1395, %v2369
        %v2378 = vadd.f32 %v1396, %v2370
        %v2379 = vld [vmem:[%s302] sm:$0x1]
        %v2381 = vlaneseq
        %v2382 = vshrl.u32 %v2381, 7
        %v2383 = vsub.s32 0, %v2382
        %v2384 = vrot.slane %v2379, %v2383
        %v2386 = vadd.f32 %v2371, %v2384
        %v2387 = vadd.f32 %v2372, %v2384
        %v2388 = vadd.f32 %v2373, %v2384
        %v2389 = vadd.f32 %v2374, %v2384
        %v2390 = vadd.f32 %v2375, %v2384
        %v2391 = vadd.f32 %v2376, %v2384
        %v2392 = vadd.f32 %v2377, %v2384
        %v2393 = vadd.f32 %v2378, %v2384
        %2394 = vst.msk [vmem:[%s569 + $0x1] sm:$0xff] %vm304, %v2386
        %2395 = vst.msk [vmem:[%s569 + $0x11] sm:$0xff] %vm304, %v2387
        %2396 = vst.msk [vmem:[%s569 + $0x21] sm:$0xff] %vm304, %v2388
        %2397 = vst.msk [vmem:[%s569 + $0x31] sm:$0xff] %vm304, %v2389
        %2398 = vst.msk [vmem:[%s569 + $0x41] sm:$0xff] %vm304, %v2390
        %2399 = vst.msk [vmem:[%s569 + $0x51] sm:$0xff] %vm304, %v2391
        %2400 = vst.msk [vmem:[%s569 + $0x61] sm:$0xff] %vm304, %v2392
        %2401 = vst.msk [vmem:[%s569 + $0x71] sm:$0xff] %vm304, %v2393
        %p2402 = scmp.eq.s32.totalorder %s24, 1
        // Predicated region
        $region45: #{conv_res_block_forward.3} parent=39 // pred_check
          %p2403 = pneg %p2402
        $region46: #{conv_res_block_forward.3} parent=39 // pred_check_branch
          %2405 = sbr.rel (%p2403) target = $region48
        $region47: #{conv_res_block_forward.3} parent=39 // pred_region
          %v2406 = vld [vmem:[%s569 + $0x1] sm:$0xff]
          %v2407 = vld [vmem:[%s569 + $0x11] sm:$0xff]
          %v2408 = vld [vmem:[%s569 + $0x21] sm:$0xff]
          %v2409 = vld [vmem:[%s569 + $0x31] sm:$0xff]
          %v2410 = vld [vmem:[%s569 + $0x41] sm:$0xff]
          %v2411 = vld [vmem:[%s569 + $0x51] sm:$0xff]
          %v2412 = vld [vmem:[%s569 + $0x61] sm:$0xff]
          %v2413 = vld [vmem:[%s569 + $0x71] sm:$0xff]
          %2414 = vst.msk [vmem:[%s281] sm:$0xff] %vm304, %v2406
          %2415 = vst.msk [vmem:[%s281 + $0x8] sm:$0xff] %vm304, %v2407
          %2416 = vst.msk [vmem:[%s281 + $0x10] sm:$0xff] %vm304, %v2408
          %2417 = vst.msk [vmem:[%s281 + $0x18] sm:$0xff] %vm304, %v2409
          %2418 = vst.msk [vmem:[%s281 + $0x20] sm:$0xff] %vm304, %v2410
          %2419 = vst.msk [vmem:[%s281 + $0x28] sm:$0xff] %vm304, %v2411
          %2420 = vst.msk [vmem:[%s281 + $0x30] sm:$0xff] %vm304, %v2412
          %2421 = vst.msk [vmem:[%s281 + $0x38] sm:$0xff] %vm304, %v2413
        $region48: #{conv_res_block_forward.3} parent=39 // pred_fallthru
          _
        %s2422 = sand.u32 %s169, 1
        %s2423 = scalar_lea.sflag [#allocation6], %s2422
        %s2424 = sand.u32 %s169, 1
        %s2425 = smul.addr %s2424, 64
        %s2426 = scalar_lea.vmem [#allocation5], %s2425
        // Predicated region
        $region49: #{conv_res_block_forward.3} parent=39 // pred_check
          %p2427 = pneg %p179
        $region50: #{conv_res_block_forward.3} parent=39 // pred_check_branch
          %2429 = sbr.rel (%p2427) target = $region52
        $region51: #{conv_res_block_forward.3} parent=39 // pred_region
          %s2431 = ssub.s32 1024, 1024
          %2432 = vsyncadd %s2423, %s2431
          %s2433 = smul.addr %s23, 8
          %s2434 = smul.addr %s2433, 128
          %s2435 = scalar_lea.hbm %s5, %s2434
          %s2436 = sshll.u32 %s2426, 4
          %s2437 = int_to_ptr.vmem [resolvable:$true] %s2436
          %2442 = dma.vmem_to_hbm [thread:$0]  %s2437, 1024, %s2435, %s2423, 128, 128, 8
        $region52: #{conv_res_block_forward.3} parent=39 // pred_fallthru
          _
      $region40: #{conv_res_block_forward.3} parent=5 // pred_fallthru
        _
      %p2443 = scmp.le.s32.totalorder 2, %s14
      // Predicated region
      $region53: #{conv_res_block_forward.3} parent=5 // pred_check
        %p2444 = pneg %p2443
      $region54: #{conv_res_block_forward.3} parent=5 // pred_check_branch
        %2446 = sbr.rel (%p2444) target = $region56
      $region55: #{conv_res_block_forward.3} parent=5 // pred_region
        %s2447 = ssub.s32 %s14, 2
        // Predicated region
        $region57: #{conv_res_block_forward.3} parent=55 // pred_check
          %p2448 = pneg %p185
        $region58: #{conv_res_block_forward.3} parent=55 // pred_check_branch
          %2450 = sbr.rel (%p2448) target = $region60
        $region59: #{conv_res_block_forward.3} parent=55 // pred_region
          %s2451 = sand.u32 %s170, 1
          %s2452 = scalar_lea.sflag [#allocation6], %s2451
          %s2453 = sand.u32 %s170, 1
          %s2454 = smul.addr %s2453, 64
          %s2455 = scalar_lea.vmem [#allocation5], %s2454
          %2456 = dma.done %s2452, 1024
        $region60: #{conv_res_block_forward.3} parent=55 // pred_fallthru
          _
      $region56: #{conv_res_block_forward.3} parent=5 // pred_fallthru
        _
    $region6: #{conv_res_block_forward.3} parent=1 // loop_footer
      %s18 = sadd.s32 1, %s14
    $region7: #{conv_res_block_forward.3} parent=1 // loop_footer_branch
      %13 = sbr.rel target = $region3
    $region8: #{conv_res_block_forward.3} parent=1 // loop_exit
      _
    %2457 = vsyncpa [#allocation6], 1
    %s2458 = scalar_lea.sflag [#allocation6], 1
    %2459 = vsyncpa %s2458, 1

</llo_original>
